<compile_context>
chip_gen: v5e
topology: v5e:2x2
jax: 0.10.0
libtpu: 0.0.40
codegen_flags: <defaults>
</compile_context>

<pallas_src>
import numpy as np
import jax
import jax.numpy as jnp
from jax.experimental import pallas as pl
from jax.experimental.pallas import tpu as pltpu

# ----------------------------- model configuration ---------------------------
BATCH       = 2
CHANNELS    = 1
SEQ_LEN     = 64
PATCH       = 8
NUM_PATCHES = SEQ_LEN // PATCH            # 8
PATCH_DIM   = CHANNELS * PATCH            # 8
DIM         = 32
DEPTH       = 2
HEADS       = 2
DIM_HEAD    = 16
INNER       = HEADS * DIM_HEAD            # 32
MLP_DIM     = 64
NUM_CLASSES = 16
TOKENS      = NUM_PATCHES + 1             # 9 = cls + patches
TP          = 16                          # tokens padded to a sublane-aligned stride
RP          = BATCH * TP                  # 32 padded token rows stacked over batch
GB          = HEADS * BATCH               # 4 batched attention "groups"
SCALE       = DIM_HEAD ** -0.5
LN_EPS      = 1e-5
DEC_DIMS    = (NUM_CLASSES, 64, 128, 256, 512, SEQ_LEN)   # decoder Linear chain
OUT_ROWS    = 8
OUT_LANES   = 128                         # packed output: [recon | probs | 0] in rows 0..B-1


# ------------------------------ in-kernel helpers ----------------------------
def _mm(a, w):
    """Activation (f32) x pre-cast bf16 weight on the MXU, f32 accumulation."""
    return jnp.dot(a.astype(jnp.bfloat16), w, preferred_element_type=jnp.float32)


def _bmm(a, b):
    """Batched (g,m,k) @ (g,k,n); operands cast to bf16, f32 accumulation."""
    return jax.lax.dot_general(
        a.astype(jnp.bfloat16), b.astype(jnp.bfloat16),
        (((2,), (1,)), ((0,), (0,))), preferred_element_type=jnp.float32)


def _bmm_nt(a, b):
    """Batched (g,m,k) @ (g,n,k)^T; operands cast to bf16, f32 accumulation."""
    return jax.lax.dot_general(
        a.astype(jnp.bfloat16), b.astype(jnp.bfloat16),
        (((2,), (2,)), ((0,), (0,))), preferred_element_type=jnp.float32)


def _layernorm(x, g, b):
    """torch.nn.LayerNorm over the last axis (biased variance, eps inside sqrt)."""
    mu = jnp.mean(x, axis=-1, keepdims=True)
    var = jnp.mean(jnp.square(x - mu), axis=-1, keepdims=True)
    return (x - mu) * jax.lax.rsqrt(var + LN_EPS) * g + b


def _erf(x):
    # Abramowitz & Stegun 7.1.26 rational approximation (|err| < 1.5e-7 ~ f32-exact).
    a1, a2, a3, a4, a5 = 0.254829592, -0.284496736, 1.421413741, -1.453152027, 1.061405429
    p = 0.3275911
    ax = jnp.abs(x)
    t = 1.0 / (1.0 + p * ax)
    poly = ((((a5 * t + a4) * t + a3) * t + a2) * t + a1) * t
    y = 1.0 - poly * jnp.exp(-ax * ax)
    return jnp.where(x >= 0, y, -y)


def _gelu(x):
    # Exact (erf-based) GELU, matching torch.nn.GELU() default.
    return 0.5 * x * (1.0 + _erf(x * 0.7071067811865476))


# --------------------------------- fused kernel -------------------------------
def vit_kernel(
    # inputs
    patches_ref,
    pe_ln1g_ref, pe_ln1b_ref, pe_w_ref, pe_b_ref, pe_ln2g_ref, pe_ln2b_ref,
    cls_ref, pos_ref,
    ln1g_ref, ln1b_ref, wqkv_ref, wo_ref, bo_ref,
    ln2g_ref, ln2b_ref, wf1_ref, bf1_ref, wf2_ref, bf2_ref,
    hlng_ref, hlnb_ref, wh_ref, bh_ref, sig_ref,
    # output (single lane-dense packed block)
    out_ref,
):
    f32 = jnp.float32

    # ---- patch embedding: LN -> Linear -> LN over all B*TP (padded) rows ----
    xp = _layernorm(patches_ref[...], pe_ln1g_ref[...], pe_ln1b_ref[...])
    emb = _mm(xp, pe_w_ref[...]) + pe_b_ref[...]
    emb = _layernorm(emb, pe_ln2g_ref[...], pe_ln2b_ref[...])              # (RP, D)

    # ---- assemble padded token matrix via vectorized selects (no sublane shuffles) ----
    emb3 = emb.reshape(BATCH, TP, DIM)
    tidx = jax.lax.broadcasted_iota(jnp.int32, (BATCH, TP, 1), 1)
    cls3 = jnp.broadcast_to(cls_ref[...].reshape(1, 1, DIM), (BATCH, TP, DIM))
    x3 = jnp.where(tidx == 0, cls3, jnp.where(tidx < TOKENS, emb3, 0.0))
    x3 = x3 + pos_ref[...]                                                 # padded pos rows are 0
    x = x3.reshape(RP, DIM)                                                # (B*TP, D)

    # padded key columns get -1e30 before softmax (padded rows are never read back)
    kmask = jnp.where(
        jax.lax.broadcasted_iota(jnp.int32, (1, 1, TP), 2) < TOKENS, 0.0, -1e30
    ).astype(f32)

    # ---- transformer: DEPTH x (pre-norm MHSA + pre-norm GELU MLP), statically unrolled ----
    for l in range(DEPTH):
        # QKV for all (q|k|v, head) slabs in one batched matmul (no lane slices)
        h = _layernorm(x, ln1g_ref[l], ln1b_ref[l]).astype(jnp.bfloat16)   # (RP, D) bf16
        hb = jnp.broadcast_to(h[None], (3 * HEADS, RP, DIM))               # (6, RP, D)
        qkv = jax.lax.dot_general(
            hb, wqkv_ref[l], (((2,), (1,)), ((0,), (0,))),
            preferred_element_type=f32)                                    # (6, RP, DH)
        # regroup to (head*batch, TP, DH): leading/sublane-only reshapes (free relayouts)
        q = qkv[0 * HEADS:1 * HEADS].reshape(GB, TP, DIM_HEAD)
        k = qkv[1 * HEADS:2 * HEADS].reshape(GB, TP, DIM_HEAD)
        v = qkv[2 * HEADS:3 * HEADS].reshape(GB, TP, DIM_HEAD)

        dots = _bmm_nt(q, k) * SCALE + kmask                               # (GB, TP, TP)
        m = jnp.max(dots, axis=-1, keepdims=True)
        e = jnp.exp(dots - m)
        attn = e * pl.reciprocal(jnp.sum(e, axis=-1, keepdims=True), approx=True)
        o = _bmm(attn, v)                                                  # (GB, TP, DH)

        # output projection: per-head batched matmul, summed over heads (no head concat)
        o2 = o.reshape(HEADS, RP, DIM_HEAD)
        proj = _bmm(o2, wo_ref[l])                                         # (H, RP, D)
        x = x + jnp.sum(proj, axis=0) + bo_ref[l]

        # pre-norm feed-forward (all rows batched)
        h = _layernorm(x, ln2g_ref[l], ln2b_ref[l])
        h = _mm(h, wf1_ref[l]) + bf1_ref[l]
        h = _gelu(h)
        h = _mm(h, wf2_ref[l]) + bf2_ref[l]
        x = x + h

    # ---- mlp head on the cls rows + reconstruction (f32 for parity) ----
    cls_rows = x.reshape(BATCH, TP, DIM)[:, 0, :]                          # (B, D)
    cls_rows = _layernorm(cls_rows, hlng_ref[...], hlnb_ref[...])
    logits = _mm(cls_rows, wh_ref[...]) + bh_ref[...]                      # (B, C)
    probs = 1.0 / (1.0 + jnp.exp(-logits))                                 # sigmoid, f32 exact
    recon = jnp.dot(probs, sig_ref[...], preferred_element_type=f32)       # (B, L), f32 matmul

    # ---- single lane-dense packed output: rows 0..B-1 = [recon | probs | 0] ----
    row = jnp.concatenate(
        [recon, probs, jnp.zeros((BATCH, OUT_LANES - SEQ_LEN - NUM_CLASSES), f32)], axis=1)
    out_ref[...] = jnp.concatenate(
        [row, jnp.zeros((OUT_ROWS - BATCH, OUT_LANES), f32)], axis=0)


# ------------------------------ pallas_call glue ------------------------------
_VMEM = pl.BlockSpec(memory_space=pltpu.MemorySpace.VMEM)


def vit_fused(patches_pad, pos_pad, sig, p):
    ins = [patches_pad,
           p['pe_ln1_g'], p['pe_ln1_b'], p['pe_w'], p['pe_b'], p['pe_ln2_g'], p['pe_ln2_b'],
           p['cls_token'], pos_pad,
           p['ln1_g'], p['ln1_b'], p['wqkv'], p['wo'], p['bo'],
           p['ln2_g'], p['ln2_b'], p['wf1'], p['bf1'], p['wf2'], p['bf2'],
           p['head_ln_g'], p['head_ln_b'], p['wh'], p['bh'], sig]
    return pl.pallas_call(
        vit_kernel,
        in_specs=[_VMEM] * len(ins),
        out_specs=_VMEM,
        out_shape=jax.ShapeDtypeStruct((OUT_ROWS, OUT_LANES), jnp.float32),
    )(*ins)


@jax.jit
def vit_forward(series, p):
    # series: (B, C, L) -- NCL like PyTorch.
    # einops 'b c (n p) -> b n (p c)' (free reshape for C=1), then pad token slots
    # to the sublane-aligned stride TP=16 (row 0 reserved for cls, rows 9..15 zero).
    patches = series.reshape(BATCH, CHANNELS, NUM_PATCHES, PATCH)
    patches = patches.transpose(0, 2, 3, 1).reshape(BATCH, NUM_PATCHES, PATCH_DIM)
    patches_pad = jnp.pad(patches, ((0, 0), (1, TP - TOKENS), (0, 0))).reshape(RP, PATCH_DIM)

    # sigmatrix: input-independent decoder chain, computed once per forward in plain
    # f32 XLA (hoisted out of the kernel per perf review -> ~20x less kernel input DMA).
    sig = p['dec_w0']
    for i in range(1, 5):
        sig = jnp.dot(sig, p[f'dec_w{i}'], precision=jax.lax.Precision.HIGHEST)
    sig = jnp.maximum(sig, 0.0)                                            # (C, L) f32

    pos_pad = jnp.concatenate(
        [p['pos'], jnp.zeros((TP - TOKENS, DIM), jnp.float32)], axis=0)    # (TP, D)

    packed = vit_fused(patches_pad, pos_pad, sig, p)
    x_recon = packed[:BATCH, :SEQ_LEN]
    class_probs = packed[:BATCH, SEQ_LEN:SEQ_LEN + NUM_CLASSES]
    return x_recon, class_probs, sig


# ------------------------------ parameter setup -------------------------------
def init_params(key):
    keys = iter(jax.random.split(key, 24))

    def normal(shape, scale, dtype=jnp.float32):
        return (scale * jax.random.normal(next(keys), shape)).astype(dtype)

    bf16 = jnp.bfloat16
    p = {}
    # patch embedding: LayerNorm(patch_dim) -> Linear(patch_dim, dim) -> LayerNorm(dim)
    p['pe_ln1_g'] = jnp.ones((1, PATCH_DIM), jnp.float32)
    p['pe_ln1_b'] = jnp.zeros((1, PATCH_DIM), jnp.float32)
    p['pe_w'] = normal((PATCH_DIM, DIM), 0.05, bf16)
    p['pe_b'] = jnp.zeros((1, DIM), jnp.float32)
    p['pe_ln2_g'] = jnp.ones((1, DIM), jnp.float32)
    p['pe_ln2_b'] = jnp.zeros((1, DIM), jnp.float32)
    # cls token / positional embedding
    p['cls_token'] = normal((1, DIM), 0.02)
    p['pos'] = normal((TOKENS, DIM), 0.02)
    # transformer layers (stacked along leading `depth` axis)
    p['ln1_g'] = jnp.ones((DEPTH, 1, DIM), jnp.float32)
    p['ln1_b'] = jnp.zeros((DEPTH, 1, DIM), jnp.float32)
    # per-(q|k|v, head) weight slabs; axis 1 order = [q_h0, q_h1, k_h0, k_h1, v_h0, v_h1]
    # (a reshuffle of torch's single to_qkv Linear weight).
    p['wqkv'] = normal((DEPTH, 3 * HEADS, DIM, DIM_HEAD), 0.05, bf16)
    # per-head rows of torch's to_out Linear weight (transposed): (depth, heads, dim_head, dim)
    p['wo'] = normal((DEPTH, HEADS, DIM_HEAD, DIM), 0.05, bf16)
    p['bo'] = jnp.zeros((DEPTH, 1, DIM), jnp.float32)
    p['ln2_g'] = jnp.ones((DEPTH, 1, DIM), jnp.float32)
    p['ln2_b'] = jnp.zeros((DEPTH, 1, DIM), jnp.float32)
    p['wf1'] = normal((DEPTH, DIM, MLP_DIM), 0.05, bf16)
    p['bf1'] = jnp.zeros((DEPTH, 1, MLP_DIM), jnp.float32)
    p['wf2'] = normal((DEPTH, MLP_DIM, DIM), 0.05, bf16)
    p['bf2'] = jnp.zeros((DEPTH, 1, DIM), jnp.float32)
    # mlp head: LayerNorm(dim) -> Linear(dim, num_classes)
    p['head_ln_g'] = jnp.ones((1, DIM), jnp.float32)
    p['head_ln_b'] = jnp.zeros((1, DIM), jnp.float32)
    p['wh'] = normal((DIM, NUM_CLASSES), 0.05, bf16)
    p['bh'] = jnp.zeros((1, NUM_CLASSES), jnp.float32)
    # decoder chain (bias=False Linears), stored as (in, out), kept f32 for parity
    for i in range(5):
        p[f'dec_w{i}'] = normal((DEC_DIMS[i], DEC_DIMS[i + 1]), 0.1)
    return p


# ----------------------------------- main --------------------------------------
if __name__ == "__main__":
    root = jax.random.PRNGKey(0)
    k_in, k_par = jax.random.split(root)
    series = jax.random.normal(k_in, (BATCH, CHANNELS, SEQ_LEN), dtype=jnp.float32)
    params = init_params(k_par)

    x_recon, class_probs, sigm = vit_forward(series, params)
    jax.block_until_ready((x_recon, class_probs, sigm))

    assert x_recon.shape == (BATCH, SEQ_LEN)
    assert class_probs.shape == (BATCH, NUM_CLASSES)
    assert sigm.shape == (NUM_CLASSES, SEQ_LEN)
    assert bool(np.all(np.isfinite(np.asarray(x_recon))))
    assert bool(np.all(np.isfinite(np.asarray(class_probs))))
    assert bool(np.all(np.isfinite(np.asarray(sigm))))
    assert bool(np.all(np.asarray(class_probs) > 0.0)) and bool(np.all(np.asarray(class_probs) < 1.0))
    print("KERNEL_OK")
</pallas_src>

<mosaic_0001>
module attributes {stable_mosaic.version = 11 : i64} {
  func.func @vit_kernel(%arg0: memref<32x8xf32, #tpu.memory_space<vmem>>, %arg1: memref<1x8xf32, #tpu.memory_space<vmem>>, %arg2: memref<1x8xf32, #tpu.memory_space<vmem>>, %arg3: memref<8x32xbf16, #tpu.memory_space<vmem>>, %arg4: memref<1x32xf32, #tpu.memory_space<vmem>>, %arg5: memref<1x32xf32, #tpu.memory_space<vmem>>, %arg6: memref<1x32xf32, #tpu.memory_space<vmem>>, %arg7: memref<1x32xf32, #tpu.memory_space<vmem>>, %arg8: memref<16x32xf32, #tpu.memory_space<vmem>>, %arg9: memref<2x1x32xf32, #tpu.memory_space<vmem>>, %arg10: memref<2x1x32xf32, #tpu.memory_space<vmem>>, %arg11: memref<2x6x32x16xbf16, #tpu.memory_space<vmem>>, %arg12: memref<2x2x16x32xbf16, #tpu.memory_space<vmem>>, %arg13: memref<2x1x32xf32, #tpu.memory_space<vmem>>, %arg14: memref<2x1x32xf32, #tpu.memory_space<vmem>>, %arg15: memref<2x1x32xf32, #tpu.memory_space<vmem>>, %arg16: memref<2x32x64xbf16, #tpu.memory_space<vmem>>, %arg17: memref<2x1x64xf32, #tpu.memory_space<vmem>>, %arg18: memref<2x64x32xbf16, #tpu.memory_space<vmem>>, %arg19: memref<2x1x32xf32, #tpu.memory_space<vmem>>, %arg20: memref<1x32xf32, #tpu.memory_space<vmem>>, %arg21: memref<1x32xf32, #tpu.memory_space<vmem>>, %arg22: memref<32x16xbf16, #tpu.memory_space<vmem>>, %arg23: memref<1x16xf32, #tpu.memory_space<vmem>>, %arg24: memref<16x64xf32, #tpu.memory_space<vmem>>, %arg25: memref<8x128xf32, #tpu.memory_space<vmem>>) attributes {dimension_semantics = [], scalar_prefetch = 0 : i64, scratch_operands = 0 : i64, tpu.core_type = #tpu.core_type<tc>} {
    %c0 = arith.constant 0 : index
    %c0_0 = arith.constant 0 : index
    %0 = vector.load %arg0[%c0, %c0_0] : memref<32x8xf32, #tpu.memory_space<vmem>>, vector<32x8xf32>
    %c0_1 = arith.constant 0 : index
    %c0_2 = arith.constant 0 : index
    %1 = vector.load %arg1[%c0_1, %c0_2] : memref<1x8xf32, #tpu.memory_space<vmem>>, vector<1x8xf32>
    %c0_3 = arith.constant 0 : index
    %c0_4 = arith.constant 0 : index
    %2 = vector.load %arg2[%c0_3, %c0_4] : memref<1x8xf32, #tpu.memory_space<vmem>>, vector<1x8xf32>
    %cst = arith.constant dense<0.000000e+00> : vector<32xf32>
    %3 = vector.multi_reduction <add>, %0, %cst [1] : vector<32x8xf32> to vector<32xf32>
    %4 = vector.shape_cast %3 : vector<32xf32> to vector<32x1xf32>
    %cst_5 = arith.constant 8.000000e+00 : f32
    %5 = vector.broadcast %cst_5 : f32 to vector<32x1xf32>
    %6 = arith.divf %4, %5 : vector<32x1xf32>
    %7 = vector.broadcast %6 : vector<32x1xf32> to vector<32x8xf32>
    %8 = arith.subf %0, %7 : vector<32x8xf32>
    %9 = arith.mulf %8, %8 : vector<32x8xf32>
    %cst_6 = arith.constant dense<0.000000e+00> : vector<32xf32>
    %10 = vector.multi_reduction <add>, %9, %cst_6 [1] : vector<32x8xf32> to vector<32xf32>
    %11 = vector.shape_cast %10 : vector<32xf32> to vector<32x1xf32>
    %cst_7 = arith.constant 8.000000e+00 : f32
    %12 = vector.broadcast %cst_7 : f32 to vector<32x1xf32>
    %13 = arith.divf %11, %12 : vector<32x1xf32>
    %14 = vector.broadcast %6 : vector<32x1xf32> to vector<32x8xf32>
    %15 = arith.subf %0, %14 : vector<32x8xf32>
    %cst_8 = arith.constant 9.99999974E-6 : f32
    %16 = vector.broadcast %cst_8 : f32 to vector<32x1xf32>
    %17 = arith.addf %13, %16 : vector<32x1xf32>
    %18 = math.rsqrt %17 : vector<32x1xf32>
    %19 = vector.broadcast %18 : vector<32x1xf32> to vector<32x8xf32>
    %20 = arith.mulf %15, %19 : vector<32x8xf32>
    %21 = vector.broadcast %1 : vector<1x8xf32> to vector<32x8xf32>
    %22 = arith.mulf %20, %21 : vector<32x8xf32>
    %23 = vector.broadcast %2 : vector<1x8xf32> to vector<32x8xf32>
    %24 = arith.addf %22, %23 : vector<32x8xf32>
    %c0_9 = arith.constant 0 : index
    %c0_10 = arith.constant 0 : index
    %25 = vector.load %arg3[%c0_9, %c0_10] : memref<8x32xbf16, #tpu.memory_space<vmem>>, vector<8x32xbf16>
    %26 = arith.truncf %24 : vector<32x8xf32> to vector<32x8xbf16>
    %cst_11 = arith.constant dense<0.000000e+00> : vector<32x32xf32>
    %27 = tpu.matmul %26, %25, %cst_11 {dimension_numbers = #tpu.dot_dimension_numbers<[1], [0], [0], [1], [0, 0, 1, 1], [], []>} : vector<32x8xbf16>, vector<8x32xbf16>, vector<32x32xf32> -> vector<32x32xf32>
    %c0_12 = arith.constant 0 : index
    %c0_13 = arith.constant 0 : index
    %28 = vector.load %arg4[%c0_12, %c0_13] : memref<1x32xf32, #tpu.memory_space<vmem>>, vector<1x32xf32>
    %29 = vector.broadcast %28 : vector<1x32xf32> to vector<32x32xf32>
    %30 = arith.addf %27, %29 : vector<32x32xf32>
    %c0_14 = arith.constant 0 : index
    %c0_15 = arith.constant 0 : index
    %31 = vector.load %arg5[%c0_14, %c0_15] : memref<1x32xf32, #tpu.memory_space<vmem>>, vector<1x32xf32>
    %c0_16 = arith.constant 0 : index
    %c0_17 = arith.constant 0 : index
    %32 = vector.load %arg6[%c0_16, %c0_17] : memref<1x32xf32, #tpu.memory_space<vmem>>, vector<1x32xf32>
    %cst_18 = arith.constant dense<0.000000e+00> : vector<32xf32>
    %33 = vector.multi_reduction <add>, %30, %cst_18 [1] : vector<32x32xf32> to vector<32xf32>
    %34 = vector.shape_cast %33 : vector<32xf32> to vector<32x1xf32>
    %cst_19 = arith.constant 3.200000e+01 : f32
    %35 = vector.broadcast %cst_19 : f32 to vector<32x1xf32>
    %36 = arith.divf %34, %35 : vector<32x1xf32>
    %37 = vector.broadcast %36 : vector<32x1xf32> to vector<32x32xf32>
    %38 = arith.subf %30, %37 : vector<32x32xf32>
    %39 = arith.mulf %38, %38 : vector<32x32xf32>
    %cst_20 = arith.constant dense<0.000000e+00> : vector<32xf32>
    %40 = vector.multi_reduction <add>, %39, %cst_20 [1] : vector<32x32xf32> to vector<32xf32>
    %41 = vector.shape_cast %40 : vector<32xf32> to vector<32x1xf32>
    %cst_21 = arith.constant 3.200000e+01 : f32
    %42 = vector.broadcast %cst_21 : f32 to vector<32x1xf32>
    %43 = arith.divf %41, %42 : vector<32x1xf32>
    %44 = vector.broadcast %36 : vector<32x1xf32> to vector<32x32xf32>
    %45 = arith.subf %30, %44 : vector<32x32xf32>
    %cst_22 = arith.constant 9.99999974E-6 : f32
    %46 = vector.broadcast %cst_22 : f32 to vector<32x1xf32>
    %47 = arith.addf %43, %46 : vector<32x1xf32>
    %48 = math.rsqrt %47 : vector<32x1xf32>
    %49 = vector.broadcast %48 : vector<32x1xf32> to vector<32x32xf32>
    %50 = arith.mulf %45, %49 : vector<32x32xf32>
    %51 = vector.broadcast %31 : vector<1x32xf32> to vector<32x32xf32>
    %52 = arith.mulf %50, %51 : vector<32x32xf32>
    %53 = vector.broadcast %32 : vector<1x32xf32> to vector<32x32xf32>
    %54 = arith.addf %52, %53 : vector<32x32xf32>
    %55 = vector.shape_cast %54 : vector<32x32xf32> to vector<2x16x32xf32>
    %56 = tpu.iota {dimensions = array<i32: 1>} : vector<2x16x1xi32>
    %c0_23 = arith.constant 0 : index
    %c0_24 = arith.constant 0 : index
    %57 = vector.load %arg7[%c0_23, %c0_24] : memref<1x32xf32, #tpu.memory_space<vmem>>, vector<1x32xf32>
    %58 = vector.shape_cast %57 : vector<1x32xf32> to vector<1x1x32xf32>
    %59 = vector.shape_cast %58 : vector<1x1x32xf32> to vector<1x1x32xf32>
    %60 = vector.broadcast %59 : vector<1x1x32xf32> to vector<2x16x32xf32>
    %c0_i32 = arith.constant 0 : i32
    %61 = vector.broadcast %c0_i32 : i32 to vector<2x16x1xi32>
    %62 = arith.cmpi eq, %56, %61 : vector<2x16x1xi32>
    %c9_i32 = arith.constant 9 : i32
    %63 = vector.broadcast %c9_i32 : i32 to vector<2x16x1xi32>
    %64 = arith.cmpi slt, %56, %63 : vector<2x16x1xi32>
    %cst_25 = arith.constant 0.000000e+00 : f32
    %65 = vector.shape_cast %64 : vector<2x16x1xi1> to vector<2x16x1xi1>
    %66 = vector.broadcast %65 : vector<2x16x1xi1> to vector<2x16x32xi1>
    %67 = vector.broadcast %cst_25 : f32 to vector<2x16x32xf32>
    %68 = arith.select %66, %55, %67 : vector<2x16x32xi1>, vector<2x16x32xf32>
    %69 = vector.shape_cast %62 : vector<2x16x1xi1> to vector<2x16x1xi1>
    %70 = vector.broadcast %69 : vector<2x16x1xi1> to vector<2x16x32xi1>
    %71 = arith.select %70, %60, %68 : vector<2x16x32xi1>, vector<2x16x32xf32>
    %c0_26 = arith.constant 0 : index
    %c0_27 = arith.constant 0 : index
    %72 = vector.load %arg8[%c0_26, %c0_27] : memref<16x32xf32, #tpu.memory_space<vmem>>, vector<16x32xf32>
    %73 = vector.shape_cast %72 : vector<16x32xf32> to vector<1x16x32xf32>
    %74 = vector.broadcast %73 : vector<1x16x32xf32> to vector<2x16x32xf32>
    %75 = arith.addf %71, %74 : vector<2x16x32xf32>
    %76 = vector.shape_cast %75 : vector<2x16x32xf32> to vector<32x32xf32>
    %77 = tpu.iota {dimensions = array<i32: 2>} : vector<1x1x16xi32>
    %c9_i32_28 = arith.constant 9 : i32
    %78 = vector.broadcast %c9_i32_28 : i32 to vector<1x1x16xi32>
    %79 = arith.cmpi slt, %77, %78 : vector<1x1x16xi32>
    %cst_29 = arith.constant 0.000000e+00 : f32
    %cst_30 = arith.constant -1.000000e+30 : f32
    %80 = vector.broadcast %cst_29 : f32 to vector<1x1x16xf32>
    %81 = vector.broadcast %cst_30 : f32 to vector<1x1x16xf32>
    %82 = arith.select %79, %80, %81 : vector<1x1x16xi1>, vector<1x1x16xf32>
    %c0_31 = arith.constant 0 : index
    %c0_32 = arith.constant 0 : index
    %c0_33 = arith.constant 0 : index
    %83 = vector.load %arg9[%c0_31, %c0_32, %c0_33] : memref<2x1x32xf32, #tpu.memory_space<vmem>>, vector<1x1x32xf32>
    %84 = vector.shape_cast %83 : vector<1x1x32xf32> to vector<1x32xf32>
    %c0_34 = arith.constant 0 : index
    %c0_35 = arith.constant 0 : index
    %c0_36 = arith.constant 0 : index
    %85 = vector.load %arg10[%c0_34, %c0_35, %c0_36] : memref<2x1x32xf32, #tpu.memory_space<vmem>>, vector<1x1x32xf32>
    %86 = vector.shape_cast %85 : vector<1x1x32xf32> to vector<1x32xf32>
    %cst_37 = arith.constant dense<0.000000e+00> : vector<32xf32>
    %87 = vector.multi_reduction <add>, %76, %cst_37 [1] : vector<32x32xf32> to vector<32xf32>
    %88 = vector.shape_cast %87 : vector<32xf32> to vector<32x1xf32>
    %cst_38 = arith.constant 3.200000e+01 : f32
    %89 = vector.broadcast %cst_38 : f32 to vector<32x1xf32>
    %90 = arith.divf %88, %89 : vector<32x1xf32>
    %91 = vector.broadcast %90 : vector<32x1xf32> to vector<32x32xf32>
    %92 = arith.subf %76, %91 : vector<32x32xf32>
    %93 = arith.mulf %92, %92 : vector<32x32xf32>
    %cst_39 = arith.constant dense<0.000000e+00> : vector<32xf32>
    %94 = vector.multi_reduction <add>, %93, %cst_39 [1] : vector<32x32xf32> to vector<32xf32>
    %95 = vector.shape_cast %94 : vector<32xf32> to vector<32x1xf32>
    %cst_40 = arith.constant 3.200000e+01 : f32
    %96 = vector.broadcast %cst_40 : f32 to vector<32x1xf32>
    %97 = arith.divf %95, %96 : vector<32x1xf32>
    %98 = vector.broadcast %90 : vector<32x1xf32> to vector<32x32xf32>
    %99 = arith.subf %76, %98 : vector<32x32xf32>
    %cst_41 = arith.constant 9.99999974E-6 : f32
    %100 = vector.broadcast %cst_41 : f32 to vector<32x1xf32>
    %101 = arith.addf %97, %100 : vector<32x1xf32>
    %102 = math.rsqrt %101 : vector<32x1xf32>
    %103 = vector.broadcast %102 : vector<32x1xf32> to vector<32x32xf32>
    %104 = arith.mulf %99, %103 : vector<32x32xf32>
    %105 = vector.broadcast %84 : vector<1x32xf32> to vector<32x32xf32>
    %106 = arith.mulf %104, %105 : vector<32x32xf32>
    %107 = vector.broadcast %86 : vector<1x32xf32> to vector<32x32xf32>
    %108 = arith.addf %106, %107 : vector<32x32xf32>
    %109 = arith.truncf %108 : vector<32x32xf32> to vector<32x32xbf16>
    %110 = vector.shape_cast %109 : vector<32x32xbf16> to vector<1x32x32xbf16>
    %111 = vector.shape_cast %110 : vector<1x32x32xbf16> to vector<1x32x32xbf16>
    %112 = vector.broadcast %111 : vector<1x32x32xbf16> to vector<6x32x32xbf16>
    %c0_42 = arith.constant 0 : index
    %c0_43 = arith.constant 0 : index
    %c0_44 = arith.constant 0 : index
    %c0_45 = arith.constant 0 : index
    %113 = vector.load %arg11[%c0_42, %c0_43, %c0_44, %c0_45] : memref<2x6x32x16xbf16, #tpu.memory_space<vmem>>, vector<1x6x32x16xbf16>
    %114 = vector.shape_cast %113 : vector<1x6x32x16xbf16> to vector<6x32x16xbf16>
    %cst_46 = arith.constant dense<0.000000e+00> : vector<6x32x16xf32>
    %115 = tpu.matmul %112, %114, %cst_46 {dimension_numbers = #tpu.dot_dimension_numbers<[2], [1], [1], [2], [0, 0, 0, 1, 1, 2], [0], [0]>} : vector<6x32x32xbf16>, vector<6x32x16xbf16>, vector<6x32x16xf32> -> vector<6x32x16xf32>
    %116 = vector.extract_strided_slice %115 {offsets = [0, 0, 0], sizes = [2, 32, 16], strides = [1, 1, 1]} : vector<6x32x16xf32> to vector<2x32x16xf32>
    %117 = vector.shape_cast %116 : vector<2x32x16xf32> to vector<4x16x16xf32>
    %118 = vector.extract_strided_slice %115 {offsets = [2, 0, 0], sizes = [2, 32, 16], strides = [1, 1, 1]} : vector<6x32x16xf32> to vector<2x32x16xf32>
    %119 = vector.shape_cast %118 : vector<2x32x16xf32> to vector<4x16x16xf32>
    %120 = vector.extract_strided_slice %115 {offsets = [4, 0, 0], sizes = [2, 32, 16], strides = [1, 1, 1]} : vector<6x32x16xf32> to vector<2x32x16xf32>
    %121 = vector.shape_cast %120 : vector<2x32x16xf32> to vector<4x16x16xf32>
    %122 = arith.truncf %117 : vector<4x16x16xf32> to vector<4x16x16xbf16>
    %123 = arith.truncf %119 : vector<4x16x16xf32> to vector<4x16x16xbf16>
    %cst_47 = arith.constant dense<0.000000e+00> : vector<4x16x16xf32>
    %124 = tpu.matmul %122, %123, %cst_47 {dimension_numbers = #tpu.dot_dimension_numbers<[2], [2], [1], [1], [0, 0, 0, 1, 1, 1], [0], [0]>} : vector<4x16x16xbf16>, vector<4x16x16xbf16>, vector<4x16x16xf32> -> vector<4x16x16xf32>
    %cst_48 = arith.constant 2.500000e-01 : f32
    %125 = vector.broadcast %cst_48 : f32 to vector<4x16x16xf32>
    %126 = arith.mulf %124, %125 : vector<4x16x16xf32>
    %127 = vector.broadcast %82 : vector<1x1x16xf32> to vector<4x16x16xf32>
    %128 = arith.addf %126, %127 : vector<4x16x16xf32>
    %cst_49 = arith.constant dense<0xFF800000> : vector<4x16xf32>
    %129 = vector.multi_reduction <maximumf>, %128, %cst_49 [2] : vector<4x16x16xf32> to vector<4x16xf32>
    %130 = vector.shape_cast %129 : vector<4x16xf32> to vector<4x16x1xf32>
    %131 = vector.broadcast %130 : vector<4x16x1xf32> to vector<4x16x16xf32>
    %132 = arith.subf %128, %131 : vector<4x16x16xf32>
    %133 = math.exp %132 : vector<4x16x16xf32>
    %cst_50 = arith.constant dense<0.000000e+00> : vector<4x16xf32>
    %134 = vector.multi_reduction <add>, %133, %cst_50 [2] : vector<4x16x16xf32> to vector<4x16xf32>
    %135 = vector.shape_cast %134 : vector<4x16xf32> to vector<4x16x1xf32>
    %136 = tpu.reciprocal %135 {approx = true} : vector<4x16x1xf32> -> vector<4x16x1xf32>
    %137 = vector.broadcast %136 : vector<4x16x1xf32> to vector<4x16x16xf32>
    %138 = arith.mulf %133, %137 : vector<4x16x16xf32>
    %139 = arith.truncf %138 : vector<4x16x16xf32> to vector<4x16x16xbf16>
    %140 = arith.truncf %121 : vector<4x16x16xf32> to vector<4x16x16xbf16>
    %cst_51 = arith.constant dense<0.000000e+00> : vector<4x16x16xf32>
    %141 = tpu.matmul %139, %140, %cst_51 {dimension_numbers = #tpu.dot_dimension_numbers<[2], [1], [1], [2], [0, 0, 0, 1, 1, 2], [0], [0]>} : vector<4x16x16xbf16>, vector<4x16x16xbf16>, vector<4x16x16xf32> -> vector<4x16x16xf32>
    %142 = vector.shape_cast %141 : vector<4x16x16xf32> to vector<2x32x16xf32>
    %c0_52 = arith.constant 0 : index
    %c0_53 = arith.constant 0 : index
    %c0_54 = arith.constant 0 : index
    %c0_55 = arith.constant 0 : index
    %143 = vector.load %arg12[%c0_52, %c0_53, %c0_54, %c0_55] : memref<2x2x16x32xbf16, #tpu.memory_space<vmem>>, vector<1x2x16x32xbf16>
    %144 = vector.shape_cast %143 : vector<1x2x16x32xbf16> to vector<2x16x32xbf16>
    %145 = arith.truncf %142 : vector<2x32x16xf32> to vector<2x32x16xbf16>
    %cst_56 = arith.constant dense<0.000000e+00> : vector<2x32x32xf32>
    %146 = tpu.matmul %145, %144, %cst_56 {dimension_numbers = #tpu.dot_dimension_numbers<[2], [1], [1], [2], [0, 0, 0, 1, 1, 2], [0], [0]>} : vector<2x32x16xbf16>, vector<2x16x32xbf16>, vector<2x32x32xf32> -> vector<2x32x32xf32>
    %cst_57 = arith.constant dense<0.000000e+00> : vector<32x32xf32>
    %147 = vector.multi_reduction <add>, %146, %cst_57 [0] : vector<2x32x32xf32> to vector<32x32xf32>
    %148 = arith.addf %76, %147 : vector<32x32xf32>
    %c0_58 = arith.constant 0 : index
    %c0_59 = arith.constant 0 : index
    %c0_60 = arith.constant 0 : index
    %149 = vector.load %arg13[%c0_58, %c0_59, %c0_60] : memref<2x1x32xf32, #tpu.memory_space<vmem>>, vector<1x1x32xf32>
    %150 = vector.shape_cast %149 : vector<1x1x32xf32> to vector<1x32xf32>
    %151 = vector.broadcast %150 : vector<1x32xf32> to vector<32x32xf32>
    %152 = arith.addf %148, %151 : vector<32x32xf32>
    %c0_61 = arith.constant 0 : index
    %c0_62 = arith.constant 0 : index
    %c0_63 = arith.constant 0 : index
    %153 = vector.load %arg14[%c0_61, %c0_62, %c0_63] : memref<2x1x32xf32, #tpu.memory_space<vmem>>, vector<1x1x32xf32>
    %154 = vector.shape_cast %153 : vector<1x1x32xf32> to vector<1x32xf32>
    %c0_64 = arith.constant 0 : index
    %c0_65 = arith.constant 0 : index
    %c0_66 = arith.constant 0 : index
    %155 = vector.load %arg15[%c0_64, %c0_65, %c0_66] : memref<2x1x32xf32, #tpu.memory_space<vmem>>, vector<1x1x32xf32>
    %156 = vector.shape_cast %155 : vector<1x1x32xf32> to vector<1x32xf32>
    %cst_67 = arith.constant dense<0.000000e+00> : vector<32xf32>
    %157 = vector.multi_reduction <add>, %152, %cst_67 [1] : vector<32x32xf32> to vector<32xf32>
    %158 = vector.shape_cast %157 : vector<32xf32> to vector<32x1xf32>
    %cst_68 = arith.constant 3.200000e+01 : f32
    %159 = vector.broadcast %cst_68 : f32 to vector<32x1xf32>
    %160 = arith.divf %158, %159 : vector<32x1xf32>
    %161 = vector.broadcast %160 : vector<32x1xf32> to vector<32x32xf32>
    %162 = arith.subf %152, %161 : vector<32x32xf32>
    %163 = arith.mulf %162, %162 : vector<32x32xf32>
    %cst_69 = arith.constant dense<0.000000e+00> : vector<32xf32>
    %164 = vector.multi_reduction <add>, %163, %cst_69 [1] : vector<32x32xf32> to vector<32xf32>
    %165 = vector.shape_cast %164 : vector<32xf32> to vector<32x1xf32>
    %cst_70 = arith.constant 3.200000e+01 : f32
    %166 = vector.broadcast %cst_70 : f32 to vector<32x1xf32>
    %167 = arith.divf %165, %166 : vector<32x1xf32>
    %168 = vector.broadcast %160 : vector<32x1xf32> to vector<32x32xf32>
    %169 = arith.subf %152, %168 : vector<32x32xf32>
    %cst_71 = arith.constant 9.99999974E-6 : f32
    %170 = vector.broadcast %cst_71 : f32 to vector<32x1xf32>
    %171 = arith.addf %167, %170 : vector<32x1xf32>
    %172 = math.rsqrt %171 : vector<32x1xf32>
    %173 = vector.broadcast %172 : vector<32x1xf32> to vector<32x32xf32>
    %174 = arith.mulf %169, %173 : vector<32x32xf32>
    %175 = vector.broadcast %154 : vector<1x32xf32> to vector<32x32xf32>
    %176 = arith.mulf %174, %175 : vector<32x32xf32>
    %177 = vector.broadcast %156 : vector<1x32xf32> to vector<32x32xf32>
    %178 = arith.addf %176, %177 : vector<32x32xf32>
    %c0_72 = arith.constant 0 : index
    %c0_73 = arith.constant 0 : index
    %c0_74 = arith.constant 0 : index
    %179 = vector.load %arg16[%c0_72, %c0_73, %c0_74] : memref<2x32x64xbf16, #tpu.memory_space<vmem>>, vector<1x32x64xbf16>
    %180 = vector.shape_cast %179 : vector<1x32x64xbf16> to vector<32x64xbf16>
    %181 = arith.truncf %178 : vector<32x32xf32> to vector<32x32xbf16>
    %cst_75 = arith.constant dense<0.000000e+00> : vector<32x64xf32>
    %182 = tpu.matmul %181, %180, %cst_75 {dimension_numbers = #tpu.dot_dimension_numbers<[1], [0], [0], [1], [0, 0, 1, 1], [], []>} : vector<32x32xbf16>, vector<32x64xbf16>, vector<32x64xf32> -> vector<32x64xf32>
    %c0_76 = arith.constant 0 : index
    %c0_77 = arith.constant 0 : index
    %c0_78 = arith.constant 0 : index
    %183 = vector.load %arg17[%c0_76, %c0_77, %c0_78] : memref<2x1x64xf32, #tpu.memory_space<vmem>>, vector<1x1x64xf32>
    %184 = vector.shape_cast %183 : vector<1x1x64xf32> to vector<1x64xf32>
    %185 = vector.broadcast %184 : vector<1x64xf32> to vector<32x64xf32>
    %186 = arith.addf %182, %185 : vector<32x64xf32>
    %cst_79 = arith.constant 5.000000e-01 : f32
    %187 = vector.broadcast %cst_79 : f32 to vector<32x64xf32>
    %188 = arith.mulf %187, %186 : vector<32x64xf32>
    %cst_80 = arith.constant 0.707106769 : f32
    %189 = vector.broadcast %cst_80 : f32 to vector<32x64xf32>
    %190 = arith.mulf %186, %189 : vector<32x64xf32>
    %191 = math.absf %190 : vector<32x64xf32>
    %cst_81 = arith.constant 0.327591091 : f32
    %192 = vector.broadcast %cst_81 : f32 to vector<32x64xf32>
    %193 = arith.mulf %192, %191 : vector<32x64xf32>
    %cst_82 = arith.constant 1.000000e+00 : f32
    %194 = vector.broadcast %cst_82 : f32 to vector<32x64xf32>
    %195 = arith.addf %194, %193 : vector<32x64xf32>
    %cst_83 = arith.constant 1.000000e+00 : f32
    %196 = vector.broadcast %cst_83 : f32 to vector<32x64xf32>
    %197 = arith.divf %196, %195 : vector<32x64xf32>
    %cst_84 = arith.constant 1.06140542 : f32
    %198 = vector.broadcast %cst_84 : f32 to vector<32x64xf32>
    %199 = arith.mulf %198, %197 : vector<32x64xf32>
    %cst_85 = arith.constant -1.45315206 : f32
    %200 = vector.broadcast %cst_85 : f32 to vector<32x64xf32>
    %201 = arith.addf %199, %200 : vector<32x64xf32>
    %202 = arith.mulf %201, %197 : vector<32x64xf32>
    %cst_86 = arith.constant 1.42141378 : f32
    %203 = vector.broadcast %cst_86 : f32 to vector<32x64xf32>
    %204 = arith.addf %202, %203 : vector<32x64xf32>
    %205 = arith.mulf %204, %197 : vector<32x64xf32>
    %cst_87 = arith.constant -0.284496725 : f32
    %206 = vector.broadcast %cst_87 : f32 to vector<32x64xf32>
    %207 = arith.addf %205, %206 : vector<32x64xf32>
    %208 = arith.mulf %207, %197 : vector<32x64xf32>
    %cst_88 = arith.constant 0.254829586 : f32
    %209 = vector.broadcast %cst_88 : f32 to vector<32x64xf32>
    %210 = arith.addf %208, %209 : vector<32x64xf32>
    %211 = arith.mulf %210, %197 : vector<32x64xf32>
    %cst_89 = arith.constant 0.000000e+00 : f32
    %212 = vector.broadcast %cst_89 : f32 to vector<32x64xf32>
    %213 = arith.subf %212, %191 : vector<32x64xf32>
    %214 = arith.mulf %213, %191 : vector<32x64xf32>
    %215 = math.exp %214 : vector<32x64xf32>
    %216 = arith.mulf %211, %215 : vector<32x64xf32>
    %cst_90 = arith.constant 1.000000e+00 : f32
    %217 = vector.broadcast %cst_90 : f32 to vector<32x64xf32>
    %218 = arith.subf %217, %216 : vector<32x64xf32>
    %cst_91 = arith.constant 0.000000e+00 : f32
    %219 = vector.broadcast %cst_91 : f32 to vector<32x64xf32>
    %220 = arith.cmpf oge, %190, %219 : vector<32x64xf32>
    %cst_92 = arith.constant 0.000000e+00 : f32
    %221 = vector.broadcast %cst_92 : f32 to vector<32x64xf32>
    %222 = arith.subf %221, %218 : vector<32x64xf32>
    %223 = arith.select %220, %218, %222 : vector<32x64xi1>, vector<32x64xf32>
    %cst_93 = arith.constant 1.000000e+00 : f32
    %224 = vector.broadcast %cst_93 : f32 to vector<32x64xf32>
    %225 = arith.addf %224, %223 : vector<32x64xf32>
    %226 = arith.mulf %188, %225 : vector<32x64xf32>
    %c0_94 = arith.constant 0 : index
    %c0_95 = arith.constant 0 : index
    %c0_96 = arith.constant 0 : index
    %227 = vector.load %arg18[%c0_94, %c0_95, %c0_96] : memref<2x64x32xbf16, #tpu.memory_space<vmem>>, vector<1x64x32xbf16>
    %228 = vector.shape_cast %227 : vector<1x64x32xbf16> to vector<64x32xbf16>
    %229 = arith.truncf %226 : vector<32x64xf32> to vector<32x64xbf16>
    %cst_97 = arith.constant dense<0.000000e+00> : vector<32x32xf32>
    %230 = tpu.matmul %229, %228, %cst_97 {dimension_numbers = #tpu.dot_dimension_numbers<[1], [0], [0], [1], [0, 0, 1, 1], [], []>} : vector<32x64xbf16>, vector<64x32xbf16>, vector<32x32xf32> -> vector<32x32xf32>
    %c0_98 = arith.constant 0 : index
    %c0_99 = arith.constant 0 : index
    %c0_100 = arith.constant 0 : index
    %231 = vector.load %arg19[%c0_98, %c0_99, %c0_100] : memref<2x1x32xf32, #tpu.memory_space<vmem>>, vector<1x1x32xf32>
    %232 = vector.shape_cast %231 : vector<1x1x32xf32> to vector<1x32xf32>
    %233 = vector.broadcast %232 : vector<1x32xf32> to vector<32x32xf32>
    %234 = arith.addf %230, %233 : vector<32x32xf32>
    %235 = arith.addf %152, %234 : vector<32x32xf32>
    %c1 = arith.constant 1 : index
    %c0_101 = arith.constant 0 : index
    %c0_102 = arith.constant 0 : index
    %236 = vector.load %arg9[%c1, %c0_101, %c0_102] : memref<2x1x32xf32, #tpu.memory_space<vmem>>, vector<1x1x32xf32>
    %237 = vector.shape_cast %236 : vector<1x1x32xf32> to vector<1x32xf32>
    %c1_103 = arith.constant 1 : index
    %c0_104 = arith.constant 0 : index
    %c0_105 = arith.constant 0 : index
    %238 = vector.load %arg10[%c1_103, %c0_104, %c0_105] : memref<2x1x32xf32, #tpu.memory_space<vmem>>, vector<1x1x32xf32>
    %239 = vector.shape_cast %238 : vector<1x1x32xf32> to vector<1x32xf32>
    %cst_106 = arith.constant dense<0.000000e+00> : vector<32xf32>
    %240 = vector.multi_reduction <add>, %235, %cst_106 [1] : vector<32x32xf32> to vector<32xf32>
    %241 = vector.shape_cast %240 : vector<32xf32> to vector<32x1xf32>
    %cst_107 = arith.constant 3.200000e+01 : f32
    %242 = vector.broadcast %cst_107 : f32 to vector<32x1xf32>
    %243 = arith.divf %241, %242 : vector<32x1xf32>
    %244 = vector.broadcast %243 : vector<32x1xf32> to vector<32x32xf32>
    %245 = arith.subf %235, %244 : vector<32x32xf32>
    %246 = arith.mulf %245, %245 : vector<32x32xf32>
    %cst_108 = arith.constant dense<0.000000e+00> : vector<32xf32>
    %247 = vector.multi_reduction <add>, %246, %cst_108 [1] : vector<32x32xf32> to vector<32xf32>
    %248 = vector.shape_cast %247 : vector<32xf32> to vector<32x1xf32>
    %cst_109 = arith.constant 3.200000e+01 : f32
    %249 = vector.broadcast %cst_109 : f32 to vector<32x1xf32>
    %250 = arith.divf %248, %249 : vector<32x1xf32>
    %251 = vector.broadcast %243 : vector<32x1xf32> to vector<32x32xf32>
    %252 = arith.subf %235, %251 : vector<32x32xf32>
    %cst_110 = arith.constant 9.99999974E-6 : f32
    %253 = vector.broadcast %cst_110 : f32 to vector<32x1xf32>
    %254 = arith.addf %250, %253 : vector<32x1xf32>
    %255 = math.rsqrt %254 : vector<32x1xf32>
    %256 = vector.broadcast %255 : vector<32x1xf32> to vector<32x32xf32>
    %257 = arith.mulf %252, %256 : vector<32x32xf32>
    %258 = vector.broadcast %237 : vector<1x32xf32> to vector<32x32xf32>
    %259 = arith.mulf %257, %258 : vector<32x32xf32>
    %260 = vector.broadcast %239 : vector<1x32xf32> to vector<32x32xf32>
    %261 = arith.addf %259, %260 : vector<32x32xf32>
    %262 = arith.truncf %261 : vector<32x32xf32> to vector<32x32xbf16>
    %263 = vector.shape_cast %262 : vector<32x32xbf16> to vector<1x32x32xbf16>
    %264 = vector.shape_cast %263 : vector<1x32x32xbf16> to vector<1x32x32xbf16>
    %265 = vector.broadcast %264 : vector<1x32x32xbf16> to vector<6x32x32xbf16>
    %c1_111 = arith.constant 1 : index
    %c0_112 = arith.constant 0 : index
    %c0_113 = arith.constant 0 : index
    %c0_114 = arith.constant 0 : index
    %266 = vector.load %arg11[%c1_111, %c0_112, %c0_113, %c0_114] : memref<2x6x32x16xbf16, #tpu.memory_space<vmem>>, vector<1x6x32x16xbf16>
    %267 = vector.shape_cast %266 : vector<1x6x32x16xbf16> to vector<6x32x16xbf16>
    %cst_115 = arith.constant dense<0.000000e+00> : vector<6x32x16xf32>
    %268 = tpu.matmul %265, %267, %cst_115 {dimension_numbers = #tpu.dot_dimension_numbers<[2], [1], [1], [2], [0, 0, 0, 1, 1, 2], [0], [0]>} : vector<6x32x32xbf16>, vector<6x32x16xbf16>, vector<6x32x16xf32> -> vector<6x32x16xf32>
    %269 = vector.extract_strided_slice %268 {offsets = [0, 0, 0], sizes = [2, 32, 16], strides = [1, 1, 1]} : vector<6x32x16xf32> to vector<2x32x16xf32>
    %270 = vector.shape_cast %269 : vector<2x32x16xf32> to vector<4x16x16xf32>
    %271 = vector.extract_strided_slice %268 {offsets = [2, 0, 0], sizes = [2, 32, 16], strides = [1, 1, 1]} : vector<6x32x16xf32> to vector<2x32x16xf32>
    %272 = vector.shape_cast %271 : vector<2x32x16xf32> to vector<4x16x16xf32>
    %273 = vector.extract_strided_slice %268 {offsets = [4, 0, 0], sizes = [2, 32, 16], strides = [1, 1, 1]} : vector<6x32x16xf32> to vector<2x32x16xf32>
    %274 = vector.shape_cast %273 : vector<2x32x16xf32> to vector<4x16x16xf32>
    %275 = arith.truncf %270 : vector<4x16x16xf32> to vector<4x16x16xbf16>
    %276 = arith.truncf %272 : vector<4x16x16xf32> to vector<4x16x16xbf16>
    %cst_116 = arith.constant dense<0.000000e+00> : vector<4x16x16xf32>
    %277 = tpu.matmul %275, %276, %cst_116 {dimension_numbers = #tpu.dot_dimension_numbers<[2], [2], [1], [1], [0, 0, 0, 1, 1, 1], [0], [0]>} : vector<4x16x16xbf16>, vector<4x16x16xbf16>, vector<4x16x16xf32> -> vector<4x16x16xf32>
    %cst_117 = arith.constant 2.500000e-01 : f32
    %278 = vector.broadcast %cst_117 : f32 to vector<4x16x16xf32>
    %279 = arith.mulf %277, %278 : vector<4x16x16xf32>
    %280 = vector.broadcast %82 : vector<1x1x16xf32> to vector<4x16x16xf32>
    %281 = arith.addf %279, %280 : vector<4x16x16xf32>
    %cst_118 = arith.constant dense<0xFF800000> : vector<4x16xf32>
    %282 = vector.multi_reduction <maximumf>, %281, %cst_118 [2] : vector<4x16x16xf32> to vector<4x16xf32>
    %283 = vector.shape_cast %282 : vector<4x16xf32> to vector<4x16x1xf32>
    %284 = vector.broadcast %283 : vector<4x16x1xf32> to vector<4x16x16xf32>
    %285 = arith.subf %281, %284 : vector<4x16x16xf32>
    %286 = math.exp %285 : vector<4x16x16xf32>
    %cst_119 = arith.constant dense<0.000000e+00> : vector<4x16xf32>
    %287 = vector.multi_reduction <add>, %286, %cst_119 [2] : vector<4x16x16xf32> to vector<4x16xf32>
    %288 = vector.shape_cast %287 : vector<4x16xf32> to vector<4x16x1xf32>
    %289 = tpu.reciprocal %288 {approx = true} : vector<4x16x1xf32> -> vector<4x16x1xf32>
    %290 = vector.broadcast %289 : vector<4x16x1xf32> to vector<4x16x16xf32>
    %291 = arith.mulf %286, %290 : vector<4x16x16xf32>
    %292 = arith.truncf %291 : vector<4x16x16xf32> to vector<4x16x16xbf16>
    %293 = arith.truncf %274 : vector<4x16x16xf32> to vector<4x16x16xbf16>
    %cst_120 = arith.constant dense<0.000000e+00> : vector<4x16x16xf32>
    %294 = tpu.matmul %292, %293, %cst_120 {dimension_numbers = #tpu.dot_dimension_numbers<[2], [1], [1], [2], [0, 0, 0, 1, 1, 2], [0], [0]>} : vector<4x16x16xbf16>, vector<4x16x16xbf16>, vector<4x16x16xf32> -> vector<4x16x16xf32>
    %295 = vector.shape_cast %294 : vector<4x16x16xf32> to vector<2x32x16xf32>
    %c1_121 = arith.constant 1 : index
    %c0_122 = arith.constant 0 : index
    %c0_123 = arith.constant 0 : index
    %c0_124 = arith.constant 0 : index
    %296 = vector.load %arg12[%c1_121, %c0_122, %c0_123, %c0_124] : memref<2x2x16x32xbf16, #tpu.memory_space<vmem>>, vector<1x2x16x32xbf16>
    %297 = vector.shape_cast %296 : vector<1x2x16x32xbf16> to vector<2x16x32xbf16>
    %298 = arith.truncf %295 : vector<2x32x16xf32> to vector<2x32x16xbf16>
    %cst_125 = arith.constant dense<0.000000e+00> : vector<2x32x32xf32>
    %299 = tpu.matmul %298, %297, %cst_125 {dimension_numbers = #tpu.dot_dimension_numbers<[2], [1], [1], [2], [0, 0, 0, 1, 1, 2], [0], [0]>} : vector<2x32x16xbf16>, vector<2x16x32xbf16>, vector<2x32x32xf32> -> vector<2x32x32xf32>
    %cst_126 = arith.constant dense<0.000000e+00> : vector<32x32xf32>
    %300 = vector.multi_reduction <add>, %299, %cst_126 [0] : vector<2x32x32xf32> to vector<32x32xf32>
    %301 = arith.addf %235, %300 : vector<32x32xf32>
    %c1_127 = arith.constant 1 : index
    %c0_128 = arith.constant 0 : index
    %c0_129 = arith.constant 0 : index
    %302 = vector.load %arg13[%c1_127, %c0_128, %c0_129] : memref<2x1x32xf32, #tpu.memory_space<vmem>>, vector<1x1x32xf32>
    %303 = vector.shape_cast %302 : vector<1x1x32xf32> to vector<1x32xf32>
    %304 = vector.broadcast %303 : vector<1x32xf32> to vector<32x32xf32>
    %305 = arith.addf %301, %304 : vector<32x32xf32>
    %c1_130 = arith.constant 1 : index
    %c0_131 = arith.constant 0 : index
    %c0_132 = arith.constant 0 : index
    %306 = vector.load %arg14[%c1_130, %c0_131, %c0_132] : memref<2x1x32xf32, #tpu.memory_space<vmem>>, vector<1x1x32xf32>
    %307 = vector.shape_cast %306 : vector<1x1x32xf32> to vector<1x32xf32>
    %c1_133 = arith.constant 1 : index
    %c0_134 = arith.constant 0 : index
    %c0_135 = arith.constant 0 : index
    %308 = vector.load %arg15[%c1_133, %c0_134, %c0_135] : memref<2x1x32xf32, #tpu.memory_space<vmem>>, vector<1x1x32xf32>
    %309 = vector.shape_cast %308 : vector<1x1x32xf32> to vector<1x32xf32>
    %cst_136 = arith.constant dense<0.000000e+00> : vector<32xf32>
    %310 = vector.multi_reduction <add>, %305, %cst_136 [1] : vector<32x32xf32> to vector<32xf32>
    %311 = vector.shape_cast %310 : vector<32xf32> to vector<32x1xf32>
    %cst_137 = arith.constant 3.200000e+01 : f32
    %312 = vector.broadcast %cst_137 : f32 to vector<32x1xf32>
    %313 = arith.divf %311, %312 : vector<32x1xf32>
    %314 = vector.broadcast %313 : vector<32x1xf32> to vector<32x32xf32>
    %315 = arith.subf %305, %314 : vector<32x32xf32>
    %316 = arith.mulf %315, %315 : vector<32x32xf32>
    %cst_138 = arith.constant dense<0.000000e+00> : vector<32xf32>
    %317 = vector.multi_reduction <add>, %316, %cst_138 [1] : vector<32x32xf32> to vector<32xf32>
    %318 = vector.shape_cast %317 : vector<32xf32> to vector<32x1xf32>
    %cst_139 = arith.constant 3.200000e+01 : f32
    %319 = vector.broadcast %cst_139 : f32 to vector<32x1xf32>
    %320 = arith.divf %318, %319 : vector<32x1xf32>
    %321 = vector.broadcast %313 : vector<32x1xf32> to vector<32x32xf32>
    %322 = arith.subf %305, %321 : vector<32x32xf32>
    %cst_140 = arith.constant 9.99999974E-6 : f32
    %323 = vector.broadcast %cst_140 : f32 to vector<32x1xf32>
    %324 = arith.addf %320, %323 : vector<32x1xf32>
    %325 = math.rsqrt %324 : vector<32x1xf32>
    %326 = vector.broadcast %325 : vector<32x1xf32> to vector<32x32xf32>
    %327 = arith.mulf %322, %326 : vector<32x32xf32>
    %328 = vector.broadcast %307 : vector<1x32xf32> to vector<32x32xf32>
    %329 = arith.mulf %327, %328 : vector<32x32xf32>
    %330 = vector.broadcast %309 : vector<1x32xf32> to vector<32x32xf32>
    %331 = arith.addf %329, %330 : vector<32x32xf32>
    %c1_141 = arith.constant 1 : index
    %c0_142 = arith.constant 0 : index
    %c0_143 = arith.constant 0 : index
    %332 = vector.load %arg16[%c1_141, %c0_142, %c0_143] : memref<2x32x64xbf16, #tpu.memory_space<vmem>>, vector<1x32x64xbf16>
    %333 = vector.shape_cast %332 : vector<1x32x64xbf16> to vector<32x64xbf16>
    %334 = arith.truncf %331 : vector<32x32xf32> to vector<32x32xbf16>
    %cst_144 = arith.constant dense<0.000000e+00> : vector<32x64xf32>
    %335 = tpu.matmul %334, %333, %cst_144 {dimension_numbers = #tpu.dot_dimension_numbers<[1], [0], [0], [1], [0, 0, 1, 1], [], []>} : vector<32x32xbf16>, vector<32x64xbf16>, vector<32x64xf32> -> vector<32x64xf32>
    %c1_145 = arith.constant 1 : index
    %c0_146 = arith.constant 0 : index
    %c0_147 = arith.constant 0 : index
    %336 = vector.load %arg17[%c1_145, %c0_146, %c0_147] : memref<2x1x64xf32, #tpu.memory_space<vmem>>, vector<1x1x64xf32>
    %337 = vector.shape_cast %336 : vector<1x1x64xf32> to vector<1x64xf32>
    %338 = vector.broadcast %337 : vector<1x64xf32> to vector<32x64xf32>
    %339 = arith.addf %335, %338 : vector<32x64xf32>
    %cst_148 = arith.constant 5.000000e-01 : f32
    %340 = vector.broadcast %cst_148 : f32 to vector<32x64xf32>
    %341 = arith.mulf %340, %339 : vector<32x64xf32>
    %cst_149 = arith.constant 0.707106769 : f32
    %342 = vector.broadcast %cst_149 : f32 to vector<32x64xf32>
    %343 = arith.mulf %339, %342 : vector<32x64xf32>
    %344 = math.absf %343 : vector<32x64xf32>
    %cst_150 = arith.constant 0.327591091 : f32
    %345 = vector.broadcast %cst_150 : f32 to vector<32x64xf32>
    %346 = arith.mulf %345, %344 : vector<32x64xf32>
    %cst_151 = arith.constant 1.000000e+00 : f32
    %347 = vector.broadcast %cst_151 : f32 to vector<32x64xf32>
    %348 = arith.addf %347, %346 : vector<32x64xf32>
    %cst_152 = arith.constant 1.000000e+00 : f32
    %349 = vector.broadcast %cst_152 : f32 to vector<32x64xf32>
    %350 = arith.divf %349, %348 : vector<32x64xf32>
    %cst_153 = arith.constant 1.06140542 : f32
    %351 = vector.broadcast %cst_153 : f32 to vector<32x64xf32>
    %352 = arith.mulf %351, %350 : vector<32x64xf32>
    %cst_154 = arith.constant -1.45315206 : f32
    %353 = vector.broadcast %cst_154 : f32 to vector<32x64xf32>
    %354 = arith.addf %352, %353 : vector<32x64xf32>
    %355 = arith.mulf %354, %350 : vector<32x64xf32>
    %cst_155 = arith.constant 1.42141378 : f32
    %356 = vector.broadcast %cst_155 : f32 to vector<32x64xf32>
    %357 = arith.addf %355, %356 : vector<32x64xf32>
    %358 = arith.mulf %357, %350 : vector<32x64xf32>
    %cst_156 = arith.constant -0.284496725 : f32
    %359 = vector.broadcast %cst_156 : f32 to vector<32x64xf32>
    %360 = arith.addf %358, %359 : vector<32x64xf32>
    %361 = arith.mulf %360, %350 : vector<32x64xf32>
    %cst_157 = arith.constant 0.254829586 : f32
    %362 = vector.broadcast %cst_157 : f32 to vector<32x64xf32>
    %363 = arith.addf %361, %362 : vector<32x64xf32>
    %364 = arith.mulf %363, %350 : vector<32x64xf32>
    %cst_158 = arith.constant 0.000000e+00 : f32
    %365 = vector.broadcast %cst_158 : f32 to vector<32x64xf32>
    %366 = arith.subf %365, %344 : vector<32x64xf32>
    %367 = arith.mulf %366, %344 : vector<32x64xf32>
    %368 = math.exp %367 : vector<32x64xf32>
    %369 = arith.mulf %364, %368 : vector<32x64xf32>
    %cst_159 = arith.constant 1.000000e+00 : f32
    %370 = vector.broadcast %cst_159 : f32 to vector<32x64xf32>
    %371 = arith.subf %370, %369 : vector<32x64xf32>
    %cst_160 = arith.constant 0.000000e+00 : f32
    %372 = vector.broadcast %cst_160 : f32 to vector<32x64xf32>
    %373 = arith.cmpf oge, %343, %372 : vector<32x64xf32>
    %cst_161 = arith.constant 0.000000e+00 : f32
    %374 = vector.broadcast %cst_161 : f32 to vector<32x64xf32>
    %375 = arith.subf %374, %371 : vector<32x64xf32>
    %376 = arith.select %373, %371, %375 : vector<32x64xi1>, vector<32x64xf32>
    %cst_162 = arith.constant 1.000000e+00 : f32
    %377 = vector.broadcast %cst_162 : f32 to vector<32x64xf32>
    %378 = arith.addf %377, %376 : vector<32x64xf32>
    %379 = arith.mulf %341, %378 : vector<32x64xf32>
    %c1_163 = arith.constant 1 : index
    %c0_164 = arith.constant 0 : index
    %c0_165 = arith.constant 0 : index
    %380 = vector.load %arg18[%c1_163, %c0_164, %c0_165] : memref<2x64x32xbf16, #tpu.memory_space<vmem>>, vector<1x64x32xbf16>
    %381 = vector.shape_cast %380 : vector<1x64x32xbf16> to vector<64x32xbf16>
    %382 = arith.truncf %379 : vector<32x64xf32> to vector<32x64xbf16>
    %cst_166 = arith.constant dense<0.000000e+00> : vector<32x32xf32>
    %383 = tpu.matmul %382, %381, %cst_166 {dimension_numbers = #tpu.dot_dimension_numbers<[1], [0], [0], [1], [0, 0, 1, 1], [], []>} : vector<32x64xbf16>, vector<64x32xbf16>, vector<32x32xf32> -> vector<32x32xf32>
    %c1_167 = arith.constant 1 : index
    %c0_168 = arith.constant 0 : index
    %c0_169 = arith.constant 0 : index
    %384 = vector.load %arg19[%c1_167, %c0_168, %c0_169] : memref<2x1x32xf32, #tpu.memory_space<vmem>>, vector<1x1x32xf32>
    %385 = vector.shape_cast %384 : vector<1x1x32xf32> to vector<1x32xf32>
    %386 = vector.broadcast %385 : vector<1x32xf32> to vector<32x32xf32>
    %387 = arith.addf %383, %386 : vector<32x32xf32>
    %388 = arith.addf %305, %387 : vector<32x32xf32>
    %389 = vector.shape_cast %388 : vector<32x32xf32> to vector<2x16x32xf32>
    %390 = vector.extract_strided_slice %389 {offsets = [0, 0, 0], sizes = [2, 1, 32], strides = [1, 1, 1]} : vector<2x16x32xf32> to vector<2x1x32xf32>
    %391 = vector.shape_cast %390 : vector<2x1x32xf32> to vector<2x32xf32>
    %c0_170 = arith.constant 0 : index
    %c0_171 = arith.constant 0 : index
    %392 = vector.load %arg20[%c0_170, %c0_171] : memref<1x32xf32, #tpu.memory_space<vmem>>, vector<1x32xf32>
    %c0_172 = arith.constant 0 : index
    %c0_173 = arith.constant 0 : index
    %393 = vector.load %arg21[%c0_172, %c0_173] : memref<1x32xf32, #tpu.memory_space<vmem>>, vector<1x32xf32>
    %cst_174 = arith.constant dense<0.000000e+00> : vector<2xf32>
    %394 = vector.multi_reduction <add>, %391, %cst_174 [1] : vector<2x32xf32> to vector<2xf32>
    %395 = vector.shape_cast %394 : vector<2xf32> to vector<2x1xf32>
    %cst_175 = arith.constant 3.200000e+01 : f32
    %396 = vector.broadcast %cst_175 : f32 to vector<2x1xf32>
    %397 = arith.divf %395, %396 : vector<2x1xf32>
    %398 = vector.broadcast %397 : vector<2x1xf32> to vector<2x32xf32>
    %399 = arith.subf %391, %398 : vector<2x32xf32>
    %400 = arith.mulf %399, %399 : vector<2x32xf32>
    %cst_176 = arith.constant dense<0.000000e+00> : vector<2xf32>
    %401 = vector.multi_reduction <add>, %400, %cst_176 [1] : vector<2x32xf32> to vector<2xf32>
    %402 = vector.shape_cast %401 : vector<2xf32> to vector<2x1xf32>
    %cst_177 = arith.constant 3.200000e+01 : f32
    %403 = vector.broadcast %cst_177 : f32 to vector<2x1xf32>
    %404 = arith.divf %402, %403 : vector<2x1xf32>
    %405 = vector.broadcast %397 : vector<2x1xf32> to vector<2x32xf32>
    %406 = arith.subf %391, %405 : vector<2x32xf32>
    %cst_178 = arith.constant 9.99999974E-6 : f32
    %407 = vector.broadcast %cst_178 : f32 to vector<2x1xf32>
    %408 = arith.addf %404, %407 : vector<2x1xf32>
    %409 = math.rsqrt %408 : vector<2x1xf32>
    %410 = vector.broadcast %409 : vector<2x1xf32> to vector<2x32xf32>
    %411 = arith.mulf %406, %410 : vector<2x32xf32>
    %412 = vector.broadcast %392 : vector<1x32xf32> to vector<2x32xf32>
    %413 = arith.mulf %411, %412 : vector<2x32xf32>
    %414 = vector.broadcast %393 : vector<1x32xf32> to vector<2x32xf32>
    %415 = arith.addf %413, %414 : vector<2x32xf32>
    %c0_179 = arith.constant 0 : index
    %c0_180 = arith.constant 0 : index
    %416 = vector.load %arg22[%c0_179, %c0_180] : memref<32x16xbf16, #tpu.memory_space<vmem>>, vector<32x16xbf16>
    %417 = arith.truncf %415 : vector<2x32xf32> to vector<2x32xbf16>
    %cst_181 = arith.constant dense<0.000000e+00> : vector<2x16xf32>
    %418 = tpu.matmul %417, %416, %cst_181 {dimension_numbers = #tpu.dot_dimension_numbers<[1], [0], [0], [1], [0, 0, 1, 1], [], []>} : vector<2x32xbf16>, vector<32x16xbf16>, vector<2x16xf32> -> vector<2x16xf32>
    %c0_182 = arith.constant 0 : index
    %c0_183 = arith.constant 0 : index
    %419 = vector.load %arg23[%c0_182, %c0_183] : memref<1x16xf32, #tpu.memory_space<vmem>>, vector<1x16xf32>
    %420 = vector.broadcast %419 : vector<1x16xf32> to vector<2x16xf32>
    %421 = arith.addf %418, %420 : vector<2x16xf32>
    %cst_184 = arith.constant 0.000000e+00 : f32
    %422 = vector.broadcast %cst_184 : f32 to vector<2x16xf32>
    %423 = arith.subf %422, %421 : vector<2x16xf32>
    %424 = math.exp %423 : vector<2x16xf32>
    %cst_185 = arith.constant 1.000000e+00 : f32
    %425 = vector.broadcast %cst_185 : f32 to vector<2x16xf32>
    %426 = arith.addf %425, %424 : vector<2x16xf32>
    %cst_186 = arith.constant 1.000000e+00 : f32
    %427 = vector.broadcast %cst_186 : f32 to vector<2x16xf32>
    %428 = arith.divf %427, %426 : vector<2x16xf32>
    %c0_187 = arith.constant 0 : index
    %c0_188 = arith.constant 0 : index
    %429 = vector.load %arg24[%c0_187, %c0_188] : memref<16x64xf32, #tpu.memory_space<vmem>>, vector<16x64xf32>
    %cst_189 = arith.constant dense<0.000000e+00> : vector<2x64xf32>
    %430 = tpu.matmul %428, %429, %cst_189 {dimension_numbers = #tpu.dot_dimension_numbers<[1], [0], [0], [1], [0, 0, 1, 1], [], []>} : vector<2x16xf32>, vector<16x64xf32>, vector<2x64xf32> -> vector<2x64xf32>
    %cst_190 = arith.constant 0.000000e+00 : f32
    %431 = vector.broadcast %cst_190 : f32 to vector<2x48xf32>
    %432 = tpu.concatenate %430, %428, %431 in 1 : vector<2x64xf32>, vector<2x16xf32>, vector<2x48xf32> -> vector<2x128xf32>
    %cst_191 = arith.constant 0.000000e+00 : f32
    %433 = vector.broadcast %cst_191 : f32 to vector<6x128xf32>
    %434 = tpu.concatenate %432, %433 in 0 : vector<2x128xf32>, vector<6x128xf32> -> vector<8x128xf32>
    %c0_192 = arith.constant 0 : index
    %c0_193 = arith.constant 0 : index
    %435 = vector.load %arg25[%c0_192, %c0_193] : memref<8x128xf32, #tpu.memory_space<vmem>>, vector<8x128xf32>
    tpu.vector_store %arg25[%c0_192, %c0_193], %434 {strides = array<i32>} : memref<8x128xf32, #tpu.memory_space<vmem>>, vector<8x128xf32>,
    return
  }
}

</mosaic_0001>

<llo_original>
// kernel: vit_forward.1
$region0: #{vit_forward.1}
  #allocation0 [shape = 'u32[]', space=smem, size = 0x4, offset = 0x4, fixed_abs, tag = 'smem constant byte address 0x4 - core index']
  #allocation1 [shape = 'u32[72,128]{1,0:T(1,128)}', space=vmem, size = 0x9000, scoped, tag = 'internal scratch']
  %s0 = inlined_call_operand.vmem [shape: f32[32,8], index: 0, kind: input, shape index: {}]
  %s1 = inlined_call_operand.vmem [shape: f32[1,8], index: 1, kind: input, shape index: {}]
  %s2 = inlined_call_operand.vmem [shape: f32[1,8], index: 2, kind: input, shape index: {}]
  %s3 = inlined_call_operand.vmem [shape: bf16[8,32], index: 3, kind: input, shape index: {}]
  %s4 = inlined_call_operand.vmem [shape: f32[1,32], index: 4, kind: input, shape index: {}]
  %s5 = inlined_call_operand.vmem [shape: f32[1,32], index: 5, kind: input, shape index: {}]
  %s6 = inlined_call_operand.vmem [shape: f32[1,32], index: 6, kind: input, shape index: {}]
  %s7 = inlined_call_operand.vmem [shape: f32[1,32], index: 7, kind: input, shape index: {}]
  %s8 = inlined_call_operand.vmem [shape: f32[16,32], index: 8, kind: input, shape index: {}]
  %s9 = inlined_call_operand.vmem [shape: f32[2,1,32], index: 9, kind: input, shape index: {}]
  %s10 = inlined_call_operand.vmem [shape: f32[2,1,32], index: 10, kind: input, shape index: {}]
  %s11 = inlined_call_operand.vmem [shape: bf16[2,6,32,16], index: 11, kind: input, shape index: {}]
  %s12 = inlined_call_operand.vmem [shape: bf16[2,2,16,32], index: 12, kind: input, shape index: {}]
  %s13 = inlined_call_operand.vmem [shape: f32[2,1,32], index: 13, kind: input, shape index: {}]
  %s14 = inlined_call_operand.vmem [shape: f32[2,1,32], index: 14, kind: input, shape index: {}]
  %s15 = inlined_call_operand.vmem [shape: f32[2,1,32], index: 15, kind: input, shape index: {}]
  %s16 = inlined_call_operand.vmem [shape: bf16[2,32,64], index: 16, kind: input, shape index: {}]
  %s17 = inlined_call_operand.vmem [shape: f32[2,1,64], index: 17, kind: input, shape index: {}]
  %s18 = inlined_call_operand.vmem [shape: bf16[2,64,32], index: 18, kind: input, shape index: {}]
  %s19 = inlined_call_operand.vmem [shape: f32[2,1,32], index: 19, kind: input, shape index: {}]
  %s20 = inlined_call_operand.vmem [shape: f32[1,32], index: 20, kind: input, shape index: {}]
  %s21 = inlined_call_operand.vmem [shape: f32[1,32], index: 21, kind: input, shape index: {}]
  %s22 = inlined_call_operand.vmem [shape: bf16[32,16], index: 22, kind: input, shape index: {}]
  %s23 = inlined_call_operand.vmem [shape: f32[1,16], index: 23, kind: input, shape index: {}]
  %s24 = inlined_call_operand.vmem [shape: f32[16,64], index: 24, kind: input, shape index: {}]
  %s25 = inlined_call_operand.vmem [shape: f32[8,128], index: 25, kind: output, shape index: {}]
  %s26 = sld [smem:[#allocation0]]
  $region110: #{vit_forward.1} parent=0
    _
  %s28 = ssub.s32 1, %s26
  %s29 = scalar_select 0, %s28, %s26
  // Predicated region
  $region2: #{vit_forward.1} parent=0 // pred_check
    _
  $region3: #{vit_forward.1} parent=0 // pred_check_branch
    %31 = sbr.rel (0) target = $region5
  $region4: #{vit_forward.1} parent=0 // pred_region
    _
  $region5: #{vit_forward.1} parent=0 // pred_fallthru
    _
  // Predicated region
  $region6: #{vit_forward.1} parent=0 // pred_check
    _
  $region7: #{vit_forward.1} parent=0 // pred_check_branch
    %33 = sbr.rel (0) target = $region9
  $region8: #{vit_forward.1} parent=0 // pred_region
    _
  $region9: #{vit_forward.1} parent=0 // pred_fallthru
    _
  // Predicated region
  $region10: #{vit_forward.1} parent=0 // pred_check
    _
  $region11: #{vit_forward.1} parent=0 // pred_check_branch
    %35 = sbr.rel (0) target = $region13
  $region12: #{vit_forward.1} parent=0 // pred_region
    _
  $region13: #{vit_forward.1} parent=0 // pred_fallthru
    _
  // Predicated region
  $region14: #{vit_forward.1} parent=0 // pred_check
    _
  $region15: #{vit_forward.1} parent=0 // pred_check_branch
    %37 = sbr.rel (0) target = $region17
  $region16: #{vit_forward.1} parent=0 // pred_region
    _
  $region17: #{vit_forward.1} parent=0 // pred_fallthru
    _
  // Predicated region
  $region18: #{vit_forward.1} parent=0 // pred_check
    _
  $region19: #{vit_forward.1} parent=0 // pred_check_branch
    %39 = sbr.rel (0) target = $region21
  $region20: #{vit_forward.1} parent=0 // pred_region
    _
  $region21: #{vit_forward.1} parent=0 // pred_fallthru
    _
  // Predicated region
  $region22: #{vit_forward.1} parent=0 // pred_check
    _
  $region23: #{vit_forward.1} parent=0 // pred_check_branch
    %41 = sbr.rel (0) target = $region25
  $region24: #{vit_forward.1} parent=0 // pred_region
    _
  $region25: #{vit_forward.1} parent=0 // pred_fallthru
    _
  // Predicated region
  $region26: #{vit_forward.1} parent=0 // pred_check
    _
  $region27: #{vit_forward.1} parent=0 // pred_check_branch
    %43 = sbr.rel (0) target = $region29
  $region28: #{vit_forward.1} parent=0 // pred_region
    _
  $region29: #{vit_forward.1} parent=0 // pred_fallthru
    _
  // Predicated region
  $region30: #{vit_forward.1} parent=0 // pred_check
    _
  $region31: #{vit_forward.1} parent=0 // pred_check_branch
    %45 = sbr.rel (0) target = $region33
  $region32: #{vit_forward.1} parent=0 // pred_region
    _
  $region33: #{vit_forward.1} parent=0 // pred_fallthru
    _
  // Predicated region
  $region34: #{vit_forward.1} parent=0 // pred_check
    _
  $region35: #{vit_forward.1} parent=0 // pred_check_branch
    %47 = sbr.rel (0) target = $region37
  $region36: #{vit_forward.1} parent=0 // pred_region
    _
  $region37: #{vit_forward.1} parent=0 // pred_fallthru
    _
  // Predicated region
  $region38: #{vit_forward.1} parent=0 // pred_check
    _
  $region39: #{vit_forward.1} parent=0 // pred_check_branch
    %49 = sbr.rel (0) target = $region41
  $region40: #{vit_forward.1} parent=0 // pred_region
    _
  $region41: #{vit_forward.1} parent=0 // pred_fallthru
    _
  // Predicated region
  $region42: #{vit_forward.1} parent=0 // pred_check
    _
  $region43: #{vit_forward.1} parent=0 // pred_check_branch
    %51 = sbr.rel (0) target = $region45
  $region44: #{vit_forward.1} parent=0 // pred_region
    _
  $region45: #{vit_forward.1} parent=0 // pred_fallthru
    _
  // Predicated region
  $region46: #{vit_forward.1} parent=0 // pred_check
    _
  $region47: #{vit_forward.1} parent=0 // pred_check_branch
    %53 = sbr.rel (0) target = $region49
  $region48: #{vit_forward.1} parent=0 // pred_region
    _
  $region49: #{vit_forward.1} parent=0 // pred_fallthru
    _
  // Predicated region
  $region50: #{vit_forward.1} parent=0 // pred_check
    _
  $region51: #{vit_forward.1} parent=0 // pred_check_branch
    %55 = sbr.rel (0) target = $region53
  $region52: #{vit_forward.1} parent=0 // pred_region
    _
  $region53: #{vit_forward.1} parent=0 // pred_fallthru
    _
  // Predicated region
  $region54: #{vit_forward.1} parent=0 // pred_check
    _
  $region55: #{vit_forward.1} parent=0 // pred_check_branch
    %57 = sbr.rel (0) target = $region57
  $region56: #{vit_forward.1} parent=0 // pred_region
    _
  $region57: #{vit_forward.1} parent=0 // pred_fallthru
    _
  // Predicated region
  $region58: #{vit_forward.1} parent=0 // pred_check
    _
  $region59: #{vit_forward.1} parent=0 // pred_check_branch
    %59 = sbr.rel (0) target = $region61
  $region60: #{vit_forward.1} parent=0 // pred_region
    _
  $region61: #{vit_forward.1} parent=0 // pred_fallthru
    _
  // Predicated region
  $region62: #{vit_forward.1} parent=0 // pred_check
    _
  $region63: #{vit_forward.1} parent=0 // pred_check_branch
    %61 = sbr.rel (0) target = $region65
  $region64: #{vit_forward.1} parent=0 // pred_region
    _
  $region65: #{vit_forward.1} parent=0 // pred_fallthru
    _
  // Predicated region
  $region66: #{vit_forward.1} parent=0 // pred_check
    _
  $region67: #{vit_forward.1} parent=0 // pred_check_branch
    %63 = sbr.rel (0) target = $region69
  $region68: #{vit_forward.1} parent=0 // pred_region
    _
  $region69: #{vit_forward.1} parent=0 // pred_fallthru
    _
  // Predicated region
  $region70: #{vit_forward.1} parent=0 // pred_check
    _
  $region71: #{vit_forward.1} parent=0 // pred_check_branch
    %65 = sbr.rel (0) target = $region73
  $region72: #{vit_forward.1} parent=0 // pred_region
    _
  $region73: #{vit_forward.1} parent=0 // pred_fallthru
    _
  // Predicated region
  $region74: #{vit_forward.1} parent=0 // pred_check
    _
  $region75: #{vit_forward.1} parent=0 // pred_check_branch
    %67 = sbr.rel (0) target = $region77
  $region76: #{vit_forward.1} parent=0 // pred_region
    _
  $region77: #{vit_forward.1} parent=0 // pred_fallthru
    _
  // Predicated region
  $region78: #{vit_forward.1} parent=0 // pred_check
    _
  $region79: #{vit_forward.1} parent=0 // pred_check_branch
    %69 = sbr.rel (0) target = $region81
  $region80: #{vit_forward.1} parent=0 // pred_region
    _
  $region81: #{vit_forward.1} parent=0 // pred_fallthru
    _
  // Predicated region
  $region82: #{vit_forward.1} parent=0 // pred_check
    _
  $region83: #{vit_forward.1} parent=0 // pred_check_branch
    %71 = sbr.rel (0) target = $region85
  $region84: #{vit_forward.1} parent=0 // pred_region
    _
  $region85: #{vit_forward.1} parent=0 // pred_fallthru
    _
  // Predicated region
  $region86: #{vit_forward.1} parent=0 // pred_check
    _
  $region87: #{vit_forward.1} parent=0 // pred_check_branch
    %73 = sbr.rel (0) target = $region89
  $region88: #{vit_forward.1} parent=0 // pred_region
    _
  $region89: #{vit_forward.1} parent=0 // pred_fallthru
    _
  // Predicated region
  $region90: #{vit_forward.1} parent=0 // pred_check
    _
  $region91: #{vit_forward.1} parent=0 // pred_check_branch
    %75 = sbr.rel (0) target = $region93
  $region92: #{vit_forward.1} parent=0 // pred_region
    _
  $region93: #{vit_forward.1} parent=0 // pred_fallthru
    _
  // Predicated region
  $region94: #{vit_forward.1} parent=0 // pred_check
    _
  $region95: #{vit_forward.1} parent=0 // pred_check_branch
    %77 = sbr.rel (0) target = $region97
  $region96: #{vit_forward.1} parent=0 // pred_region
    _
  $region97: #{vit_forward.1} parent=0 // pred_fallthru
    _
  // Predicated region
  $region98: #{vit_forward.1} parent=0 // pred_check
    _
  $region99: #{vit_forward.1} parent=0 // pred_check_branch
    %79 = sbr.rel (0) target = $region101
  $region100: #{vit_forward.1} parent=0 // pred_region
    _
  $region101: #{vit_forward.1} parent=0 // pred_fallthru
    _
  %v81 = vld [vmem:[%s0] sm:$0xff]
  %v82 = vld [vmem:[%s0 + $0x8] sm:$0xff]
  %v83 = vld [vmem:[%s0 + $0x10] sm:$0xff]
  %v84 = vld [vmem:[%s0 + $0x18] sm:$0xff]
  %v85 = vld [vmem:[%s1] sm:$0x1]
  %v86 = vld [vmem:[%s2] sm:$0x1]
  %vm87 = vcmask 64512
  %v88 = vsel %vm87, %v81, 0.0
  %89 = vadd.xlane.f32.xlu0 %v88
  %v90 = vpop.xlane.xlu0 %89
  %v91 = vsel %vm87, %v82, 0.0
  %92 = vadd.xlane.f32.xlu0 %v91
  %v93 = vpop.xlane.xlu0 %92
  %v94 = vsel %vm87, %v83, 0.0
  %95 = vadd.xlane.f32.xlu0 %v94
  %v96 = vpop.xlane.xlu0 %95
  %v97 = vsel %vm87, %v84, 0.0
  %98 = vadd.xlane.f32.xlu0 %v97
  %v99 = vpop.xlane.xlu0 %98
  %v100 = vrcp.pop 8.0
  %v101 = vmul.f32 8.0, %v100
  %v102 = vsub.f32 1.0, %v101
  %v103 = vmul.f32 %v100, %v102
  %v104 = vadd.f32 %v100, %v103
  %vm105 = vweird.f32 %v100
  %v106 = vsel %vm105, %v100, %v104
  %v107 = vmul.f32 %v90, %v106
  %v108 = vmul.f32 %v93, %v106
  %v109 = vmul.f32 %v96, %v106
  %v110 = vmul.f32 %v99, %v106
  %v111 = vsub.f32 %v81, %v107
  %v112 = vsub.f32 %v82, %v108
  %v113 = vsub.f32 %v83, %v109
  %v114 = vsub.f32 %v84, %v110
  %v115 = vmul.f32 %v111, %v111
  %v116 = vmul.f32 %v112, %v112
  %v117 = vmul.f32 %v113, %v113
  %v118 = vmul.f32 %v114, %v114
  %v119 = vsel %vm87, %v115, 0.0
  %120 = vadd.xlane.f32.xlu0 %v119
  %v121 = vpop.xlane.xlu0 %120
  %v122 = vsel %vm87, %v116, 0.0
  %123 = vadd.xlane.f32.xlu0 %v122
  %v124 = vpop.xlane.xlu0 %123
  %v125 = vsel %vm87, %v117, 0.0
  %126 = vadd.xlane.f32.xlu0 %v125
  %v127 = vpop.xlane.xlu0 %126
  %v128 = vsel %vm87, %v118, 0.0
  %129 = vadd.xlane.f32.xlu0 %v128
  %v130 = vpop.xlane.xlu0 %129
  %v131 = vmul.f32 %v121, %v106
  %v132 = vmul.f32 %v124, %v106
  %v133 = vmul.f32 %v127, %v106
  %v134 = vmul.f32 %v130, %v106
  %v135 = vadd.f32 %v131, 1e-05
  %v136 = vadd.f32 %v132, 1e-05
  %v137 = vadd.f32 %v133, 1e-05
  %v138 = vadd.f32 %v134, 1e-05
  %v139 = vrsqrt.pop %v135
  %v140 = vmul.f32 %v139, %v135
  %v141 = vmul.f32 %v140, %v139
  %v142 = vmul.f32 0.5, %v141
  %v143 = vsub.f32 1.5, %v142
  %v144 = vmul.f32 %v139, %v143
  %vm145 = vweird.f32 %v135
  %vm146 = vweird.f32 %v139
  %vm147 = vmor %vm145, %vm146
  %v148 = vsel %vm147, %v139, %v144
  %v149 = vrsqrt.pop %v136
  %v150 = vmul.f32 %v149, %v136
  %v151 = vmul.f32 %v150, %v149
  %v152 = vmul.f32 0.5, %v151
  %v153 = vsub.f32 1.5, %v152
  %v154 = vmul.f32 %v149, %v153
  %vm155 = vweird.f32 %v136
  %vm156 = vweird.f32 %v149
  %vm157 = vmor %vm155, %vm156
  %v158 = vsel %vm157, %v149, %v154
  %v159 = vrsqrt.pop %v137
  %v160 = vmul.f32 %v159, %v137
  %v161 = vmul.f32 %v160, %v159
  %v162 = vmul.f32 0.5, %v161
  %v163 = vsub.f32 1.5, %v162
  %v164 = vmul.f32 %v159, %v163
  %vm165 = vweird.f32 %v137
  %vm166 = vweird.f32 %v159
  %vm167 = vmor %vm165, %vm166
  %v168 = vsel %vm167, %v159, %v164
  %v169 = vrsqrt.pop %v138
  %v170 = vmul.f32 %v169, %v138
  %v171 = vmul.f32 %v170, %v169
  %v172 = vmul.f32 0.5, %v171
  %v173 = vsub.f32 1.5, %v172
  %v174 = vmul.f32 %v169, %v173
  %vm175 = vweird.f32 %v138
  %vm176 = vweird.f32 %v169
  %vm177 = vmor %vm175, %vm176
  %v178 = vsel %vm177, %v169, %v174
  %v179 = vmul.f32 %v111, %v148
  %v180 = vmul.f32 %v112, %v158
  %v181 = vmul.f32 %v113, %v168
  %v182 = vmul.f32 %v114, %v178
  %v184 = vperm.slane %v85, 0
  %v186 = vmul.f32 %v179, %v184
  %v187 = vmul.f32 %v180, %v184
  %v188 = vmul.f32 %v181, %v184
  %v189 = vmul.f32 %v182, %v184
  %v191 = vperm.slane %v86, 0
  %v193 = vadd.f32 %v186, %v191
  %v194 = vadd.f32 %v187, %v191
  %v195 = vadd.f32 %v188, %v191
  %v196 = vadd.f32 %v189, %v191
  %v197 = vld [vmem:[%s3] sm:$0xf]
  %v198 = vpack.c.bf16 %v194, %v193
  %v199 = vpack.c.bf16 %v196, %v195
  %v200 = vld [vmem:[%s4] sm:$0x1]
  %v202 = vperm.slane %v200, 0
  %v205 = vsel %vm87, %v198, 0
  %v208 = vsel %vm87, %v199, 0
  %vm210 = vcmask 1043456
  %v212 = vsel %vm210, %v197, 0
  %214 = vmatpush.bf16.msra.mxu0 0
  %215 = vmatpush.bf16.msra.mxu0 0
  %216 = vmatpush.bf16.msra.mxu0 0
  %217 = vmatpush.bf16.msra.mxu0 0
  %218 = vmatpush.bf16.msra.mxu0 0
  %219 = vmatpush.bf16.msra.mxu0 0
  %220 = vmatpush.bf16.msra.mxu0 0
  %221 = vmatpush.bf16.msra.mxu0 %v212
  %222 = vmatmul.bf16.gmra.mxu0 %v205
  %v223 = vpop.f32.mrf.mxu0
  %v224 = vadd.f32 %v202, %v223
  %v225 = vpop.f32.mrf.mxu0
  %v226 = vadd.f32 %v202, %v225
  %227 = vmatmul.bf16.gmra.mxu0 %v208
  %v228 = vpop.f32.mrf.mxu0
  %v229 = vadd.f32 %v202, %v228
  %v230 = vpop.f32.mrf.mxu0
  %v231 = vadd.f32 %v202, %v230
  %232 = vdwg.mxu0
  %v233 = vld [vmem:[%s5] sm:$0x1]
  %v234 = vld [vmem:[%s6] sm:$0x1]
  %vm235 = vcmask 261120
  %v236 = vsel %vm235, %v224, 0.0
  %237 = vadd.xlane.f32.xlu0 %v236
  %v238 = vpop.xlane.xlu0 %237
  %v239 = vsel %vm235, %v226, 0.0
  %240 = vadd.xlane.f32.xlu0 %v239
  %v241 = vpop.xlane.xlu0 %240
  %v242 = vsel %vm235, %v229, 0.0
  %243 = vadd.xlane.f32.xlu0 %v242
  %v244 = vpop.xlane.xlu0 %243
  %v245 = vsel %vm235, %v231, 0.0
  %246 = vadd.xlane.f32.xlu0 %v245
  %v247 = vpop.xlane.xlu0 %246
  %v248 = vrcp.pop 32.0
  %v249 = vmul.f32 32.0, %v248
  %v250 = vsub.f32 1.0, %v249
  %v251 = vmul.f32 %v248, %v250
  %v252 = vadd.f32 %v248, %v251
  %vm253 = vweird.f32 %v248
  %v254 = vsel %vm253, %v248, %v252
  %v255 = vmul.f32 %v238, %v254
  %v256 = vmul.f32 %v241, %v254
  %v257 = vmul.f32 %v244, %v254
  %v258 = vmul.f32 %v247, %v254
  %v259 = vsub.f32 %v224, %v255
  %v260 = vsub.f32 %v226, %v256
  %v261 = vsub.f32 %v229, %v257
  %v262 = vsub.f32 %v231, %v258
  %v263 = vmul.f32 %v259, %v259
  %v264 = vmul.f32 %v260, %v260
  %v265 = vmul.f32 %v261, %v261
  %v266 = vmul.f32 %v262, %v262
  %v267 = vsel %vm235, %v263, 0.0
  %268 = vadd.xlane.f32.xlu0 %v267
  %v269 = vpop.xlane.xlu0 %268
  %v270 = vsel %vm235, %v264, 0.0
  %271 = vadd.xlane.f32.xlu0 %v270
  %v272 = vpop.xlane.xlu0 %271
  %v273 = vsel %vm235, %v265, 0.0
  %274 = vadd.xlane.f32.xlu0 %v273
  %v275 = vpop.xlane.xlu0 %274
  %v276 = vsel %vm235, %v266, 0.0
  %277 = vadd.xlane.f32.xlu0 %v276
  %v278 = vpop.xlane.xlu0 %277
  %v279 = vmul.f32 %v269, %v254
  %v280 = vmul.f32 %v272, %v254
  %v281 = vmul.f32 %v275, %v254
  %v282 = vmul.f32 %v278, %v254
  %v283 = vadd.f32 %v279, 1e-05
  %v284 = vadd.f32 %v280, 1e-05
  %v285 = vadd.f32 %v281, 1e-05
  %v286 = vadd.f32 %v282, 1e-05
  %v287 = vrsqrt.pop %v283
  %v288 = vmul.f32 %v287, %v283
  %v289 = vmul.f32 %v288, %v287
  %v290 = vmul.f32 0.5, %v289
  %v291 = vsub.f32 1.5, %v290
  %v292 = vmul.f32 %v287, %v291
  %vm293 = vweird.f32 %v283
  %vm294 = vweird.f32 %v287
  %vm295 = vmor %vm293, %vm294
  %v296 = vsel %vm295, %v287, %v292
  %v297 = vrsqrt.pop %v284
  %v298 = vmul.f32 %v297, %v284
  %v299 = vmul.f32 %v298, %v297
  %v300 = vmul.f32 0.5, %v299
  %v301 = vsub.f32 1.5, %v300
  %v302 = vmul.f32 %v297, %v301
  %vm303 = vweird.f32 %v284
  %vm304 = vweird.f32 %v297
  %vm305 = vmor %vm303, %vm304
  %v306 = vsel %vm305, %v297, %v302
  %v307 = vrsqrt.pop %v285
  %v308 = vmul.f32 %v307, %v285
  %v309 = vmul.f32 %v308, %v307
  %v310 = vmul.f32 0.5, %v309
  %v311 = vsub.f32 1.5, %v310
  %v312 = vmul.f32 %v307, %v311
  %vm313 = vweird.f32 %v285
  %vm314 = vweird.f32 %v307
  %vm315 = vmor %vm313, %vm314
  %v316 = vsel %vm315, %v307, %v312
  %v317 = vrsqrt.pop %v286
  %v318 = vmul.f32 %v317, %v286
  %v319 = vmul.f32 %v318, %v317
  %v320 = vmul.f32 0.5, %v319
  %v321 = vsub.f32 1.5, %v320
  %v322 = vmul.f32 %v317, %v321
  %vm323 = vweird.f32 %v286
  %vm324 = vweird.f32 %v317
  %vm325 = vmor %vm323, %vm324
  %v326 = vsel %vm325, %v317, %v322
  %v327 = vmul.f32 %v259, %v296
  %v328 = vmul.f32 %v260, %v306
  %v329 = vmul.f32 %v261, %v316
  %v330 = vmul.f32 %v262, %v326
  %v332 = vperm.slane %v233, 0
  %v334 = vmul.f32 %v327, %v332
  %v335 = vmul.f32 %v328, %v332
  %v336 = vmul.f32 %v329, %v332
  %v337 = vmul.f32 %v330, %v332
  %v339 = vperm.slane %v234, 0
  %v341 = vadd.f32 %v334, %v339
  %v342 = vadd.f32 %v335, %v339
  %v343 = vadd.f32 %v336, %v339
  %v344 = vadd.f32 %v337, %v339
  %v345 = vlaneseq
  %v346 = vshrl.u32 %v345, 7
  %v347 = vadd.s32 %v346, 8
  %v348 = vld [vmem:[%s7] sm:$0x1]
  %v350 = vperm.slane %v348, 0
  %vm352 = vcmp.eq.s32.totalorder %v346, 0
  %vm353 = vcmp.eq.s32.totalorder %v347, 0
  %vm354 = vcmp.lt.s32.totalorder %v346, 9
  %vm355 = vcmp.lt.s32.totalorder %v347, 9
  %v356 = vsel %vm354, 1, 0
  %v357 = vsel %vm355, 1, 0
  %vm358 = vcmp.eq.s32.totalorder %v356, 1
  %vm359 = vcmp.eq.s32.totalorder %v357, 1
  %v360 = vsel %vm358, %v341, 0.0
  %v361 = vsel %vm359, %v342, 0.0
  %v362 = vsel %vm358, %v343, 0.0
  %v363 = vsel %vm359, %v344, 0.0
  %v364 = vsel %vm352, 1, 0
  %v365 = vsel %vm353, 1, 0
  %vm366 = vcmp.eq.s32.totalorder %v364, 1
  %vm367 = vcmp.eq.s32.totalorder %v365, 1
  %v368 = vsel %vm366, %v350, %v360
  %v369 = vsel %vm367, %v350, %v361
  %v370 = vsel %vm366, %v350, %v362
  %v371 = vsel %vm367, %v350, %v363
  %v372 = vld [vmem:[%s8] sm:$0xff]
  %v373 = vld [vmem:[%s8 + $0x8] sm:$0xff]
  %v374 = vadd.f32 %v368, %v372
  %v375 = vadd.f32 %v369, %v373
  %v376 = vadd.f32 %v370, %v372
  %v377 = vadd.f32 %v371, %v373
  %v378 = vlaneseq
  %v379 = vand.u32 %v378, 127
  %vm380 = vcmp.lt.s32.totalorder %v379, 9
  %v381 = vsel %vm380, 0.0, -1e+30
  %v382 = vld [vmem:[%s9] sm:$0x1]
  %v383 = vld [vmem:[%s10] sm:$0x1]
  %v384 = vsel %vm235, %v374, 0.0
  %385 = vadd.xlane.f32.xlu0 %v384
  %v386 = vpop.xlane.xlu0 %385
  %v387 = vsel %vm235, %v375, 0.0
  %388 = vadd.xlane.f32.xlu0 %v387
  %v389 = vpop.xlane.xlu0 %388
  %v390 = vsel %vm235, %v376, 0.0
  %391 = vadd.xlane.f32.xlu0 %v390
  %v392 = vpop.xlane.xlu0 %391
  %v393 = vsel %vm235, %v377, 0.0
  %394 = vadd.xlane.f32.xlu0 %v393
  %v395 = vpop.xlane.xlu0 %394
  %v396 = vmul.f32 %v386, %v254
  %v397 = vmul.f32 %v389, %v254
  %v398 = vmul.f32 %v392, %v254
  %v399 = vmul.f32 %v395, %v254
  %v400 = vsub.f32 %v374, %v396
  %v401 = vsub.f32 %v375, %v397
  %v402 = vsub.f32 %v376, %v398
  %v403 = vsub.f32 %v377, %v399
  %v404 = vmul.f32 %v400, %v400
  %v405 = vmul.f32 %v401, %v401
  %v406 = vmul.f32 %v402, %v402
  %v407 = vmul.f32 %v403, %v403
  %v408 = vsel %vm235, %v404, 0.0
  %409 = vadd.xlane.f32.xlu0 %v408
  %v410 = vpop.xlane.xlu0 %409
  %v411 = vsel %vm235, %v405, 0.0
  %412 = vadd.xlane.f32.xlu0 %v411
  %v413 = vpop.xlane.xlu0 %412
  %v414 = vsel %vm235, %v406, 0.0
  %415 = vadd.xlane.f32.xlu0 %v414
  %v416 = vpop.xlane.xlu0 %415
  %v417 = vsel %vm235, %v407, 0.0
  %418 = vadd.xlane.f32.xlu0 %v417
  %v419 = vpop.xlane.xlu0 %418
  %v420 = vmul.f32 %v410, %v254
  %v421 = vmul.f32 %v413, %v254
  %v422 = vmul.f32 %v416, %v254
  %v423 = vmul.f32 %v419, %v254
  %v424 = vadd.f32 %v420, 1e-05
  %v425 = vadd.f32 %v421, 1e-05
  %v426 = vadd.f32 %v422, 1e-05
  %v427 = vadd.f32 %v423, 1e-05
  %v428 = vrsqrt.pop %v424
  %v429 = vmul.f32 %v428, %v424
  %v430 = vmul.f32 %v429, %v428
  %v431 = vmul.f32 0.5, %v430
  %v432 = vsub.f32 1.5, %v431
  %v433 = vmul.f32 %v428, %v432
  %vm434 = vweird.f32 %v424
  %vm435 = vweird.f32 %v428
  %vm436 = vmor %vm434, %vm435
  %v437 = vsel %vm436, %v428, %v433
  %v438 = vrsqrt.pop %v425
  %v439 = vmul.f32 %v438, %v425
  %v440 = vmul.f32 %v439, %v438
  %v441 = vmul.f32 0.5, %v440
  %v442 = vsub.f32 1.5, %v441
  %v443 = vmul.f32 %v438, %v442
  %vm444 = vweird.f32 %v425
  %vm445 = vweird.f32 %v438
  %vm446 = vmor %vm444, %vm445
  %v447 = vsel %vm446, %v438, %v443
  %v448 = vrsqrt.pop %v426
  %v449 = vmul.f32 %v448, %v426
  %v450 = vmul.f32 %v449, %v448
  %v451 = vmul.f32 0.5, %v450
  %v452 = vsub.f32 1.5, %v451
  %v453 = vmul.f32 %v448, %v452
  %vm454 = vweird.f32 %v426
  %vm455 = vweird.f32 %v448
  %vm456 = vmor %vm454, %vm455
  %v457 = vsel %vm456, %v448, %v453
  %v458 = vrsqrt.pop %v427
  %v459 = vmul.f32 %v458, %v427
  %v460 = vmul.f32 %v459, %v458
  %v461 = vmul.f32 0.5, %v460
  %v462 = vsub.f32 1.5, %v461
  %v463 = vmul.f32 %v458, %v462
  %vm464 = vweird.f32 %v427
  %vm465 = vweird.f32 %v458
  %vm466 = vmor %vm464, %vm465
  %v467 = vsel %vm466, %v458, %v463
  %v468 = vmul.f32 %v400, %v437
  %v469 = vmul.f32 %v401, %v447
  %v470 = vmul.f32 %v402, %v457
  %v471 = vmul.f32 %v403, %v467
  %v473 = vperm.slane %v382, 0
  %v475 = vmul.f32 %v468, %v473
  %v476 = vmul.f32 %v469, %v473
  %v477 = vmul.f32 %v470, %v473
  %v478 = vmul.f32 %v471, %v473
  %v480 = vperm.slane %v383, 0
  %v482 = vadd.f32 %v475, %v480
  %v483 = vadd.f32 %v476, %v480
  %v484 = vadd.f32 %v477, %v480
  %v485 = vadd.f32 %v478, %v480
  %v486 = vpack.c.bf16 %v482, %v482
  %v487 = vpack.c.bf16 %v483, %v483
  %v488 = vpack.c.bf16 %v484, %v484
  %v489 = vpack.c.bf16 %v485, %v485
  %v490 = vld [vmem:[%s11] sm:$0xf]
  %v491 = vld [vmem:[%s11 + $0x4] sm:$0xf]
  %v492 = vld [vmem:[%s11 + $0x8] sm:$0xf]
  %v493 = vld [vmem:[%s11 + $0xc] sm:$0xf]
  %v494 = vld [vmem:[%s11 + $0x10] sm:$0xf]
  %v495 = vld [vmem:[%s11 + $0x14] sm:$0xf]
  %v496 = vld [vmem:[%s11 + $0x18] sm:$0xf]
  %v497 = vld [vmem:[%s11 + $0x1c] sm:$0xf]
  %v498 = vld [vmem:[%s11 + $0x20] sm:$0xf]
  %v499 = vld [vmem:[%s11 + $0x24] sm:$0xf]
  %v500 = vld [vmem:[%s11 + $0x28] sm:$0xf]
  %v501 = vld [vmem:[%s11 + $0x2c] sm:$0xf]
  %v502 = vld [vmem:[%s11 + $0x30] sm:$0xf]
  %v503 = vld [vmem:[%s11 + $0x34] sm:$0xf]
  %v504 = vld [vmem:[%s11 + $0x38] sm:$0xf]
  %v505 = vld [vmem:[%s11 + $0x3c] sm:$0xf]
  %v506 = vld [vmem:[%s11 + $0x40] sm:$0xf]
  %v507 = vld [vmem:[%s11 + $0x44] sm:$0xf]
  %v508 = vld [vmem:[%s11 + $0x48] sm:$0xf]
  %v509 = vld [vmem:[%s11 + $0x4c] sm:$0xf]
  %v510 = vld [vmem:[%s11 + $0x50] sm:$0xf]
  %v511 = vld [vmem:[%s11 + $0x54] sm:$0xf]
  %v512 = vld [vmem:[%s11 + $0x58] sm:$0xf]
  %v513 = vld [vmem:[%s11 + $0x5c] sm:$0xf]
  %v518 = vunpack.c.l.b16 %v486
  %v519 = vunpack.c.l.b16 %v487
  %v520 = vunpack.c.l.b16 %v488
  %v521 = vunpack.c.l.b16 %v489
  %v522 = vpack.c.b16 %v519, %v518
  %v523 = vpack.c.b16 %v521, %v520
  %v528 = vunpack.c.l.b16 %v490
  %v529 = vunpack.c.l.b16 %v491
  %v530 = vunpack.c.l.b16 %v492
  %v531 = vunpack.c.l.b16 %v493
  %v532 = vpack.c.b16 %v529, %v528
  %v533 = vpack.c.b16 %v531, %v530
  %v537 = vsel %vm235, %v522, 0
  %v540 = vsel %vm235, %v523, 0
  %542 = vmatpush.bf16.msra.mxu0 0
  %543 = vmatpush.bf16.msra.mxu0 0
  %544 = vmatpush.bf16.msra.mxu0 0
  %545 = vmatpush.bf16.msra.mxu0 0
  %546 = vmatpush.bf16.msra.mxu0 0
  %547 = vmatpush.bf16.msra.mxu0 0
  %548 = vmatpush.bf16.msra.mxu0 %v533
  %549 = vmatpush.bf16.msra.mxu0 %v532
  %550 = vmatmul.bf16.gmra.mxu0 %v537
  %v551 = vpop.f32.mrf.mxu0
  %v552 = vadd.f32 0.0, %v551
  %v553 = vpop.f32.mrf.mxu0
  %v554 = vadd.f32 0.0, %v553
  %555 = vmatmul.bf16.gmra.mxu0 %v540
  %v556 = vpop.f32.mrf.mxu0
  %v557 = vadd.f32 0.0, %v556
  %v558 = vpop.f32.mrf.mxu0
  %v559 = vadd.f32 0.0, %v558
  %560 = vdwg.mxu0
  %v565 = vunpack.c.l.b16 %v494
  %v566 = vunpack.c.l.b16 %v495
  %v567 = vunpack.c.l.b16 %v496
  %v568 = vunpack.c.l.b16 %v497
  %v569 = vpack.c.b16 %v566, %v565
  %v570 = vpack.c.b16 %v568, %v567
  %573 = vmatpush.bf16.msra.mxu0 0
  %574 = vmatpush.bf16.msra.mxu0 0
  %575 = vmatpush.bf16.msra.mxu0 0
  %576 = vmatpush.bf16.msra.mxu0 0
  %577 = vmatpush.bf16.msra.mxu0 0
  %578 = vmatpush.bf16.msra.mxu0 0
  %579 = vmatpush.bf16.msra.mxu0 %v570
  %580 = vmatpush.bf16.msra.mxu0 %v569
  %581 = vmatmul.bf16.gmra.mxu0 %v537
  %v582 = vpop.f32.mrf.mxu0
  %v583 = vadd.f32 0.0, %v582
  %v584 = vpop.f32.mrf.mxu0
  %v585 = vadd.f32 0.0, %v584
  %586 = vmatmul.bf16.gmra.mxu0 %v540
  %v587 = vpop.f32.mrf.mxu0
  %v588 = vadd.f32 0.0, %v587
  %v589 = vpop.f32.mrf.mxu0
  %v590 = vadd.f32 0.0, %v589
  %591 = vdwg.mxu0
  %v596 = vunpack.c.l.b16 %v498
  %v597 = vunpack.c.l.b16 %v499
  %v598 = vunpack.c.l.b16 %v500
  %v599 = vunpack.c.l.b16 %v501
  %v600 = vpack.c.b16 %v597, %v596
  %v601 = vpack.c.b16 %v599, %v598
  %604 = vmatpush.bf16.msra.mxu0 0
  %605 = vmatpush.bf16.msra.mxu0 0
  %606 = vmatpush.bf16.msra.mxu0 0
  %607 = vmatpush.bf16.msra.mxu0 0
  %608 = vmatpush.bf16.msra.mxu0 0
  %609 = vmatpush.bf16.msra.mxu0 0
  %610 = vmatpush.bf16.msra.mxu0 %v601
  %611 = vmatpush.bf16.msra.mxu0 %v600
  %612 = vmatmul.bf16.gmra.mxu0 %v537
  %v613 = vpop.f32.mrf.mxu0
  %v614 = vadd.f32 0.0, %v613
  %v615 = vpop.f32.mrf.mxu0
  %v616 = vadd.f32 0.0, %v615
  %617 = vmatmul.bf16.gmra.mxu0 %v540
  %v618 = vpop.f32.mrf.mxu0
  %v619 = vadd.f32 0.0, %v618
  %v620 = vpop.f32.mrf.mxu0
  %v621 = vadd.f32 0.0, %v620
  %622 = vdwg.mxu0
  %v627 = vunpack.c.l.b16 %v502
  %v628 = vunpack.c.l.b16 %v503
  %v629 = vunpack.c.l.b16 %v504
  %v630 = vunpack.c.l.b16 %v505
  %v631 = vpack.c.b16 %v628, %v627
  %v632 = vpack.c.b16 %v630, %v629
  %635 = vmatpush.bf16.msra.mxu0 0
  %636 = vmatpush.bf16.msra.mxu0 0
  %637 = vmatpush.bf16.msra.mxu0 0
  %638 = vmatpush.bf16.msra.mxu0 0
  %639 = vmatpush.bf16.msra.mxu0 0
  %640 = vmatpush.bf16.msra.mxu0 0
  %641 = vmatpush.bf16.msra.mxu0 %v632
  %642 = vmatpush.bf16.msra.mxu0 %v631
  %643 = vmatmul.bf16.gmra.mxu0 %v537
  %v644 = vpop.f32.mrf.mxu0
  %v645 = vadd.f32 0.0, %v644
  %v646 = vpop.f32.mrf.mxu0
  %v647 = vadd.f32 0.0, %v646
  %648 = vmatmul.bf16.gmra.mxu0 %v540
  %v649 = vpop.f32.mrf.mxu0
  %v650 = vadd.f32 0.0, %v649
  %v651 = vpop.f32.mrf.mxu0
  %v652 = vadd.f32 0.0, %v651
  %653 = vdwg.mxu0
  %v658 = vunpack.c.l.b16 %v506
  %v659 = vunpack.c.l.b16 %v507
  %v660 = vunpack.c.l.b16 %v508
  %v661 = vunpack.c.l.b16 %v509
  %v662 = vpack.c.b16 %v659, %v658
  %v663 = vpack.c.b16 %v661, %v660
  %666 = vmatpush.bf16.msra.mxu0 0
  %667 = vmatpush.bf16.msra.mxu0 0
  %668 = vmatpush.bf16.msra.mxu0 0
  %669 = vmatpush.bf16.msra.mxu0 0
  %670 = vmatpush.bf16.msra.mxu0 0
  %671 = vmatpush.bf16.msra.mxu0 0
  %672 = vmatpush.bf16.msra.mxu0 %v663
  %673 = vmatpush.bf16.msra.mxu0 %v662
  %674 = vmatmul.bf16.gmra.mxu0 %v537
  %v675 = vpop.f32.mrf.mxu0
  %v676 = vadd.f32 0.0, %v675
  %v677 = vpop.f32.mrf.mxu0
  %v678 = vadd.f32 0.0, %v677
  %679 = vmatmul.bf16.gmra.mxu0 %v540
  %v680 = vpop.f32.mrf.mxu0
  %v681 = vadd.f32 0.0, %v680
  %v682 = vpop.f32.mrf.mxu0
  %v683 = vadd.f32 0.0, %v682
  %684 = vdwg.mxu0
  %v689 = vunpack.c.l.b16 %v510
  %v690 = vunpack.c.l.b16 %v511
  %v691 = vunpack.c.l.b16 %v512
  %v692 = vunpack.c.l.b16 %v513
  %v693 = vpack.c.b16 %v690, %v689
  %v694 = vpack.c.b16 %v692, %v691
  %697 = vmatpush.bf16.msra.mxu0 0
  %698 = vmatpush.bf16.msra.mxu0 0
  %699 = vmatpush.bf16.msra.mxu0 0
  %700 = vmatpush.bf16.msra.mxu0 0
  %701 = vmatpush.bf16.msra.mxu0 0
  %702 = vmatpush.bf16.msra.mxu0 0
  %703 = vmatpush.bf16.msra.mxu0 %v694
  %704 = vmatpush.bf16.msra.mxu0 %v693
  %705 = vmatmul.bf16.gmra.mxu0 %v537
  %v706 = vpop.f32.mrf.mxu0
  %v707 = vadd.f32 0.0, %v706
  %v708 = vpop.f32.mrf.mxu0
  %v709 = vadd.f32 0.0, %v708
  %710 = vmatmul.bf16.gmra.mxu0 %v540
  %v711 = vpop.f32.mrf.mxu0
  %v712 = vadd.f32 0.0, %v711
  %v713 = vpop.f32.mrf.mxu0
  %v714 = vadd.f32 0.0, %v713
  %715 = vdwg.mxu0
  %v716 = vpack.c.bf16 %v552, %v552
  %v717 = vpack.c.bf16 %v554, %v554
  %v718 = vpack.c.bf16 %v557, %v557
  %v719 = vpack.c.bf16 %v559, %v559
  %v720 = vpack.c.bf16 %v583, %v583
  %v721 = vpack.c.bf16 %v585, %v585
  %v722 = vpack.c.bf16 %v588, %v588
  %v723 = vpack.c.bf16 %v590, %v590
  %v724 = vpack.c.bf16 %v614, %v614
  %v725 = vpack.c.bf16 %v616, %v616
  %v726 = vpack.c.bf16 %v619, %v619
  %v727 = vpack.c.bf16 %v621, %v621
  %v728 = vpack.c.bf16 %v645, %v645
  %v729 = vpack.c.bf16 %v647, %v647
  %v730 = vpack.c.bf16 %v650, %v650
  %v731 = vpack.c.bf16 %v652, %v652
  %v734 = vunpack.c.l.b16 %v716
  %v735 = vunpack.c.l.b16 %v717
  %v736 = vpack.c.b16 %v735, %v734
  %v739 = vunpack.c.l.b16 %v724
  %v740 = vunpack.c.l.b16 %v725
  %v741 = vpack.c.b16 %v740, %v739
  %vm742 = vcmask 130048
  %v744 = vsel %vm742, %v736, 0
  %v747 = vsel %vm742, %v741, 0
  %749 = vmatpush.bf16.xpose.msra.mxu0 0
  %750 = vmatpush.bf16.xpose.msra.mxu0 0
  %751 = vmatpush.bf16.xpose.msra.mxu0 0
  %752 = vmatpush.bf16.xpose.msra.mxu0 0
  %753 = vmatpush.bf16.xpose.msra.mxu0 0
  %754 = vmatpush.bf16.xpose.msra.mxu0 0
  %755 = vmatpush.bf16.xpose.msra.mxu0 0
  %756 = vmatpush.bf16.xpose.msra.mxu0 %v747
  %757 = vmatmul.bf16.gmra.mxu0 %v744
  %v758 = vpop.f32.mrf.mxu0
  %v759 = vadd.f32 0.0, %v758
  %v760 = vpop.f32.mrf.mxu0
  %v761 = vadd.f32 0.0, %v760
  %762 = vdwg.mxu0
  %v765 = vunpack.c.l.b16 %v718
  %v766 = vunpack.c.l.b16 %v719
  %v767 = vpack.c.b16 %v766, %v765
  %v770 = vunpack.c.l.b16 %v726
  %v771 = vunpack.c.l.b16 %v727
  %v772 = vpack.c.b16 %v771, %v770
  %v774 = vsel %vm742, %v767, 0
  %v777 = vsel %vm742, %v772, 0
  %779 = vmatpush.bf16.xpose.msra.mxu0 0
  %780 = vmatpush.bf16.xpose.msra.mxu0 0
  %781 = vmatpush.bf16.xpose.msra.mxu0 0
  %782 = vmatpush.bf16.xpose.msra.mxu0 0
  %783 = vmatpush.bf16.xpose.msra.mxu0 0
  %784 = vmatpush.bf16.xpose.msra.mxu0 0
  %785 = vmatpush.bf16.xpose.msra.mxu0 0
  %786 = vmatpush.bf16.xpose.msra.mxu0 %v777
  %787 = vmatmul.bf16.gmra.mxu0 %v774
  %v788 = vpop.f32.mrf.mxu0
  %v789 = vadd.f32 0.0, %v788
  %v790 = vpop.f32.mrf.mxu0
  %v791 = vadd.f32 0.0, %v790
  %792 = vdwg.mxu0
  %v795 = vunpack.c.l.b16 %v720
  %v796 = vunpack.c.l.b16 %v721
  %v797 = vpack.c.b16 %v796, %v795
  %v800 = vunpack.c.l.b16 %v728
  %v801 = vunpack.c.l.b16 %v729
  %v802 = vpack.c.b16 %v801, %v800
  %v804 = vsel %vm742, %v797, 0
  %v807 = vsel %vm742, %v802, 0
  %809 = vmatpush.bf16.xpose.msra.mxu0 0
  %810 = vmatpush.bf16.xpose.msra.mxu0 0
  %811 = vmatpush.bf16.xpose.msra.mxu0 0
  %812 = vmatpush.bf16.xpose.msra.mxu0 0
  %813 = vmatpush.bf16.xpose.msra.mxu0 0
  %814 = vmatpush.bf16.xpose.msra.mxu0 0
  %815 = vmatpush.bf16.xpose.msra.mxu0 0
  %816 = vmatpush.bf16.xpose.msra.mxu0 %v807
  %817 = vmatmul.bf16.gmra.mxu0 %v804
  %v818 = vpop.f32.mrf.mxu0
  %v819 = vadd.f32 0.0, %v818
  %v820 = vpop.f32.mrf.mxu0
  %v821 = vadd.f32 0.0, %v820
  %822 = vdwg.mxu0
  %v825 = vunpack.c.l.b16 %v722
  %v826 = vunpack.c.l.b16 %v723
  %v827 = vpack.c.b16 %v826, %v825
  %v830 = vunpack.c.l.b16 %v730
  %v831 = vunpack.c.l.b16 %v731
  %v832 = vpack.c.b16 %v831, %v830
  %v834 = vsel %vm742, %v827, 0
  %v837 = vsel %vm742, %v832, 0
  %839 = vmatpush.bf16.xpose.msra.mxu0 0
  %840 = vmatpush.bf16.xpose.msra.mxu0 0
  %841 = vmatpush.bf16.xpose.msra.mxu0 0
  %842 = vmatpush.bf16.xpose.msra.mxu0 0
  %843 = vmatpush.bf16.xpose.msra.mxu0 0
  %844 = vmatpush.bf16.xpose.msra.mxu0 0
  %845 = vmatpush.bf16.xpose.msra.mxu0 0
  %846 = vmatpush.bf16.xpose.msra.mxu0 %v837
  %847 = vmatmul.bf16.gmra.mxu0 %v834
  %v848 = vpop.f32.mrf.mxu0
  %v849 = vadd.f32 0.0, %v848
  %v850 = vpop.f32.mrf.mxu0
  %v851 = vadd.f32 0.0, %v850
  %852 = vdwg.mxu0
  %v853 = vmul.f32 %v759, 0.25
  %v854 = vmul.f32 %v761, 0.25
  %v855 = vmul.f32 %v789, 0.25
  %v856 = vmul.f32 %v791, 0.25
  %v857 = vmul.f32 %v819, 0.25
  %v858 = vmul.f32 %v821, 0.25
  %v859 = vmul.f32 %v849, 0.25
  %v860 = vmul.f32 %v851, 0.25
  %v861 = vadd.f32 %v853, %v381
  %v862 = vadd.f32 %v854, %v381
  %v863 = vadd.f32 %v855, %v381
  %v864 = vadd.f32 %v856, %v381
  %v865 = vadd.f32 %v857, %v381
  %v866 = vadd.f32 %v858, %v381
  %v867 = vadd.f32 %v859, %v381
  %v868 = vadd.f32 %v860, %v381
  %v869 = vsel %vm742, %v861, -inf
  %870 = vmax.xlane.f32.xlu0 %v869
  %v871 = vpop.xlane.xlu0 %870
  %v872 = vsel %vm742, %v862, -inf
  %873 = vmax.xlane.f32.xlu0 %v872
  %v874 = vpop.xlane.xlu0 %873
  %v875 = vsel %vm742, %v863, -inf
  %876 = vmax.xlane.f32.xlu0 %v875
  %v877 = vpop.xlane.xlu0 %876
  %v878 = vsel %vm742, %v864, -inf
  %879 = vmax.xlane.f32.xlu0 %v878
  %v880 = vpop.xlane.xlu0 %879
  %v881 = vsel %vm742, %v865, -inf
  %882 = vmax.xlane.f32.xlu0 %v881
  %v883 = vpop.xlane.xlu0 %882
  %v884 = vsel %vm742, %v866, -inf
  %885 = vmax.xlane.f32.xlu0 %v884
  %v886 = vpop.xlane.xlu0 %885
  %v887 = vsel %vm742, %v867, -inf
  %888 = vmax.xlane.f32.xlu0 %v887
  %v889 = vpop.xlane.xlu0 %888
  %v890 = vsel %vm742, %v868, -inf
  %891 = vmax.xlane.f32.xlu0 %v890
  %v892 = vpop.xlane.xlu0 %891
  %v893 = vsub.f32 %v861, %v871
  %v894 = vsub.f32 %v862, %v874
  %v895 = vsub.f32 %v863, %v877
  %v896 = vsub.f32 %v864, %v880
  %v897 = vsub.f32 %v865, %v883
  %v898 = vsub.f32 %v866, %v886
  %v899 = vsub.f32 %v867, %v889
  %v900 = vsub.f32 %v868, %v892
  %v901 = vmul.f32 %v893, 1.442695
  %v902 = vpow.pop %v901
  %v903 = vmul.f32 %v894, 1.442695
  %v904 = vpow.pop %v903
  %v905 = vmul.f32 %v895, 1.442695
  %v906 = vpow.pop %v905
  %v907 = vmul.f32 %v896, 1.442695
  %v908 = vpow.pop %v907
  %v909 = vmul.f32 %v897, 1.442695
  %v910 = vpow.pop %v909
  %v911 = vmul.f32 %v898, 1.442695
  %v912 = vpow.pop %v911
  %v913 = vmul.f32 %v899, 1.442695
  %v914 = vpow.pop %v913
  %v915 = vmul.f32 %v900, 1.442695
  %v916 = vpow.pop %v915
  %v917 = vsel %vm742, %v902, 0.0
  %918 = vadd.xlane.f32.xlu0 %v917
  %v919 = vpop.xlane.xlu0 %918
  %v920 = vsel %vm742, %v904, 0.0
  %921 = vadd.xlane.f32.xlu0 %v920
  %v922 = vpop.xlane.xlu0 %921
  %v923 = vsel %vm742, %v906, 0.0
  %924 = vadd.xlane.f32.xlu0 %v923
  %v925 = vpop.xlane.xlu0 %924
  %v926 = vsel %vm742, %v908, 0.0
  %927 = vadd.xlane.f32.xlu0 %v926
  %v928 = vpop.xlane.xlu0 %927
  %v929 = vsel %vm742, %v910, 0.0
  %930 = vadd.xlane.f32.xlu0 %v929
  %v931 = vpop.xlane.xlu0 %930
  %v932 = vsel %vm742, %v912, 0.0
  %933 = vadd.xlane.f32.xlu0 %v932
  %v934 = vpop.xlane.xlu0 %933
  %v935 = vsel %vm742, %v914, 0.0
  %936 = vadd.xlane.f32.xlu0 %v935
  %v937 = vpop.xlane.xlu0 %936
  %v938 = vsel %vm742, %v916, 0.0
  %939 = vadd.xlane.f32.xlu0 %v938
  %v940 = vpop.xlane.xlu0 %939
  %v941 = vrcp.pop %v919
  %v942 = vrcp.pop %v922
  %v943 = vrcp.pop %v925
  %v944 = vrcp.pop %v928
  %v945 = vrcp.pop %v931
  %v946 = vrcp.pop %v934
  %v947 = vrcp.pop %v937
  %v948 = vrcp.pop %v940
  %v949 = vmul.f32 %v902, %v941
  %v950 = vmul.f32 %v904, %v942
  %v951 = vmul.f32 %v906, %v943
  %v952 = vmul.f32 %v908, %v944
  %v953 = vmul.f32 %v910, %v945
  %v954 = vmul.f32 %v912, %v946
  %v955 = vmul.f32 %v914, %v947
  %v956 = vmul.f32 %v916, %v948
  %v957 = vpack.c.bf16 %v949, %v949
  %v958 = vpack.c.bf16 %v950, %v950
  %v959 = vpack.c.bf16 %v951, %v951
  %v960 = vpack.c.bf16 %v952, %v952
  %v961 = vpack.c.bf16 %v953, %v953
  %v962 = vpack.c.bf16 %v954, %v954
  %v963 = vpack.c.bf16 %v955, %v955
  %v964 = vpack.c.bf16 %v956, %v956
  %v965 = vpack.c.bf16 %v676, %v676
  %v966 = vpack.c.bf16 %v678, %v678
  %v967 = vpack.c.bf16 %v681, %v681
  %v968 = vpack.c.bf16 %v683, %v683
  %v969 = vpack.c.bf16 %v707, %v707
  %v970 = vpack.c.bf16 %v709, %v709
  %v971 = vpack.c.bf16 %v712, %v712
  %v972 = vpack.c.bf16 %v714, %v714
  %v975 = vunpack.c.l.b16 %v957
  %v976 = vunpack.c.l.b16 %v958
  %v977 = vpack.c.b16 %v976, %v975
  %v980 = vunpack.c.l.b16 %v965
  %v981 = vunpack.c.l.b16 %v966
  %v982 = vpack.c.b16 %v981, %v980
  %v985 = vsel %vm742, %v977, 0
  %987 = vmatpush.bf16.msra.mxu0 0
  %988 = vmatpush.bf16.msra.mxu0 0
  %989 = vmatpush.bf16.msra.mxu0 0
  %990 = vmatpush.bf16.msra.mxu0 0
  %991 = vmatpush.bf16.msra.mxu0 0
  %992 = vmatpush.bf16.msra.mxu0 0
  %993 = vmatpush.bf16.msra.mxu0 0
  %994 = vmatpush.bf16.msra.mxu0 %v982
  %995 = vmatmul.bf16.gmra.mxu0 %v985
  %v996 = vpop.f32.mrf.mxu0
  %v997 = vadd.f32 0.0, %v996
  %v998 = vpop.f32.mrf.mxu0
  %v999 = vadd.f32 0.0, %v998
  %1000 = vdwg.mxu0
  %v1003 = vunpack.c.l.b16 %v959
  %v1004 = vunpack.c.l.b16 %v960
  %v1005 = vpack.c.b16 %v1004, %v1003
  %v1008 = vunpack.c.l.b16 %v967
  %v1009 = vunpack.c.l.b16 %v968
  %v1010 = vpack.c.b16 %v1009, %v1008
  %v1013 = vsel %vm742, %v1005, 0
  %1015 = vmatpush.bf16.msra.mxu0 0
  %1016 = vmatpush.bf16.msra.mxu0 0
  %1017 = vmatpush.bf16.msra.mxu0 0
  %1018 = vmatpush.bf16.msra.mxu0 0
  %1019 = vmatpush.bf16.msra.mxu0 0
  %1020 = vmatpush.bf16.msra.mxu0 0
  %1021 = vmatpush.bf16.msra.mxu0 0
  %1022 = vmatpush.bf16.msra.mxu0 %v1010
  %1023 = vmatmul.bf16.gmra.mxu0 %v1013
  %v1024 = vpop.f32.mrf.mxu0
  %v1025 = vadd.f32 0.0, %v1024
  %v1026 = vpop.f32.mrf.mxu0
  %v1027 = vadd.f32 0.0, %v1026
  %1028 = vdwg.mxu0
  %v1031 = vunpack.c.l.b16 %v961
  %v1032 = vunpack.c.l.b16 %v962
  %v1033 = vpack.c.b16 %v1032, %v1031
  %v1036 = vunpack.c.l.b16 %v969
  %v1037 = vunpack.c.l.b16 %v970
  %v1038 = vpack.c.b16 %v1037, %v1036
  %v1041 = vsel %vm742, %v1033, 0
  %1043 = vmatpush.bf16.msra.mxu0 0
  %1044 = vmatpush.bf16.msra.mxu0 0
  %1045 = vmatpush.bf16.msra.mxu0 0
  %1046 = vmatpush.bf16.msra.mxu0 0
  %1047 = vmatpush.bf16.msra.mxu0 0
  %1048 = vmatpush.bf16.msra.mxu0 0
  %1049 = vmatpush.bf16.msra.mxu0 0
  %1050 = vmatpush.bf16.msra.mxu0 %v1038
  %1051 = vmatmul.bf16.gmra.mxu0 %v1041
  %v1052 = vpop.f32.mrf.mxu0
  %v1053 = vadd.f32 0.0, %v1052
  %v1054 = vpop.f32.mrf.mxu0
  %v1055 = vadd.f32 0.0, %v1054
  %1056 = vdwg.mxu0
  %v1059 = vunpack.c.l.b16 %v963
  %v1060 = vunpack.c.l.b16 %v964
  %v1061 = vpack.c.b16 %v1060, %v1059
  %v1064 = vunpack.c.l.b16 %v971
  %v1065 = vunpack.c.l.b16 %v972
  %v1066 = vpack.c.b16 %v1065, %v1064
  %v1069 = vsel %vm742, %v1061, 0
  %1071 = vmatpush.bf16.msra.mxu0 0
  %1072 = vmatpush.bf16.msra.mxu0 0
  %1073 = vmatpush.bf16.msra.mxu0 0
  %1074 = vmatpush.bf16.msra.mxu0 0
  %1075 = vmatpush.bf16.msra.mxu0 0
  %1076 = vmatpush.bf16.msra.mxu0 0
  %1077 = vmatpush.bf16.msra.mxu0 0
  %1078 = vmatpush.bf16.msra.mxu0 %v1066
  %1079 = vmatmul.bf16.gmra.mxu0 %v1069
  %v1080 = vpop.f32.mrf.mxu0
  %v1081 = vadd.f32 0.0, %v1080
  %v1082 = vpop.f32.mrf.mxu0
  %v1083 = vadd.f32 0.0, %v1082
  %1084 = vdwg.mxu0
  %v1085 = vld [vmem:[%s12] sm:$0xf]
  %v1086 = vld [vmem:[%s12 + $0x4] sm:$0xf]
  %v1087 = vld [vmem:[%s12 + $0x8] sm:$0xf]
  %v1088 = vld [vmem:[%s12 + $0xc] sm:$0xf]
  %v1089 = vpack.c.bf16 %v997, %v997
  %v1090 = vpack.c.bf16 %v999, %v999
  %v1091 = vpack.c.bf16 %v1025, %v1025
  %v1092 = vpack.c.bf16 %v1027, %v1027
  %v1093 = vpack.c.bf16 %v1053, %v1053
  %v1094 = vpack.c.bf16 %v1055, %v1055
  %v1095 = vpack.c.bf16 %v1081, %v1081
  %v1096 = vpack.c.bf16 %v1083, %v1083
  %v1101 = vunpack.c.l.b16 %v1089
  %v1102 = vunpack.c.l.b16 %v1090
  %v1103 = vunpack.c.l.b16 %v1091
  %v1104 = vunpack.c.l.b16 %v1092
  %v1105 = vpack.c.b16 %v1102, %v1101
  %v1106 = vpack.c.b16 %v1104, %v1103
  %v1109 = vunpack.c.l.b16 %v1085
  %v1110 = vunpack.c.l.b16 %v1086
  %v1111 = vpack.c.b16 %v1110, %v1109
  %v1114 = vsel %vm742, %v1105, 0
  %v1117 = vsel %vm742, %v1106, 0
  %1119 = vmatpush.bf16.msra.mxu0 0
  %1120 = vmatpush.bf16.msra.mxu0 0
  %1121 = vmatpush.bf16.msra.mxu0 0
  %1122 = vmatpush.bf16.msra.mxu0 0
  %1123 = vmatpush.bf16.msra.mxu0 0
  %1124 = vmatpush.bf16.msra.mxu0 0
  %1125 = vmatpush.bf16.msra.mxu0 0
  %1126 = vmatpush.bf16.msra.mxu0 %v1111
  %1127 = vmatmul.bf16.gmra.mxu0 %v1114
  %v1128 = vpop.f32.mrf.mxu0
  %v1129 = vadd.f32 0.0, %v1128
  %v1130 = vpop.f32.mrf.mxu0
  %v1131 = vadd.f32 0.0, %v1130
  %1132 = vmatmul.bf16.gmra.mxu0 %v1117
  %v1133 = vpop.f32.mrf.mxu0
  %v1134 = vadd.f32 0.0, %v1133
  %v1135 = vpop.f32.mrf.mxu0
  %v1136 = vadd.f32 0.0, %v1135
  %1137 = vdwg.mxu0
  %v1142 = vunpack.c.l.b16 %v1093
  %v1143 = vunpack.c.l.b16 %v1094
  %v1144 = vunpack.c.l.b16 %v1095
  %v1145 = vunpack.c.l.b16 %v1096
  %v1146 = vpack.c.b16 %v1143, %v1142
  %v1147 = vpack.c.b16 %v1145, %v1144
  %v1150 = vunpack.c.l.b16 %v1087
  %v1151 = vunpack.c.l.b16 %v1088
  %v1152 = vpack.c.b16 %v1151, %v1150
  %v1155 = vsel %vm742, %v1146, 0
  %v1158 = vsel %vm742, %v1147, 0
  %1160 = vmatpush.bf16.msra.mxu0 0
  %1161 = vmatpush.bf16.msra.mxu0 0
  %1162 = vmatpush.bf16.msra.mxu0 0
  %1163 = vmatpush.bf16.msra.mxu0 0
  %1164 = vmatpush.bf16.msra.mxu0 0
  %1165 = vmatpush.bf16.msra.mxu0 0
  %1166 = vmatpush.bf16.msra.mxu0 0
  %1167 = vmatpush.bf16.msra.mxu0 %v1152
  %1168 = vmatmul.bf16.gmra.mxu0 %v1155
  %v1169 = vpop.f32.mrf.mxu0
  %v1170 = vadd.f32 0.0, %v1169
  %v1171 = vpop.f32.mrf.mxu0
  %v1172 = vadd.f32 0.0, %v1171
  %1173 = vmatmul.bf16.gmra.mxu0 %v1158
  %v1174 = vpop.f32.mrf.mxu0
  %v1175 = vadd.f32 0.0, %v1174
  %v1176 = vpop.f32.mrf.mxu0
  %v1177 = vadd.f32 0.0, %v1176
  %1178 = vdwg.mxu0
  %v1179 = vsel %vm235, %v1129, 0.0
  %v1180 = vsel %vm235, %v1170, 0.0
  %v1181 = vadd.f32 %v1179, %v1180
  %v1182 = vsel %vm235, %v1131, 0.0
  %v1183 = vsel %vm235, %v1172, 0.0
  %v1184 = vadd.f32 %v1182, %v1183
  %v1185 = vsel %vm235, %v1134, 0.0
  %v1186 = vsel %vm235, %v1175, 0.0
  %v1187 = vadd.f32 %v1185, %v1186
  %v1188 = vsel %vm235, %v1136, 0.0
  %v1189 = vsel %vm235, %v1177, 0.0
  %v1190 = vadd.f32 %v1188, %v1189
  %v1191 = vadd.f32 %v374, %v1181
  %v1192 = vadd.f32 %v375, %v1184
  %v1193 = vadd.f32 %v376, %v1187
  %v1194 = vadd.f32 %v377, %v1190
  %v1195 = vld [vmem:[%s13] sm:$0x1]
  %v1197 = vperm.slane %v1195, 0
  %v1199 = vadd.f32 %v1191, %v1197
  %v1200 = vadd.f32 %v1192, %v1197
  %v1201 = vadd.f32 %v1193, %v1197
  %v1202 = vadd.f32 %v1194, %v1197
  %v1203 = vld [vmem:[%s14] sm:$0x1]
  %v1204 = vld [vmem:[%s15] sm:$0x1]
  %v1205 = vsel %vm235, %v1199, 0.0
  %1206 = vadd.xlane.f32.xlu0 %v1205
  %v1207 = vpop.xlane.xlu0 %1206
  %v1208 = vsel %vm235, %v1200, 0.0
  %1209 = vadd.xlane.f32.xlu0 %v1208
  %v1210 = vpop.xlane.xlu0 %1209
  %v1211 = vsel %vm235, %v1201, 0.0
  %1212 = vadd.xlane.f32.xlu0 %v1211
  %v1213 = vpop.xlane.xlu0 %1212
  %v1214 = vsel %vm235, %v1202, 0.0
  %1215 = vadd.xlane.f32.xlu0 %v1214
  %v1216 = vpop.xlane.xlu0 %1215
  %v1217 = vmul.f32 %v1207, %v254
  %v1218 = vmul.f32 %v1210, %v254
  %v1219 = vmul.f32 %v1213, %v254
  %v1220 = vmul.f32 %v1216, %v254
  %v1221 = vsub.f32 %v1199, %v1217
  %v1222 = vsub.f32 %v1200, %v1218
  %v1223 = vsub.f32 %v1201, %v1219
  %v1224 = vsub.f32 %v1202, %v1220
  %v1225 = vmul.f32 %v1221, %v1221
  %v1226 = vmul.f32 %v1222, %v1222
  %v1227 = vmul.f32 %v1223, %v1223
  %v1228 = vmul.f32 %v1224, %v1224
  %v1229 = vsel %vm235, %v1225, 0.0
  %1230 = vadd.xlane.f32.xlu0 %v1229
  %v1231 = vpop.xlane.xlu0 %1230
  %v1232 = vsel %vm235, %v1226, 0.0
  %1233 = vadd.xlane.f32.xlu0 %v1232
  %v1234 = vpop.xlane.xlu0 %1233
  %v1235 = vsel %vm235, %v1227, 0.0
  %1236 = vadd.xlane.f32.xlu0 %v1235
  %v1237 = vpop.xlane.xlu0 %1236
  %v1238 = vsel %vm235, %v1228, 0.0
  %1239 = vadd.xlane.f32.xlu0 %v1238
  %v1240 = vpop.xlane.xlu0 %1239
  %v1241 = vmul.f32 %v1231, %v254
  %v1242 = vmul.f32 %v1234, %v254
  %v1243 = vmul.f32 %v1237, %v254
  %v1244 = vmul.f32 %v1240, %v254
  %v1245 = vadd.f32 %v1241, 1e-05
  %v1246 = vadd.f32 %v1242, 1e-05
  %v1247 = vadd.f32 %v1243, 1e-05
  %v1248 = vadd.f32 %v1244, 1e-05
  %v1249 = vrsqrt.pop %v1245
  %v1250 = vmul.f32 %v1249, %v1245
  %v1251 = vmul.f32 %v1250, %v1249
  %v1252 = vmul.f32 0.5, %v1251
  %v1253 = vsub.f32 1.5, %v1252
  %v1254 = vmul.f32 %v1249, %v1253
  %vm1255 = vweird.f32 %v1245
  %vm1256 = vweird.f32 %v1249
  %vm1257 = vmor %vm1255, %vm1256
  %v1258 = vsel %vm1257, %v1249, %v1254
  %v1259 = vrsqrt.pop %v1246
  %v1260 = vmul.f32 %v1259, %v1246
  %v1261 = vmul.f32 %v1260, %v1259
  %v1262 = vmul.f32 0.5, %v1261
  %v1263 = vsub.f32 1.5, %v1262
  %v1264 = vmul.f32 %v1259, %v1263
  %vm1265 = vweird.f32 %v1246
  %vm1266 = vweird.f32 %v1259
  %vm1267 = vmor %vm1265, %vm1266
  %v1268 = vsel %vm1267, %v1259, %v1264
  %v1269 = vrsqrt.pop %v1247
  %v1270 = vmul.f32 %v1269, %v1247
  %v1271 = vmul.f32 %v1270, %v1269
  %v1272 = vmul.f32 0.5, %v1271
  %v1273 = vsub.f32 1.5, %v1272
  %v1274 = vmul.f32 %v1269, %v1273
  %vm1275 = vweird.f32 %v1247
  %vm1276 = vweird.f32 %v1269
  %vm1277 = vmor %vm1275, %vm1276
  %v1278 = vsel %vm1277, %v1269, %v1274
  %v1279 = vrsqrt.pop %v1248
  %v1280 = vmul.f32 %v1279, %v1248
  %v1281 = vmul.f32 %v1280, %v1279
  %v1282 = vmul.f32 0.5, %v1281
  %v1283 = vsub.f32 1.5, %v1282
  %v1284 = vmul.f32 %v1279, %v1283
  %vm1285 = vweird.f32 %v1248
  %vm1286 = vweird.f32 %v1279
  %vm1287 = vmor %vm1285, %vm1286
  %v1288 = vsel %vm1287, %v1279, %v1284
  %v1289 = vmul.f32 %v1221, %v1258
  %v1290 = vmul.f32 %v1222, %v1268
  %v1291 = vmul.f32 %v1223, %v1278
  %v1292 = vmul.f32 %v1224, %v1288
  %v1294 = vperm.slane %v1203, 0
  %v1296 = vmul.f32 %v1289, %v1294
  %v1297 = vmul.f32 %v1290, %v1294
  %v1298 = vmul.f32 %v1291, %v1294
  %v1299 = vmul.f32 %v1292, %v1294
  %v1301 = vperm.slane %v1204, 0
  %v1303 = vadd.f32 %v1296, %v1301
  %v1304 = vadd.f32 %v1297, %v1301
  %v1305 = vadd.f32 %v1298, %v1301
  %v1306 = vadd.f32 %v1299, %v1301
  %v1307 = vld [vmem:[%s16] sm:$0xf]
  %v1308 = vld [vmem:[%s16 + $0x4] sm:$0xf]
  %v1309 = vld [vmem:[%s16 + $0x8] sm:$0xf]
  %v1310 = vld [vmem:[%s16 + $0xc] sm:$0xf]
  %v1311 = vpack.c.bf16 %v1304, %v1303
  %v1312 = vpack.c.bf16 %v1306, %v1305
  %v1313 = vld [vmem:[%s17] sm:$0x1]
  %v1315 = vperm.slane %v1313, 0
  %v1321 = vunpack.c.l.b16 %v1307
  %v1322 = vunpack.c.l.b16 %v1308
  %v1323 = vunpack.c.l.b16 %v1309
  %v1324 = vunpack.c.l.b16 %v1310
  %v1325 = vpack.c.b16 %v1322, %v1321
  %v1326 = vpack.c.b16 %v1324, %v1323
  %v1330 = vsel %vm235, %v1311, 0
  %v1333 = vsel %vm235, %v1312, 0
  %1335 = vmatpush.bf16.msra.mxu0 0
  %1336 = vmatpush.bf16.msra.mxu0 0
  %1337 = vmatpush.bf16.msra.mxu0 0
  %1338 = vmatpush.bf16.msra.mxu0 0
  %1339 = vmatpush.bf16.msra.mxu0 0
  %1340 = vmatpush.bf16.msra.mxu0 0
  %1341 = vmatpush.bf16.msra.mxu0 %v1326
  %1342 = vmatpush.bf16.msra.mxu0 %v1325
  %1343 = vmatmul.bf16.gmra.mxu0 %v1330
  %v1344 = vpop.f32.mrf.mxu0
  %v1345 = vadd.f32 %v1315, %v1344
  %v1346 = vpop.f32.mrf.mxu0
  %v1347 = vadd.f32 %v1315, %v1346
  %1348 = vmatmul.bf16.gmra.mxu0 %v1333
  %v1349 = vpop.f32.mrf.mxu0
  %v1350 = vadd.f32 %v1315, %v1349
  %v1351 = vpop.f32.mrf.mxu0
  %v1352 = vadd.f32 %v1315, %v1351
  %1353 = vdwg.mxu0
  %v1354 = vmul.f32 %v1345, 0.5
  %v1355 = vmul.f32 %v1347, 0.5
  %v1356 = vmul.f32 %v1350, 0.5
  %v1357 = vmul.f32 %v1352, 0.5
  %v1358 = vmul.f32 %v1345, 0.70710677
  %v1359 = vmul.f32 %v1347, 0.70710677
  %v1360 = vmul.f32 %v1350, 0.70710677
  %v1361 = vmul.f32 %v1352, 0.70710677
  %v1362 = vand.u32 2147483647, %v1358
  %v1363 = vand.u32 2147483647, %v1359
  %v1364 = vand.u32 2147483647, %v1360
  %v1365 = vand.u32 2147483647, %v1361
  %v1366 = vmul.f32 %v1362, 0.3275911
  %v1367 = vmul.f32 %v1363, 0.3275911
  %v1368 = vmul.f32 %v1364, 0.3275911
  %v1369 = vmul.f32 %v1365, 0.3275911
  %v1370 = vadd.f32 %v1366, 1.0
  %v1371 = vadd.f32 %v1367, 1.0
  %v1372 = vadd.f32 %v1368, 1.0
  %v1373 = vadd.f32 %v1369, 1.0
  %v1374 = vrcp.pop %v1370
  %v1375 = vmul.f32 %v1370, %v1374
  %v1376 = vsub.f32 1.0, %v1375
  %v1377 = vmul.f32 %v1374, %v1376
  %v1378 = vadd.f32 %v1374, %v1377
  %vm1379 = vweird.f32 %v1370
  %vm1380 = vweird.f32 %v1374
  %vm1381 = vmor %vm1379, %vm1380
  %v1382 = vsel %vm1381, %v1374, %v1378
  %v1383 = vand.u32 2147483647, %v1370
  %vm1384 = vcmp.eq.f32.partialorder %v1383, 8.507059e+37
  %v1385 = vand.u32 %v1370, 2147483648
  %v1386 = vor.u32 1.1754944e-38, %v1385
  %v1387 = vsel %vm1384, %v1386, %v1382
  %v1388 = vmul.f32 1.0, %v1387
  %v1389 = vrcp.pop %v1371
  %v1390 = vmul.f32 %v1371, %v1389
  %v1391 = vsub.f32 1.0, %v1390
  %v1392 = vmul.f32 %v1389, %v1391
  %v1393 = vadd.f32 %v1389, %v1392
  %vm1394 = vweird.f32 %v1371
  %vm1395 = vweird.f32 %v1389
  %vm1396 = vmor %vm1394, %vm1395
  %v1397 = vsel %vm1396, %v1389, %v1393
  %v1398 = vand.u32 2147483647, %v1371
  %vm1399 = vcmp.eq.f32.partialorder %v1398, 8.507059e+37
  %v1400 = vand.u32 %v1371, 2147483648
  %v1401 = vor.u32 1.1754944e-38, %v1400
  %v1402 = vsel %vm1399, %v1401, %v1397
  %v1403 = vmul.f32 1.0, %v1402
  %v1404 = vrcp.pop %v1372
  %v1405 = vmul.f32 %v1372, %v1404
  %v1406 = vsub.f32 1.0, %v1405
  %v1407 = vmul.f32 %v1404, %v1406
  %v1408 = vadd.f32 %v1404, %v1407
  %vm1409 = vweird.f32 %v1372
  %vm1410 = vweird.f32 %v1404
  %vm1411 = vmor %vm1409, %vm1410
  %v1412 = vsel %vm1411, %v1404, %v1408
  %v1413 = vand.u32 2147483647, %v1372
  %vm1414 = vcmp.eq.f32.partialorder %v1413, 8.507059e+37
  %v1415 = vand.u32 %v1372, 2147483648
  %v1416 = vor.u32 1.1754944e-38, %v1415
  %v1417 = vsel %vm1414, %v1416, %v1412
  %v1418 = vmul.f32 1.0, %v1417
  %v1419 = vrcp.pop %v1373
  %v1420 = vmul.f32 %v1373, %v1419
  %v1421 = vsub.f32 1.0, %v1420
  %v1422 = vmul.f32 %v1419, %v1421
  %v1423 = vadd.f32 %v1419, %v1422
  %vm1424 = vweird.f32 %v1373
  %vm1425 = vweird.f32 %v1419
  %vm1426 = vmor %vm1424, %vm1425
  %v1427 = vsel %vm1426, %v1419, %v1423
  %v1428 = vand.u32 2147483647, %v1373
  %vm1429 = vcmp.eq.f32.partialorder %v1428, 8.507059e+37
  %v1430 = vand.u32 %v1373, 2147483648
  %v1431 = vor.u32 1.1754944e-38, %v1430
  %v1432 = vsel %vm1429, %v1431, %v1427
  %v1433 = vmul.f32 1.0, %v1432
  %v1434 = vmul.f32 %v1388, 1.0614054
  %v1435 = vmul.f32 %v1403, 1.0614054
  %v1436 = vmul.f32 %v1418, 1.0614054
  %v1437 = vmul.f32 %v1433, 1.0614054
  %v1438 = vadd.f32 %v1434, -1.4531521
  %v1439 = vadd.f32 %v1435, -1.4531521
  %v1440 = vadd.f32 %v1436, -1.4531521
  %v1441 = vadd.f32 %v1437, -1.4531521
  %v1442 = vmul.f32 %v1438, %v1388
  %v1443 = vmul.f32 %v1439, %v1403
  %v1444 = vmul.f32 %v1440, %v1418
  %v1445 = vmul.f32 %v1441, %v1433
  %v1446 = vadd.f32 %v1442, 1.4214138
  %v1447 = vadd.f32 %v1443, 1.4214138
  %v1448 = vadd.f32 %v1444, 1.4214138
  %v1449 = vadd.f32 %v1445, 1.4214138
  %v1450 = vmul.f32 %v1446, %v1388
  %v1451 = vmul.f32 %v1447, %v1403
  %v1452 = vmul.f32 %v1448, %v1418
  %v1453 = vmul.f32 %v1449, %v1433
  %v1454 = vadd.f32 %v1450, -0.28449672
  %v1455 = vadd.f32 %v1451, -0.28449672
  %v1456 = vadd.f32 %v1452, -0.28449672
  %v1457 = vadd.f32 %v1453, -0.28449672
  %v1458 = vmul.f32 %v1454, %v1388
  %v1459 = vmul.f32 %v1455, %v1403
  %v1460 = vmul.f32 %v1456, %v1418
  %v1461 = vmul.f32 %v1457, %v1433
  %v1462 = vadd.f32 %v1458, 0.2548296
  %v1463 = vadd.f32 %v1459, 0.2548296
  %v1464 = vadd.f32 %v1460, 0.2548296
  %v1465 = vadd.f32 %v1461, 0.2548296
  %v1466 = vmul.f32 %v1462, %v1388
  %v1467 = vmul.f32 %v1463, %v1403
  %v1468 = vmul.f32 %v1464, %v1418
  %v1469 = vmul.f32 %v1465, %v1433
  %v1470 = vsub.f32 0.0, %v1362
  %v1471 = vsub.f32 0.0, %v1363
  %v1472 = vsub.f32 0.0, %v1364
  %v1473 = vsub.f32 0.0, %v1365
  %v1474 = vmul.f32 %v1470, %v1362
  %v1475 = vmul.f32 %v1471, %v1363
  %v1476 = vmul.f32 %v1472, %v1364
  %v1477 = vmul.f32 %v1473, %v1365
  %v1478 = vmul.f32 %v1474, 1.442695
  %v1479 = vpow.pop %v1478
  %v1480 = vmul.f32 %v1475, 1.442695
  %v1481 = vpow.pop %v1480
  %v1482 = vmul.f32 %v1476, 1.442695
  %v1483 = vpow.pop %v1482
  %v1484 = vmul.f32 %v1477, 1.442695
  %v1485 = vpow.pop %v1484
  %v1486 = vmul.f32 %v1466, %v1479
  %v1487 = vmul.f32 %v1467, %v1481
  %v1488 = vmul.f32 %v1468, %v1483
  %v1489 = vmul.f32 %v1469, %v1485
  %v1490 = vsub.f32 1.0, %v1486
  %v1491 = vsub.f32 1.0, %v1487
  %v1492 = vsub.f32 1.0, %v1488
  %v1493 = vsub.f32 1.0, %v1489
  %vm1494 = vcmp.ge.f32.partialorder %v1358, 0.0
  %vm1495 = vcmp.ge.f32.partialorder %v1359, 0.0
  %vm1496 = vcmp.ge.f32.partialorder %v1360, 0.0
  %vm1497 = vcmp.ge.f32.partialorder %v1361, 0.0
  %v1498 = vsub.f32 0.0, %v1490
  %v1499 = vsub.f32 0.0, %v1491
  %v1500 = vsub.f32 0.0, %v1492
  %v1501 = vsub.f32 0.0, %v1493
  %v1502 = vsel %vm1494, %v1490, %v1498
  %v1503 = vsel %vm1495, %v1491, %v1499
  %v1504 = vsel %vm1496, %v1492, %v1500
  %v1505 = vsel %vm1497, %v1493, %v1501
  %v1506 = vadd.f32 %v1502, 1.0
  %v1507 = vadd.f32 %v1503, 1.0
  %v1508 = vadd.f32 %v1504, 1.0
  %v1509 = vadd.f32 %v1505, 1.0
  %v1510 = vmul.f32 %v1354, %v1506
  %v1511 = vmul.f32 %v1355, %v1507
  %v1512 = vmul.f32 %v1356, %v1508
  %v1513 = vmul.f32 %v1357, %v1509
  %v1514 = vld [vmem:[%s18] sm:$0xf]
  %v1515 = vld [vmem:[%s18 + $0x4] sm:$0xf]
  %v1516 = vld [vmem:[%s18 + $0x8] sm:$0xf]
  %v1517 = vld [vmem:[%s18 + $0xc] sm:$0xf]
  %v1518 = vld [vmem:[%s18 + $0x10] sm:$0xf]
  %v1519 = vld [vmem:[%s18 + $0x14] sm:$0xf]
  %v1520 = vld [vmem:[%s18 + $0x18] sm:$0xf]
  %v1521 = vld [vmem:[%s18 + $0x1c] sm:$0xf]
  %v1522 = vpack.c.bf16 %v1511, %v1510
  %v1523 = vpack.c.bf16 %v1513, %v1512
  %v1524 = vld [vmem:[%s19] sm:$0x1]
  %v1526 = vperm.slane %v1524, 0
  %v1536 = vunpack.c.l.b16 %v1514
  %v1537 = vunpack.c.l.b16 %v1515
  %v1538 = vunpack.c.l.b16 %v1516
  %v1539 = vunpack.c.l.b16 %v1517
  %v1540 = vunpack.c.l.b16 %v1518
  %v1541 = vunpack.c.l.b16 %v1519
  %v1542 = vunpack.c.l.b16 %v1520
  %v1543 = vunpack.c.l.b16 %v1521
  %v1544 = vpack.c.b16 %v1537, %v1536
  %v1545 = vpack.c.b16 %v1539, %v1538
  %v1546 = vpack.c.b16 %v1541, %v1540
  %v1547 = vpack.c.b16 %v1543, %v1542
  %vm1552 = vcmask 523264
  %v1554 = vsel %vm1552, %v1522, 0
  %v1557 = vsel %vm1552, %v1523, 0
  %1559 = vmatpush.bf16.msra.mxu0 0
  %1560 = vmatpush.bf16.msra.mxu0 0
  %1561 = vmatpush.bf16.msra.mxu0 0
  %1562 = vmatpush.bf16.msra.mxu0 0
  %1563 = vmatpush.bf16.msra.mxu0 %v1547
  %1564 = vmatpush.bf16.msra.mxu0 %v1546
  %1565 = vmatpush.bf16.msra.mxu0 %v1545
  %1566 = vmatpush.bf16.msra.mxu0 %v1544
  %1567 = vmatmul.bf16.gmra.mxu0 %v1554
  %v1568 = vpop.f32.mrf.mxu0
  %v1569 = vadd.f32 %v1526, %v1568
  %v1570 = vpop.f32.mrf.mxu0
  %v1571 = vadd.f32 %v1526, %v1570
  %1572 = vmatmul.bf16.gmra.mxu0 %v1557
  %v1573 = vpop.f32.mrf.mxu0
  %v1574 = vadd.f32 %v1526, %v1573
  %v1575 = vpop.f32.mrf.mxu0
  %v1576 = vadd.f32 %v1526, %v1575
  %1577 = vdwg.mxu0
  %v1578 = vadd.f32 %v1199, %v1569
  %v1579 = vadd.f32 %v1200, %v1571
  %v1580 = vadd.f32 %v1201, %v1574
  %v1581 = vadd.f32 %v1202, %v1576
  %s1582 = scalar_lea.vmem %s9, 1
  %v1583 = vld [vmem:[%s1582] sm:$0x1]
  %s1584 = scalar_lea.vmem %s10, 1
  %v1585 = vld [vmem:[%s1584] sm:$0x1]
  %v1586 = vsel %vm235, %v1578, 0.0
  %1587 = vadd.xlane.f32.xlu0 %v1586
  %v1588 = vpop.xlane.xlu0 %1587
  %v1589 = vsel %vm235, %v1579, 0.0
  %1590 = vadd.xlane.f32.xlu0 %v1589
  %v1591 = vpop.xlane.xlu0 %1590
  %v1592 = vsel %vm235, %v1580, 0.0
  %1593 = vadd.xlane.f32.xlu0 %v1592
  %v1594 = vpop.xlane.xlu0 %1593
  %v1595 = vsel %vm235, %v1581, 0.0
  %1596 = vadd.xlane.f32.xlu0 %v1595
  %v1597 = vpop.xlane.xlu0 %1596
  %v1598 = vmul.f32 %v1588, %v254
  %v1599 = vmul.f32 %v1591, %v254
  %v1600 = vmul.f32 %v1594, %v254
  %v1601 = vmul.f32 %v1597, %v254
  %v1602 = vsub.f32 %v1578, %v1598
  %v1603 = vsub.f32 %v1579, %v1599
  %v1604 = vsub.f32 %v1580, %v1600
  %v1605 = vsub.f32 %v1581, %v1601
  %v1606 = vmul.f32 %v1602, %v1602
  %v1607 = vmul.f32 %v1603, %v1603
  %v1608 = vmul.f32 %v1604, %v1604
  %v1609 = vmul.f32 %v1605, %v1605
  %v1610 = vsel %vm235, %v1606, 0.0
  %1611 = vadd.xlane.f32.xlu0 %v1610
  %v1612 = vpop.xlane.xlu0 %1611
  %v1613 = vsel %vm235, %v1607, 0.0
  %1614 = vadd.xlane.f32.xlu0 %v1613
  %v1615 = vpop.xlane.xlu0 %1614
  %v1616 = vsel %vm235, %v1608, 0.0
  %1617 = vadd.xlane.f32.xlu0 %v1616
  %v1618 = vpop.xlane.xlu0 %1617
  %v1619 = vsel %vm235, %v1609, 0.0
  %1620 = vadd.xlane.f32.xlu0 %v1619
  %v1621 = vpop.xlane.xlu0 %1620
  %v1622 = vmul.f32 %v1612, %v254
  %v1623 = vmul.f32 %v1615, %v254
  %v1624 = vmul.f32 %v1618, %v254
  %v1625 = vmul.f32 %v1621, %v254
  %v1626 = vadd.f32 %v1622, 1e-05
  %v1627 = vadd.f32 %v1623, 1e-05
  %v1628 = vadd.f32 %v1624, 1e-05
  %v1629 = vadd.f32 %v1625, 1e-05
  %v1630 = vrsqrt.pop %v1626
  %v1631 = vmul.f32 %v1630, %v1626
  %v1632 = vmul.f32 %v1631, %v1630
  %v1633 = vmul.f32 0.5, %v1632
  %v1634 = vsub.f32 1.5, %v1633
  %v1635 = vmul.f32 %v1630, %v1634
  %vm1636 = vweird.f32 %v1626
  %vm1637 = vweird.f32 %v1630
  %vm1638 = vmor %vm1636, %vm1637
  %v1639 = vsel %vm1638, %v1630, %v1635
  %v1640 = vrsqrt.pop %v1627
  %v1641 = vmul.f32 %v1640, %v1627
  %v1642 = vmul.f32 %v1641, %v1640
  %v1643 = vmul.f32 0.5, %v1642
  %v1644 = vsub.f32 1.5, %v1643
  %v1645 = vmul.f32 %v1640, %v1644
  %vm1646 = vweird.f32 %v1627
  %vm1647 = vweird.f32 %v1640
  %vm1648 = vmor %vm1646, %vm1647
  %v1649 = vsel %vm1648, %v1640, %v1645
  %v1650 = vrsqrt.pop %v1628
  %v1651 = vmul.f32 %v1650, %v1628
  %v1652 = vmul.f32 %v1651, %v1650
  %v1653 = vmul.f32 0.5, %v1652
  %v1654 = vsub.f32 1.5, %v1653
  %v1655 = vmul.f32 %v1650, %v1654
  %vm1656 = vweird.f32 %v1628
  %vm1657 = vweird.f32 %v1650
  %vm1658 = vmor %vm1656, %vm1657
  %v1659 = vsel %vm1658, %v1650, %v1655
  %v1660 = vrsqrt.pop %v1629
  %v1661 = vmul.f32 %v1660, %v1629
  %v1662 = vmul.f32 %v1661, %v1660
  %v1663 = vmul.f32 0.5, %v1662
  %v1664 = vsub.f32 1.5, %v1663
  %v1665 = vmul.f32 %v1660, %v1664
  %vm1666 = vweird.f32 %v1629
  %vm1667 = vweird.f32 %v1660
  %vm1668 = vmor %vm1666, %vm1667
  %v1669 = vsel %vm1668, %v1660, %v1665
  %v1670 = vmul.f32 %v1602, %v1639
  %v1671 = vmul.f32 %v1603, %v1649
  %v1672 = vmul.f32 %v1604, %v1659
  %v1673 = vmul.f32 %v1605, %v1669
  %v1675 = vperm.slane %v1583, 0
  %v1677 = vmul.f32 %v1670, %v1675
  %v1678 = vmul.f32 %v1671, %v1675
  %v1679 = vmul.f32 %v1672, %v1675
  %v1680 = vmul.f32 %v1673, %v1675
  %v1682 = vperm.slane %v1585, 0
  %v1684 = vadd.f32 %v1677, %v1682
  %v1685 = vadd.f32 %v1678, %v1682
  %v1686 = vadd.f32 %v1679, %v1682
  %v1687 = vadd.f32 %v1680, %v1682
  %v1688 = vpack.c.bf16 %v1684, %v1684
  %v1689 = vpack.c.bf16 %v1685, %v1685
  %v1690 = vpack.c.bf16 %v1686, %v1686
  %v1691 = vpack.c.bf16 %v1687, %v1687
  %s1692 = scalar_lea.vmem %s11, 96
  %v1693 = vld [vmem:[%s1692] sm:$0xf]
  %v1694 = vld [vmem:[%s1692 + $0x4] sm:$0xf]
  %v1695 = vld [vmem:[%s1692 + $0x8] sm:$0xf]
  %v1696 = vld [vmem:[%s1692 + $0xc] sm:$0xf]
  %v1697 = vld [vmem:[%s1692 + $0x10] sm:$0xf]
  %v1698 = vld [vmem:[%s1692 + $0x14] sm:$0xf]
  %v1699 = vld [vmem:[%s1692 + $0x18] sm:$0xf]
  %v1700 = vld [vmem:[%s1692 + $0x1c] sm:$0xf]
  %v1701 = vld [vmem:[%s1692 + $0x20] sm:$0xf]
  %v1702 = vld [vmem:[%s1692 + $0x24] sm:$0xf]
  %v1703 = vld [vmem:[%s1692 + $0x28] sm:$0xf]
  %v1704 = vld [vmem:[%s1692 + $0x2c] sm:$0xf]
  %v1705 = vld [vmem:[%s1692 + $0x30] sm:$0xf]
  %v1706 = vld [vmem:[%s1692 + $0x34] sm:$0xf]
  %v1707 = vld [vmem:[%s1692 + $0x38] sm:$0xf]
  %v1708 = vld [vmem:[%s1692 + $0x3c] sm:$0xf]
  %v1709 = vld [vmem:[%s1692 + $0x40] sm:$0xf]
  %v1710 = vld [vmem:[%s1692 + $0x44] sm:$0xf]
  %v1711 = vld [vmem:[%s1692 + $0x48] sm:$0xf]
  %v1712 = vld [vmem:[%s1692 + $0x4c] sm:$0xf]
  %v1713 = vld [vmem:[%s1692 + $0x50] sm:$0xf]
  %v1714 = vld [vmem:[%s1692 + $0x54] sm:$0xf]
  %v1715 = vld [vmem:[%s1692 + $0x58] sm:$0xf]
  %v1716 = vld [vmem:[%s1692 + $0x5c] sm:$0xf]
  %v1721 = vunpack.c.l.b16 %v1688
  %v1722 = vunpack.c.l.b16 %v1689
  %v1723 = vunpack.c.l.b16 %v1690
  %v1724 = vunpack.c.l.b16 %v1691
  %v1725 = vpack.c.b16 %v1722, %v1721
  %v1726 = vpack.c.b16 %v1724, %v1723
  %v1731 = vunpack.c.l.b16 %v1693
  %v1732 = vunpack.c.l.b16 %v1694
  %v1733 = vunpack.c.l.b16 %v1695
  %v1734 = vunpack.c.l.b16 %v1696
  %v1735 = vpack.c.b16 %v1732, %v1731
  %v1736 = vpack.c.b16 %v1734, %v1733
  %v1740 = vsel %vm235, %v1725, 0
  %v1743 = vsel %vm235, %v1726, 0
  %1745 = vmatpush.bf16.msra.mxu0 0
  %1746 = vmatpush.bf16.msra.mxu0 0
  %1747 = vmatpush.bf16.msra.mxu0 0
  %1748 = vmatpush.bf16.msra.mxu0 0
  %1749 = vmatpush.bf16.msra.mxu0 0
  %1750 = vmatpush.bf16.msra.mxu0 0
  %1751 = vmatpush.bf16.msra.mxu0 %v1736
  %1752 = vmatpush.bf16.msra.mxu0 %v1735
  %1753 = vmatmul.bf16.gmra.mxu0 %v1740
  %v1754 = vpop.f32.mrf.mxu0
  %v1755 = vadd.f32 0.0, %v1754
  %v1756 = vpop.f32.mrf.mxu0
  %v1757 = vadd.f32 0.0, %v1756
  %1758 = vmatmul.bf16.gmra.mxu0 %v1743
  %v1759 = vpop.f32.mrf.mxu0
  %v1760 = vadd.f32 0.0, %v1759
  %v1761 = vpop.f32.mrf.mxu0
  %v1762 = vadd.f32 0.0, %v1761
  %1763 = vdwg.mxu0
  %v1768 = vunpack.c.l.b16 %v1697
  %v1769 = vunpack.c.l.b16 %v1698
  %v1770 = vunpack.c.l.b16 %v1699
  %v1771 = vunpack.c.l.b16 %v1700
  %v1772 = vpack.c.b16 %v1769, %v1768
  %v1773 = vpack.c.b16 %v1771, %v1770
  %1776 = vmatpush.bf16.msra.mxu0 0
  %1777 = vmatpush.bf16.msra.mxu0 0
  %1778 = vmatpush.bf16.msra.mxu0 0
  %1779 = vmatpush.bf16.msra.mxu0 0
  %1780 = vmatpush.bf16.msra.mxu0 0
  %1781 = vmatpush.bf16.msra.mxu0 0
  %1782 = vmatpush.bf16.msra.mxu0 %v1773
  %1783 = vmatpush.bf16.msra.mxu0 %v1772
  %1784 = vmatmul.bf16.gmra.mxu0 %v1740
  %v1785 = vpop.f32.mrf.mxu0
  %v1786 = vadd.f32 0.0, %v1785
  %v1787 = vpop.f32.mrf.mxu0
  %v1788 = vadd.f32 0.0, %v1787
  %1789 = vmatmul.bf16.gmra.mxu0 %v1743
  %v1790 = vpop.f32.mrf.mxu0
  %v1791 = vadd.f32 0.0, %v1790
  %v1792 = vpop.f32.mrf.mxu0
  %v1793 = vadd.f32 0.0, %v1792
  %1794 = vdwg.mxu0
  %v1799 = vunpack.c.l.b16 %v1701
  %v1800 = vunpack.c.l.b16 %v1702
  %v1801 = vunpack.c.l.b16 %v1703
  %v1802 = vunpack.c.l.b16 %v1704
  %v1803 = vpack.c.b16 %v1800, %v1799
  %v1804 = vpack.c.b16 %v1802, %v1801
  %1807 = vmatpush.bf16.msra.mxu0 0
  %1808 = vmatpush.bf16.msra.mxu0 0
  %1809 = vmatpush.bf16.msra.mxu0 0
  %1810 = vmatpush.bf16.msra.mxu0 0
  %1811 = vmatpush.bf16.msra.mxu0 0
  %1812 = vmatpush.bf16.msra.mxu0 0
  %1813 = vmatpush.bf16.msra.mxu0 %v1804
  %1814 = vmatpush.bf16.msra.mxu0 %v1803
  %1815 = vmatmul.bf16.gmra.mxu0 %v1740
  %v1816 = vpop.f32.mrf.mxu0
  %v1817 = vadd.f32 0.0, %v1816
  %v1818 = vpop.f32.mrf.mxu0
  %v1819 = vadd.f32 0.0, %v1818
  %1820 = vmatmul.bf16.gmra.mxu0 %v1743
  %v1821 = vpop.f32.mrf.mxu0
  %v1822 = vadd.f32 0.0, %v1821
  %v1823 = vpop.f32.mrf.mxu0
  %v1824 = vadd.f32 0.0, %v1823
  %1825 = vdwg.mxu0
  %v1830 = vunpack.c.l.b16 %v1705
  %v1831 = vunpack.c.l.b16 %v1706
  %v1832 = vunpack.c.l.b16 %v1707
  %v1833 = vunpack.c.l.b16 %v1708
  %v1834 = vpack.c.b16 %v1831, %v1830
  %v1835 = vpack.c.b16 %v1833, %v1832
  %1838 = vmatpush.bf16.msra.mxu0 0
  %1839 = vmatpush.bf16.msra.mxu0 0
  %1840 = vmatpush.bf16.msra.mxu0 0
  %1841 = vmatpush.bf16.msra.mxu0 0
  %1842 = vmatpush.bf16.msra.mxu0 0
  %1843 = vmatpush.bf16.msra.mxu0 0
  %1844 = vmatpush.bf16.msra.mxu0 %v1835
  %1845 = vmatpush.bf16.msra.mxu0 %v1834
  %1846 = vmatmul.bf16.gmra.mxu0 %v1740
  %v1847 = vpop.f32.mrf.mxu0
  %v1848 = vadd.f32 0.0, %v1847
  %v1849 = vpop.f32.mrf.mxu0
  %v1850 = vadd.f32 0.0, %v1849
  %1851 = vmatmul.bf16.gmra.mxu0 %v1743
  %v1852 = vpop.f32.mrf.mxu0
  %v1853 = vadd.f32 0.0, %v1852
  %v1854 = vpop.f32.mrf.mxu0
  %v1855 = vadd.f32 0.0, %v1854
  %1856 = vdwg.mxu0
  %v1861 = vunpack.c.l.b16 %v1709
  %v1862 = vunpack.c.l.b16 %v1710
  %v1863 = vunpack.c.l.b16 %v1711
  %v1864 = vunpack.c.l.b16 %v1712
  %v1865 = vpack.c.b16 %v1862, %v1861
  %v1866 = vpack.c.b16 %v1864, %v1863
  %1869 = vmatpush.bf16.msra.mxu0 0
  %1870 = vmatpush.bf16.msra.mxu0 0
  %1871 = vmatpush.bf16.msra.mxu0 0
  %1872 = vmatpush.bf16.msra.mxu0 0
  %1873 = vmatpush.bf16.msra.mxu0 0
  %1874 = vmatpush.bf16.msra.mxu0 0
  %1875 = vmatpush.bf16.msra.mxu0 %v1866
  %1876 = vmatpush.bf16.msra.mxu0 %v1865
  %1877 = vmatmul.bf16.gmra.mxu0 %v1740
  %v1878 = vpop.f32.mrf.mxu0
  %v1879 = vadd.f32 0.0, %v1878
  %v1880 = vpop.f32.mrf.mxu0
  %v1881 = vadd.f32 0.0, %v1880
  %1882 = vmatmul.bf16.gmra.mxu0 %v1743
  %v1883 = vpop.f32.mrf.mxu0
  %v1884 = vadd.f32 0.0, %v1883
  %v1885 = vpop.f32.mrf.mxu0
  %v1886 = vadd.f32 0.0, %v1885
  %1887 = vdwg.mxu0
  %v1892 = vunpack.c.l.b16 %v1713
  %v1893 = vunpack.c.l.b16 %v1714
  %v1894 = vunpack.c.l.b16 %v1715
  %v1895 = vunpack.c.l.b16 %v1716
  %v1896 = vpack.c.b16 %v1893, %v1892
  %v1897 = vpack.c.b16 %v1895, %v1894
  %1900 = vmatpush.bf16.msra.mxu0 0
  %1901 = vmatpush.bf16.msra.mxu0 0
  %1902 = vmatpush.bf16.msra.mxu0 0
  %1903 = vmatpush.bf16.msra.mxu0 0
  %1904 = vmatpush.bf16.msra.mxu0 0
  %1905 = vmatpush.bf16.msra.mxu0 0
  %1906 = vmatpush.bf16.msra.mxu0 %v1897
  %1907 = vmatpush.bf16.msra.mxu0 %v1896
  %1908 = vmatmul.bf16.gmra.mxu0 %v1740
  %v1909 = vpop.f32.mrf.mxu0
  %v1910 = vadd.f32 0.0, %v1909
  %v1911 = vpop.f32.mrf.mxu0
  %v1912 = vadd.f32 0.0, %v1911
  %1913 = vmatmul.bf16.gmra.mxu0 %v1743
  %v1914 = vpop.f32.mrf.mxu0
  %v1915 = vadd.f32 0.0, %v1914
  %v1916 = vpop.f32.mrf.mxu0
  %v1917 = vadd.f32 0.0, %v1916
  %1918 = vdwg.mxu0
  %v1919 = vpack.c.bf16 %v1755, %v1755
  %v1920 = vpack.c.bf16 %v1757, %v1757
  %v1921 = vpack.c.bf16 %v1760, %v1760
  %v1922 = vpack.c.bf16 %v1762, %v1762
  %v1923 = vpack.c.bf16 %v1786, %v1786
  %v1924 = vpack.c.bf16 %v1788, %v1788
  %v1925 = vpack.c.bf16 %v1791, %v1791
  %v1926 = vpack.c.bf16 %v1793, %v1793
  %v1927 = vpack.c.bf16 %v1817, %v1817
  %v1928 = vpack.c.bf16 %v1819, %v1819
  %v1929 = vpack.c.bf16 %v1822, %v1822
  %v1930 = vpack.c.bf16 %v1824, %v1824
  %v1931 = vpack.c.bf16 %v1848, %v1848
  %v1932 = vpack.c.bf16 %v1850, %v1850
  %v1933 = vpack.c.bf16 %v1853, %v1853
  %v1934 = vpack.c.bf16 %v1855, %v1855
  %v1937 = vunpack.c.l.b16 %v1919
  %v1938 = vunpack.c.l.b16 %v1920
  %v1939 = vpack.c.b16 %v1938, %v1937
  %v1942 = vunpack.c.l.b16 %v1927
  %v1943 = vunpack.c.l.b16 %v1928
  %v1944 = vpack.c.b16 %v1943, %v1942
  %v1946 = vsel %vm742, %v1939, 0
  %v1949 = vsel %vm742, %v1944, 0
  %1951 = vmatpush.bf16.xpose.msra.mxu0 0
  %1952 = vmatpush.bf16.xpose.msra.mxu0 0
  %1953 = vmatpush.bf16.xpose.msra.mxu0 0
  %1954 = vmatpush.bf16.xpose.msra.mxu0 0
  %1955 = vmatpush.bf16.xpose.msra.mxu0 0
  %1956 = vmatpush.bf16.xpose.msra.mxu0 0
  %1957 = vmatpush.bf16.xpose.msra.mxu0 0
  %1958 = vmatpush.bf16.xpose.msra.mxu0 %v1949
  %1959 = vmatmul.bf16.gmra.mxu0 %v1946
  %v1960 = vpop.f32.mrf.mxu0
  %v1961 = vadd.f32 0.0, %v1960
  %v1962 = vpop.f32.mrf.mxu0
  %v1963 = vadd.f32 0.0, %v1962
  %1964 = vdwg.mxu0
  %v1967 = vunpack.c.l.b16 %v1921
  %v1968 = vunpack.c.l.b16 %v1922
  %v1969 = vpack.c.b16 %v1968, %v1967
  %v1972 = vunpack.c.l.b16 %v1929
  %v1973 = vunpack.c.l.b16 %v1930
  %v1974 = vpack.c.b16 %v1973, %v1972
  %v1976 = vsel %vm742, %v1969, 0
  %v1979 = vsel %vm742, %v1974, 0
  %1981 = vmatpush.bf16.xpose.msra.mxu0 0
  %1982 = vmatpush.bf16.xpose.msra.mxu0 0
  %1983 = vmatpush.bf16.xpose.msra.mxu0 0
  %1984 = vmatpush.bf16.xpose.msra.mxu0 0
  %1985 = vmatpush.bf16.xpose.msra.mxu0 0
  %1986 = vmatpush.bf16.xpose.msra.mxu0 0
  %1987 = vmatpush.bf16.xpose.msra.mxu0 0
  %1988 = vmatpush.bf16.xpose.msra.mxu0 %v1979
  %1989 = vmatmul.bf16.gmra.mxu0 %v1976
  %v1990 = vpop.f32.mrf.mxu0
  %v1991 = vadd.f32 0.0, %v1990
  %v1992 = vpop.f32.mrf.mxu0
  %v1993 = vadd.f32 0.0, %v1992
  %1994 = vdwg.mxu0
  %v1997 = vunpack.c.l.b16 %v1923
  %v1998 = vunpack.c.l.b16 %v1924
  %v1999 = vpack.c.b16 %v1998, %v1997
  %v2002 = vunpack.c.l.b16 %v1931
  %v2003 = vunpack.c.l.b16 %v1932
  %v2004 = vpack.c.b16 %v2003, %v2002
  %v2006 = vsel %vm742, %v1999, 0
  %v2009 = vsel %vm742, %v2004, 0
  %2011 = vmatpush.bf16.xpose.msra.mxu0 0
  %2012 = vmatpush.bf16.xpose.msra.mxu0 0
  %2013 = vmatpush.bf16.xpose.msra.mxu0 0
  %2014 = vmatpush.bf16.xpose.msra.mxu0 0
  %2015 = vmatpush.bf16.xpose.msra.mxu0 0
  %2016 = vmatpush.bf16.xpose.msra.mxu0 0
  %2017 = vmatpush.bf16.xpose.msra.mxu0 0
  %2018 = vmatpush.bf16.xpose.msra.mxu0 %v2009
  %2019 = vmatmul.bf16.gmra.mxu0 %v2006
  %v2020 = vpop.f32.mrf.mxu0
  %v2021 = vadd.f32 0.0, %v2020
  %v2022 = vpop.f32.mrf.mxu0
  %v2023 = vadd.f32 0.0, %v2022
  %2024 = vdwg.mxu0
  %v2027 = vunpack.c.l.b16 %v1925
  %v2028 = vunpack.c.l.b16 %v1926
  %v2029 = vpack.c.b16 %v2028, %v2027
  %v2032 = vunpack.c.l.b16 %v1933
  %v2033 = vunpack.c.l.b16 %v1934
  %v2034 = vpack.c.b16 %v2033, %v2032
  %v2036 = vsel %vm742, %v2029, 0
  %v2039 = vsel %vm742, %v2034, 0
  %2041 = vmatpush.bf16.xpose.msra.mxu0 0
  %2042 = vmatpush.bf16.xpose.msra.mxu0 0
  %2043 = vmatpush.bf16.xpose.msra.mxu0 0
  %2044 = vmatpush.bf16.xpose.msra.mxu0 0
  %2045 = vmatpush.bf16.xpose.msra.mxu0 0
  %2046 = vmatpush.bf16.xpose.msra.mxu0 0
  %2047 = vmatpush.bf16.xpose.msra.mxu0 0
  %2048 = vmatpush.bf16.xpose.msra.mxu0 %v2039
  %2049 = vmatmul.bf16.gmra.mxu0 %v2036
  %v2050 = vpop.f32.mrf.mxu0
  %v2051 = vadd.f32 0.0, %v2050
  %v2052 = vpop.f32.mrf.mxu0
  %v2053 = vadd.f32 0.0, %v2052
  %2054 = vdwg.mxu0
  %v2055 = vmul.f32 %v1961, 0.25
  %v2056 = vmul.f32 %v1963, 0.25
  %v2057 = vmul.f32 %v1991, 0.25
  %v2058 = vmul.f32 %v1993, 0.25
  %v2059 = vmul.f32 %v2021, 0.25
  %v2060 = vmul.f32 %v2023, 0.25
  %v2061 = vmul.f32 %v2051, 0.25
  %v2062 = vmul.f32 %v2053, 0.25
  %v2063 = vadd.f32 %v2055, %v381
  %v2064 = vadd.f32 %v2056, %v381
  %v2065 = vadd.f32 %v2057, %v381
  %v2066 = vadd.f32 %v2058, %v381
  %v2067 = vadd.f32 %v2059, %v381
  %v2068 = vadd.f32 %v2060, %v381
  %v2069 = vadd.f32 %v2061, %v381
  %v2070 = vadd.f32 %v2062, %v381
  %v2071 = vsel %vm742, %v2063, -inf
  %2072 = vmax.xlane.f32.xlu0 %v2071
  %v2073 = vpop.xlane.xlu0 %2072
  %v2074 = vsel %vm742, %v2064, -inf
  %2075 = vmax.xlane.f32.xlu0 %v2074
  %v2076 = vpop.xlane.xlu0 %2075
  %v2077 = vsel %vm742, %v2065, -inf
  %2078 = vmax.xlane.f32.xlu0 %v2077
  %v2079 = vpop.xlane.xlu0 %2078
  %v2080 = vsel %vm742, %v2066, -inf
  %2081 = vmax.xlane.f32.xlu0 %v2080
  %v2082 = vpop.xlane.xlu0 %2081
  %v2083 = vsel %vm742, %v2067, -inf
  %2084 = vmax.xlane.f32.xlu0 %v2083
  %v2085 = vpop.xlane.xlu0 %2084
  %v2086 = vsel %vm742, %v2068, -inf
  %2087 = vmax.xlane.f32.xlu0 %v2086
  %v2088 = vpop.xlane.xlu0 %2087
  %v2089 = vsel %vm742, %v2069, -inf
  %2090 = vmax.xlane.f32.xlu0 %v2089
  %v2091 = vpop.xlane.xlu0 %2090
  %v2092 = vsel %vm742, %v2070, -inf
  %2093 = vmax.xlane.f32.xlu0 %v2092
  %v2094 = vpop.xlane.xlu0 %2093
  %v2095 = vsub.f32 %v2063, %v2073
  %v2096 = vsub.f32 %v2064, %v2076
  %v2097 = vsub.f32 %v2065, %v2079
  %v2098 = vsub.f32 %v2066, %v2082
  %v2099 = vsub.f32 %v2067, %v2085
  %v2100 = vsub.f32 %v2068, %v2088
  %v2101 = vsub.f32 %v2069, %v2091
  %v2102 = vsub.f32 %v2070, %v2094
  %v2103 = vmul.f32 %v2095, 1.442695
  %v2104 = vpow.pop %v2103
  %v2105 = vmul.f32 %v2096, 1.442695
  %v2106 = vpow.pop %v2105
  %v2107 = vmul.f32 %v2097, 1.442695
  %v2108 = vpow.pop %v2107
  %v2109 = vmul.f32 %v2098, 1.442695
  %v2110 = vpow.pop %v2109
  %v2111 = vmul.f32 %v2099, 1.442695
  %v2112 = vpow.pop %v2111
  %v2113 = vmul.f32 %v2100, 1.442695
  %v2114 = vpow.pop %v2113
  %v2115 = vmul.f32 %v2101, 1.442695
  %v2116 = vpow.pop %v2115
  %v2117 = vmul.f32 %v2102, 1.442695
  %v2118 = vpow.pop %v2117
  %v2119 = vsel %vm742, %v2104, 0.0
  %2120 = vadd.xlane.f32.xlu0 %v2119
  %v2121 = vpop.xlane.xlu0 %2120
  %v2122 = vsel %vm742, %v2106, 0.0
  %2123 = vadd.xlane.f32.xlu0 %v2122
  %v2124 = vpop.xlane.xlu0 %2123
  %v2125 = vsel %vm742, %v2108, 0.0
  %2126 = vadd.xlane.f32.xlu0 %v2125
  %v2127 = vpop.xlane.xlu0 %2126
  %v2128 = vsel %vm742, %v2110, 0.0
  %2129 = vadd.xlane.f32.xlu0 %v2128
  %v2130 = vpop.xlane.xlu0 %2129
  %v2131 = vsel %vm742, %v2112, 0.0
  %2132 = vadd.xlane.f32.xlu0 %v2131
  %v2133 = vpop.xlane.xlu0 %2132
  %v2134 = vsel %vm742, %v2114, 0.0
  %2135 = vadd.xlane.f32.xlu0 %v2134
  %v2136 = vpop.xlane.xlu0 %2135
  %v2137 = vsel %vm742, %v2116, 0.0
  %2138 = vadd.xlane.f32.xlu0 %v2137
  %v2139 = vpop.xlane.xlu0 %2138
  %v2140 = vsel %vm742, %v2118, 0.0
  %2141 = vadd.xlane.f32.xlu0 %v2140
  %v2142 = vpop.xlane.xlu0 %2141
  %v2143 = vrcp.pop %v2121
  %v2144 = vrcp.pop %v2124
  %v2145 = vrcp.pop %v2127
  %v2146 = vrcp.pop %v2130
  %v2147 = vrcp.pop %v2133
  %v2148 = vrcp.pop %v2136
  %v2149 = vrcp.pop %v2139
  %v2150 = vrcp.pop %v2142
  %v2151 = vmul.f32 %v2104, %v2143
  %v2152 = vmul.f32 %v2106, %v2144
  %v2153 = vmul.f32 %v2108, %v2145
  %v2154 = vmul.f32 %v2110, %v2146
  %v2155 = vmul.f32 %v2112, %v2147
  %v2156 = vmul.f32 %v2114, %v2148
  %v2157 = vmul.f32 %v2116, %v2149
  %v2158 = vmul.f32 %v2118, %v2150
  %v2159 = vpack.c.bf16 %v2151, %v2151
  %v2160 = vpack.c.bf16 %v2152, %v2152
  %v2161 = vpack.c.bf16 %v2153, %v2153
  %v2162 = vpack.c.bf16 %v2154, %v2154
  %v2163 = vpack.c.bf16 %v2155, %v2155
  %v2164 = vpack.c.bf16 %v2156, %v2156
  %v2165 = vpack.c.bf16 %v2157, %v2157
  %v2166 = vpack.c.bf16 %v2158, %v2158
  %v2167 = vpack.c.bf16 %v1879, %v1879
  %v2168 = vpack.c.bf16 %v1881, %v1881
  %v2169 = vpack.c.bf16 %v1884, %v1884
  %v2170 = vpack.c.bf16 %v1886, %v1886
  %v2171 = vpack.c.bf16 %v1910, %v1910
  %v2172 = vpack.c.bf16 %v1912, %v1912
  %v2173 = vpack.c.bf16 %v1915, %v1915
  %v2174 = vpack.c.bf16 %v1917, %v1917
  %v2177 = vunpack.c.l.b16 %v2159
  %v2178 = vunpack.c.l.b16 %v2160
  %v2179 = vpack.c.b16 %v2178, %v2177
  %v2182 = vunpack.c.l.b16 %v2167
  %v2183 = vunpack.c.l.b16 %v2168
  %v2184 = vpack.c.b16 %v2183, %v2182
  %v2187 = vsel %vm742, %v2179, 0
  %2189 = vmatpush.bf16.msra.mxu0 0
  %2190 = vmatpush.bf16.msra.mxu0 0
  %2191 = vmatpush.bf16.msra.mxu0 0
  %2192 = vmatpush.bf16.msra.mxu0 0
  %2193 = vmatpush.bf16.msra.mxu0 0
  %2194 = vmatpush.bf16.msra.mxu0 0
  %2195 = vmatpush.bf16.msra.mxu0 0
  %2196 = vmatpush.bf16.msra.mxu0 %v2184
  %2197 = vmatmul.bf16.gmra.mxu0 %v2187
  %v2198 = vpop.f32.mrf.mxu0
  %v2199 = vadd.f32 0.0, %v2198
  %v2200 = vpop.f32.mrf.mxu0
  %v2201 = vadd.f32 0.0, %v2200
  %2202 = vdwg.mxu0
  %v2205 = vunpack.c.l.b16 %v2161
  %v2206 = vunpack.c.l.b16 %v2162
  %v2207 = vpack.c.b16 %v2206, %v2205
  %v2210 = vunpack.c.l.b16 %v2169
  %v2211 = vunpack.c.l.b16 %v2170
  %v2212 = vpack.c.b16 %v2211, %v2210
  %v2215 = vsel %vm742, %v2207, 0
  %2217 = vmatpush.bf16.msra.mxu0 0
  %2218 = vmatpush.bf16.msra.mxu0 0
  %2219 = vmatpush.bf16.msra.mxu0 0
  %2220 = vmatpush.bf16.msra.mxu0 0
  %2221 = vmatpush.bf16.msra.mxu0 0
  %2222 = vmatpush.bf16.msra.mxu0 0
  %2223 = vmatpush.bf16.msra.mxu0 0
  %2224 = vmatpush.bf16.msra.mxu0 %v2212
  %2225 = vmatmul.bf16.gmra.mxu0 %v2215
  %v2226 = vpop.f32.mrf.mxu0
  %v2227 = vadd.f32 0.0, %v2226
  %v2228 = vpop.f32.mrf.mxu0
  %v2229 = vadd.f32 0.0, %v2228
  %2230 = vdwg.mxu0
  %v2233 = vunpack.c.l.b16 %v2163
  %v2234 = vunpack.c.l.b16 %v2164
  %v2235 = vpack.c.b16 %v2234, %v2233
  %v2238 = vunpack.c.l.b16 %v2171
  %v2239 = vunpack.c.l.b16 %v2172
  %v2240 = vpack.c.b16 %v2239, %v2238
  %v2243 = vsel %vm742, %v2235, 0
  %2245 = vmatpush.bf16.msra.mxu0 0
  %2246 = vmatpush.bf16.msra.mxu0 0
  %2247 = vmatpush.bf16.msra.mxu0 0
  %2248 = vmatpush.bf16.msra.mxu0 0
  %2249 = vmatpush.bf16.msra.mxu0 0
  %2250 = vmatpush.bf16.msra.mxu0 0
  %2251 = vmatpush.bf16.msra.mxu0 0
  %2252 = vmatpush.bf16.msra.mxu0 %v2240
  %2253 = vmatmul.bf16.gmra.mxu0 %v2243
  %v2254 = vpop.f32.mrf.mxu0
  %v2255 = vadd.f32 0.0, %v2254
  %v2256 = vpop.f32.mrf.mxu0
  %v2257 = vadd.f32 0.0, %v2256
  %2258 = vdwg.mxu0
  %v2261 = vunpack.c.l.b16 %v2165
  %v2262 = vunpack.c.l.b16 %v2166
  %v2263 = vpack.c.b16 %v2262, %v2261
  %v2266 = vunpack.c.l.b16 %v2173
  %v2267 = vunpack.c.l.b16 %v2174
  %v2268 = vpack.c.b16 %v2267, %v2266
  %v2271 = vsel %vm742, %v2263, 0
  %2273 = vmatpush.bf16.msra.mxu0 0
  %2274 = vmatpush.bf16.msra.mxu0 0
  %2275 = vmatpush.bf16.msra.mxu0 0
  %2276 = vmatpush.bf16.msra.mxu0 0
  %2277 = vmatpush.bf16.msra.mxu0 0
  %2278 = vmatpush.bf16.msra.mxu0 0
  %2279 = vmatpush.bf16.msra.mxu0 0
  %2280 = vmatpush.bf16.msra.mxu0 %v2268
  %2281 = vmatmul.bf16.gmra.mxu0 %v2271
  %v2282 = vpop.f32.mrf.mxu0
  %v2283 = vadd.f32 0.0, %v2282
  %v2284 = vpop.f32.mrf.mxu0
  %v2285 = vadd.f32 0.0, %v2284
  %2286 = vdwg.mxu0
  %s2287 = scalar_lea.vmem %s12, 16
  %v2288 = vld [vmem:[%s2287] sm:$0xf]
  %v2289 = vld [vmem:[%s2287 + $0x4] sm:$0xf]
  %v2290 = vld [vmem:[%s2287 + $0x8] sm:$0xf]
  %v2291 = vld [vmem:[%s2287 + $0xc] sm:$0xf]
  %v2292 = vpack.c.bf16 %v2199, %v2199
  %v2293 = vpack.c.bf16 %v2201, %v2201
  %v2294 = vpack.c.bf16 %v2227, %v2227
  %v2295 = vpack.c.bf16 %v2229, %v2229
  %v2296 = vpack.c.bf16 %v2255, %v2255
  %v2297 = vpack.c.bf16 %v2257, %v2257
  %v2298 = vpack.c.bf16 %v2283, %v2283
  %v2299 = vpack.c.bf16 %v2285, %v2285
  %v2304 = vunpack.c.l.b16 %v2292
  %v2305 = vunpack.c.l.b16 %v2293
  %v2306 = vunpack.c.l.b16 %v2294
  %v2307 = vunpack.c.l.b16 %v2295
  %v2308 = vpack.c.b16 %v2305, %v2304
  %v2309 = vpack.c.b16 %v2307, %v2306
  %v2312 = vunpack.c.l.b16 %v2288
  %v2313 = vunpack.c.l.b16 %v2289
  %v2314 = vpack.c.b16 %v2313, %v2312
  %v2317 = vsel %vm742, %v2308, 0
  %v2320 = vsel %vm742, %v2309, 0
  %2322 = vmatpush.bf16.msra.mxu0 0
  %2323 = vmatpush.bf16.msra.mxu0 0
  %2324 = vmatpush.bf16.msra.mxu0 0
  %2325 = vmatpush.bf16.msra.mxu0 0
  %2326 = vmatpush.bf16.msra.mxu0 0
  %2327 = vmatpush.bf16.msra.mxu0 0
  %2328 = vmatpush.bf16.msra.mxu0 0
  %2329 = vmatpush.bf16.msra.mxu0 %v2314
  %2330 = vmatmul.bf16.gmra.mxu0 %v2317
  %v2331 = vpop.f32.mrf.mxu0
  %v2332 = vadd.f32 0.0, %v2331
  %v2333 = vpop.f32.mrf.mxu0
  %v2334 = vadd.f32 0.0, %v2333
  %2335 = vmatmul.bf16.gmra.mxu0 %v2320
  %v2336 = vpop.f32.mrf.mxu0
  %v2337 = vadd.f32 0.0, %v2336
  %v2338 = vpop.f32.mrf.mxu0
  %v2339 = vadd.f32 0.0, %v2338
  %2340 = vdwg.mxu0
  %v2345 = vunpack.c.l.b16 %v2296
  %v2346 = vunpack.c.l.b16 %v2297
  %v2347 = vunpack.c.l.b16 %v2298
  %v2348 = vunpack.c.l.b16 %v2299
  %v2349 = vpack.c.b16 %v2346, %v2345
  %v2350 = vpack.c.b16 %v2348, %v2347
  %v2353 = vunpack.c.l.b16 %v2290
  %v2354 = vunpack.c.l.b16 %v2291
  %v2355 = vpack.c.b16 %v2354, %v2353
  %v2358 = vsel %vm742, %v2349, 0
  %v2361 = vsel %vm742, %v2350, 0
  %2363 = vmatpush.bf16.msra.mxu0 0
  %2364 = vmatpush.bf16.msra.mxu0 0
  %2365 = vmatpush.bf16.msra.mxu0 0
  %2366 = vmatpush.bf16.msra.mxu0 0
  %2367 = vmatpush.bf16.msra.mxu0 0
  %2368 = vmatpush.bf16.msra.mxu0 0
  %2369 = vmatpush.bf16.msra.mxu0 0
  %2370 = vmatpush.bf16.msra.mxu0 %v2355
  %2371 = vmatmul.bf16.gmra.mxu0 %v2358
  %v2372 = vpop.f32.mrf.mxu0
  %v2373 = vadd.f32 0.0, %v2372
  %v2374 = vpop.f32.mrf.mxu0
  %v2375 = vadd.f32 0.0, %v2374
  %2376 = vmatmul.bf16.gmra.mxu0 %v2361
  %v2377 = vpop.f32.mrf.mxu0
  %v2378 = vadd.f32 0.0, %v2377
  %v2379 = vpop.f32.mrf.mxu0
  %v2380 = vadd.f32 0.0, %v2379
  %2381 = vdwg.mxu0
  %v2382 = vsel %vm235, %v2332, 0.0
  %v2383 = vsel %vm235, %v2373, 0.0
  %v2384 = vadd.f32 %v2382, %v2383
  %v2385 = vsel %vm235, %v2334, 0.0
  %v2386 = vsel %vm235, %v2375, 0.0
  %v2387 = vadd.f32 %v2385, %v2386
  %v2388 = vsel %vm235, %v2337, 0.0
  %v2389 = vsel %vm235, %v2378, 0.0
  %v2390 = vadd.f32 %v2388, %v2389
  %v2391 = vsel %vm235, %v2339, 0.0
  %v2392 = vsel %vm235, %v2380, 0.0
  %v2393 = vadd.f32 %v2391, %v2392
  %v2394 = vadd.f32 %v1578, %v2384
  %v2395 = vadd.f32 %v1579, %v2387
  %v2396 = vadd.f32 %v1580, %v2390
  %v2397 = vadd.f32 %v1581, %v2393
  %s2398 = scalar_lea.vmem %s13, 1
  %v2399 = vld [vmem:[%s2398] sm:$0x1]
  %v2401 = vperm.slane %v2399, 0
  %v2403 = vadd.f32 %v2394, %v2401
  %v2404 = vadd.f32 %v2395, %v2401
  %v2405 = vadd.f32 %v2396, %v2401
  %v2406 = vadd.f32 %v2397, %v2401
  %s2407 = scalar_lea.vmem %s14, 1
  %v2408 = vld [vmem:[%s2407] sm:$0x1]
  %s2409 = scalar_lea.vmem %s15, 1
  %v2410 = vld [vmem:[%s2409] sm:$0x1]
  %v2411 = vsel %vm235, %v2403, 0.0
  %2412 = vadd.xlane.f32.xlu0 %v2411
  %v2413 = vpop.xlane.xlu0 %2412
  %v2414 = vsel %vm235, %v2404, 0.0
  %2415 = vadd.xlane.f32.xlu0 %v2414
  %v2416 = vpop.xlane.xlu0 %2415
  %v2417 = vsel %vm235, %v2405, 0.0
  %2418 = vadd.xlane.f32.xlu0 %v2417
  %v2419 = vpop.xlane.xlu0 %2418
  %v2420 = vsel %vm235, %v2406, 0.0
  %2421 = vadd.xlane.f32.xlu0 %v2420
  %v2422 = vpop.xlane.xlu0 %2421
  %v2423 = vmul.f32 %v2413, %v254
  %v2424 = vmul.f32 %v2416, %v254
  %v2425 = vmul.f32 %v2419, %v254
  %v2426 = vmul.f32 %v2422, %v254
  %v2427 = vsub.f32 %v2403, %v2423
  %v2428 = vsub.f32 %v2404, %v2424
  %v2429 = vsub.f32 %v2405, %v2425
  %v2430 = vsub.f32 %v2406, %v2426
  %v2431 = vmul.f32 %v2427, %v2427
  %v2432 = vmul.f32 %v2428, %v2428
  %v2433 = vmul.f32 %v2429, %v2429
  %v2434 = vmul.f32 %v2430, %v2430
  %v2435 = vsel %vm235, %v2431, 0.0
  %2436 = vadd.xlane.f32.xlu0 %v2435
  %v2437 = vpop.xlane.xlu0 %2436
  %v2438 = vsel %vm235, %v2432, 0.0
  %2439 = vadd.xlane.f32.xlu0 %v2438
  %v2440 = vpop.xlane.xlu0 %2439
  %v2441 = vsel %vm235, %v2433, 0.0
  %2442 = vadd.xlane.f32.xlu0 %v2441
  %v2443 = vpop.xlane.xlu0 %2442
  %v2444 = vsel %vm235, %v2434, 0.0
  %2445 = vadd.xlane.f32.xlu0 %v2444
  %v2446 = vpop.xlane.xlu0 %2445
  %v2447 = vmul.f32 %v2437, %v254
  %v2448 = vmul.f32 %v2440, %v254
  %v2449 = vmul.f32 %v2443, %v254
  %v2450 = vmul.f32 %v2446, %v254
  %v2451 = vadd.f32 %v2447, 1e-05
  %v2452 = vadd.f32 %v2448, 1e-05
  %v2453 = vadd.f32 %v2449, 1e-05
  %v2454 = vadd.f32 %v2450, 1e-05
  %v2455 = vrsqrt.pop %v2451
  %v2456 = vmul.f32 %v2455, %v2451
  %v2457 = vmul.f32 %v2456, %v2455
  %v2458 = vmul.f32 0.5, %v2457
  %v2459 = vsub.f32 1.5, %v2458
  %v2460 = vmul.f32 %v2455, %v2459
  %vm2461 = vweird.f32 %v2451
  %vm2462 = vweird.f32 %v2455
  %vm2463 = vmor %vm2461, %vm2462
  %v2464 = vsel %vm2463, %v2455, %v2460
  %v2465 = vrsqrt.pop %v2452
  %v2466 = vmul.f32 %v2465, %v2452
  %v2467 = vmul.f32 %v2466, %v2465
  %v2468 = vmul.f32 0.5, %v2467
  %v2469 = vsub.f32 1.5, %v2468
  %v2470 = vmul.f32 %v2465, %v2469
  %vm2471 = vweird.f32 %v2452
  %vm2472 = vweird.f32 %v2465
  %vm2473 = vmor %vm2471, %vm2472
  %v2474 = vsel %vm2473, %v2465, %v2470
  %v2475 = vrsqrt.pop %v2453
  %v2476 = vmul.f32 %v2475, %v2453
  %v2477 = vmul.f32 %v2476, %v2475
  %v2478 = vmul.f32 0.5, %v2477
  %v2479 = vsub.f32 1.5, %v2478
  %v2480 = vmul.f32 %v2475, %v2479
  %vm2481 = vweird.f32 %v2453
  %vm2482 = vweird.f32 %v2475
  %vm2483 = vmor %vm2481, %vm2482
  %v2484 = vsel %vm2483, %v2475, %v2480
  %v2485 = vrsqrt.pop %v2454
  %v2486 = vmul.f32 %v2485, %v2454
  %v2487 = vmul.f32 %v2486, %v2485
  %v2488 = vmul.f32 0.5, %v2487
  %v2489 = vsub.f32 1.5, %v2488
  %v2490 = vmul.f32 %v2485, %v2489
  %vm2491 = vweird.f32 %v2454
  %vm2492 = vweird.f32 %v2485
  %vm2493 = vmor %vm2491, %vm2492
  %v2494 = vsel %vm2493, %v2485, %v2490
  %v2495 = vmul.f32 %v2427, %v2464
  %v2496 = vmul.f32 %v2428, %v2474
  %v2497 = vmul.f32 %v2429, %v2484
  %v2498 = vmul.f32 %v2430, %v2494
  %v2500 = vperm.slane %v2408, 0
  %v2502 = vmul.f32 %v2495, %v2500
  %v2503 = vmul.f32 %v2496, %v2500
  %v2504 = vmul.f32 %v2497, %v2500
  %v2505 = vmul.f32 %v2498, %v2500
  %v2507 = vperm.slane %v2410, 0
  %v2509 = vadd.f32 %v2502, %v2507
  %v2510 = vadd.f32 %v2503, %v2507
  %v2511 = vadd.f32 %v2504, %v2507
  %v2512 = vadd.f32 %v2505, %v2507
  %s2513 = scalar_lea.vmem %s16, 16
  %v2514 = vld [vmem:[%s2513] sm:$0xf]
  %v2515 = vld [vmem:[%s2513 + $0x4] sm:$0xf]
  %v2516 = vld [vmem:[%s2513 + $0x8] sm:$0xf]
  %v2517 = vld [vmem:[%s2513 + $0xc] sm:$0xf]
  %v2518 = vpack.c.bf16 %v2510, %v2509
  %v2519 = vpack.c.bf16 %v2512, %v2511
  %s2520 = scalar_lea.vmem %s17, 1
  %v2521 = vld [vmem:[%s2520] sm:$0x1]
  %v2523 = vperm.slane %v2521, 0
  %v2529 = vunpack.c.l.b16 %v2514
  %v2530 = vunpack.c.l.b16 %v2515
  %v2531 = vunpack.c.l.b16 %v2516
  %v2532 = vunpack.c.l.b16 %v2517
  %v2533 = vpack.c.b16 %v2530, %v2529
  %v2534 = vpack.c.b16 %v2532, %v2531
  %v2538 = vsel %vm235, %v2518, 0
  %v2541 = vsel %vm235, %v2519, 0
  %2543 = vmatpush.bf16.msra.mxu0 0
  %2544 = vmatpush.bf16.msra.mxu0 0
  %2545 = vmatpush.bf16.msra.mxu0 0
  %2546 = vmatpush.bf16.msra.mxu0 0
  %2547 = vmatpush.bf16.msra.mxu0 0
  %2548 = vmatpush.bf16.msra.mxu0 0
  %2549 = vmatpush.bf16.msra.mxu0 %v2534
  %2550 = vmatpush.bf16.msra.mxu0 %v2533
  %2551 = vmatmul.bf16.gmra.mxu0 %v2538
  %v2552 = vpop.f32.mrf.mxu0
  %v2553 = vadd.f32 %v2523, %v2552
  %v2554 = vpop.f32.mrf.mxu0
  %v2555 = vadd.f32 %v2523, %v2554
  %2556 = vmatmul.bf16.gmra.mxu0 %v2541
  %v2557 = vpop.f32.mrf.mxu0
  %v2558 = vadd.f32 %v2523, %v2557
  %v2559 = vpop.f32.mrf.mxu0
  %v2560 = vadd.f32 %v2523, %v2559
  %2561 = vdwg.mxu0
  %v2562 = vmul.f32 %v2553, 0.5
  %v2563 = vmul.f32 %v2555, 0.5
  %v2564 = vmul.f32 %v2558, 0.5
  %v2565 = vmul.f32 %v2560, 0.5
  %v2566 = vmul.f32 %v2553, 0.70710677
  %v2567 = vmul.f32 %v2555, 0.70710677
  %v2568 = vmul.f32 %v2558, 0.70710677
  %v2569 = vmul.f32 %v2560, 0.70710677
  %v2570 = vand.u32 2147483647, %v2566
  %v2571 = vand.u32 2147483647, %v2567
  %v2572 = vand.u32 2147483647, %v2568
  %v2573 = vand.u32 2147483647, %v2569
  %v2574 = vmul.f32 %v2570, 0.3275911
  %v2575 = vmul.f32 %v2571, 0.3275911
  %v2576 = vmul.f32 %v2572, 0.3275911
  %v2577 = vmul.f32 %v2573, 0.3275911
  %v2578 = vadd.f32 %v2574, 1.0
  %v2579 = vadd.f32 %v2575, 1.0
  %v2580 = vadd.f32 %v2576, 1.0
  %v2581 = vadd.f32 %v2577, 1.0
  %v2582 = vrcp.pop %v2578
  %v2583 = vmul.f32 %v2578, %v2582
  %v2584 = vsub.f32 1.0, %v2583
  %v2585 = vmul.f32 %v2582, %v2584
  %v2586 = vadd.f32 %v2582, %v2585
  %vm2587 = vweird.f32 %v2578
  %vm2588 = vweird.f32 %v2582
  %vm2589 = vmor %vm2587, %vm2588
  %v2590 = vsel %vm2589, %v2582, %v2586
  %v2591 = vand.u32 2147483647, %v2578
  %vm2592 = vcmp.eq.f32.partialorder %v2591, 8.507059e+37
  %v2593 = vand.u32 %v2578, 2147483648
  %v2594 = vor.u32 1.1754944e-38, %v2593
  %v2595 = vsel %vm2592, %v2594, %v2590
  %v2596 = vmul.f32 1.0, %v2595
  %v2597 = vrcp.pop %v2579
  %v2598 = vmul.f32 %v2579, %v2597
  %v2599 = vsub.f32 1.0, %v2598
  %v2600 = vmul.f32 %v2597, %v2599
  %v2601 = vadd.f32 %v2597, %v2600
  %vm2602 = vweird.f32 %v2579
  %vm2603 = vweird.f32 %v2597
  %vm2604 = vmor %vm2602, %vm2603
  %v2605 = vsel %vm2604, %v2597, %v2601
  %v2606 = vand.u32 2147483647, %v2579
  %vm2607 = vcmp.eq.f32.partialorder %v2606, 8.507059e+37
  %v2608 = vand.u32 %v2579, 2147483648
  %v2609 = vor.u32 1.1754944e-38, %v2608
  %v2610 = vsel %vm2607, %v2609, %v2605
  %v2611 = vmul.f32 1.0, %v2610
  %v2612 = vrcp.pop %v2580
  %v2613 = vmul.f32 %v2580, %v2612
  %v2614 = vsub.f32 1.0, %v2613
  %v2615 = vmul.f32 %v2612, %v2614
  %v2616 = vadd.f32 %v2612, %v2615
  %vm2617 = vweird.f32 %v2580
  %vm2618 = vweird.f32 %v2612
  %vm2619 = vmor %vm2617, %vm2618
  %v2620 = vsel %vm2619, %v2612, %v2616
  %v2621 = vand.u32 2147483647, %v2580
  %vm2622 = vcmp.eq.f32.partialorder %v2621, 8.507059e+37
  %v2623 = vand.u32 %v2580, 2147483648
  %v2624 = vor.u32 1.1754944e-38, %v2623
  %v2625 = vsel %vm2622, %v2624, %v2620
  %v2626 = vmul.f32 1.0, %v2625
  %v2627 = vrcp.pop %v2581
  %v2628 = vmul.f32 %v2581, %v2627
  %v2629 = vsub.f32 1.0, %v2628
  %v2630 = vmul.f32 %v2627, %v2629
  %v2631 = vadd.f32 %v2627, %v2630
  %vm2632 = vweird.f32 %v2581
  %vm2633 = vweird.f32 %v2627
  %vm2634 = vmor %vm2632, %vm2633
  %v2635 = vsel %vm2634, %v2627, %v2631
  %v2636 = vand.u32 2147483647, %v2581
  %vm2637 = vcmp.eq.f32.partialorder %v2636, 8.507059e+37
  %v2638 = vand.u32 %v2581, 2147483648
  %v2639 = vor.u32 1.1754944e-38, %v2638
  %v2640 = vsel %vm2637, %v2639, %v2635
  %v2641 = vmul.f32 1.0, %v2640
  %v2642 = vmul.f32 %v2596, 1.0614054
  %v2643 = vmul.f32 %v2611, 1.0614054
  %v2644 = vmul.f32 %v2626, 1.0614054
  %v2645 = vmul.f32 %v2641, 1.0614054
  %v2646 = vadd.f32 %v2642, -1.4531521
  %v2647 = vadd.f32 %v2643, -1.4531521
  %v2648 = vadd.f32 %v2644, -1.4531521
  %v2649 = vadd.f32 %v2645, -1.4531521
  %v2650 = vmul.f32 %v2646, %v2596
  %v2651 = vmul.f32 %v2647, %v2611
  %v2652 = vmul.f32 %v2648, %v2626
  %v2653 = vmul.f32 %v2649, %v2641
  %v2654 = vadd.f32 %v2650, 1.4214138
  %v2655 = vadd.f32 %v2651, 1.4214138
  %v2656 = vadd.f32 %v2652, 1.4214138
  %v2657 = vadd.f32 %v2653, 1.4214138
  %v2658 = vmul.f32 %v2654, %v2596
  %v2659 = vmul.f32 %v2655, %v2611
  %v2660 = vmul.f32 %v2656, %v2626
  %v2661 = vmul.f32 %v2657, %v2641
  %v2662 = vadd.f32 %v2658, -0.28449672
  %v2663 = vadd.f32 %v2659, -0.28449672
  %v2664 = vadd.f32 %v2660, -0.28449672
  %v2665 = vadd.f32 %v2661, -0.28449672
  %v2666 = vmul.f32 %v2662, %v2596
  %v2667 = vmul.f32 %v2663, %v2611
  %v2668 = vmul.f32 %v2664, %v2626
  %v2669 = vmul.f32 %v2665, %v2641
  %v2670 = vadd.f32 %v2666, 0.2548296
  %v2671 = vadd.f32 %v2667, 0.2548296
  %v2672 = vadd.f32 %v2668, 0.2548296
  %v2673 = vadd.f32 %v2669, 0.2548296
  %v2674 = vmul.f32 %v2670, %v2596
  %v2675 = vmul.f32 %v2671, %v2611
  %v2676 = vmul.f32 %v2672, %v2626
  %v2677 = vmul.f32 %v2673, %v2641
  %v2678 = vsub.f32 0.0, %v2570
  %v2679 = vsub.f32 0.0, %v2571
  %v2680 = vsub.f32 0.0, %v2572
  %v2681 = vsub.f32 0.0, %v2573
  %v2682 = vmul.f32 %v2678, %v2570
  %v2683 = vmul.f32 %v2679, %v2571
  %v2684 = vmul.f32 %v2680, %v2572
  %v2685 = vmul.f32 %v2681, %v2573
  %v2686 = vmul.f32 %v2682, 1.442695
  %v2687 = vpow.pop %v2686
  %v2688 = vmul.f32 %v2683, 1.442695
  %v2689 = vpow.pop %v2688
  %v2690 = vmul.f32 %v2684, 1.442695
  %v2691 = vpow.pop %v2690
  %v2692 = vmul.f32 %v2685, 1.442695
  %v2693 = vpow.pop %v2692
  %v2694 = vmul.f32 %v2674, %v2687
  %v2695 = vmul.f32 %v2675, %v2689
  %v2696 = vmul.f32 %v2676, %v2691
  %v2697 = vmul.f32 %v2677, %v2693
  %v2698 = vsub.f32 1.0, %v2694
  %v2699 = vsub.f32 1.0, %v2695
  %v2700 = vsub.f32 1.0, %v2696
  %v2701 = vsub.f32 1.0, %v2697
  %vm2702 = vcmp.ge.f32.partialorder %v2566, 0.0
  %vm2703 = vcmp.ge.f32.partialorder %v2567, 0.0
  %vm2704 = vcmp.ge.f32.partialorder %v2568, 0.0
  %vm2705 = vcmp.ge.f32.partialorder %v2569, 0.0
  %v2706 = vsub.f32 0.0, %v2698
  %v2707 = vsub.f32 0.0, %v2699
  %v2708 = vsub.f32 0.0, %v2700
  %v2709 = vsub.f32 0.0, %v2701
  %v2710 = vsel %vm2702, %v2698, %v2706
  %v2711 = vsel %vm2703, %v2699, %v2707
  %v2712 = vsel %vm2704, %v2700, %v2708
  %v2713 = vsel %vm2705, %v2701, %v2709
  %v2714 = vadd.f32 %v2710, 1.0
  %v2715 = vadd.f32 %v2711, 1.0
  %v2716 = vadd.f32 %v2712, 1.0
  %v2717 = vadd.f32 %v2713, 1.0
  %v2718 = vmul.f32 %v2562, %v2714
  %v2719 = vmul.f32 %v2563, %v2715
  %v2720 = vmul.f32 %v2564, %v2716
  %v2721 = vmul.f32 %v2565, %v2717
  %s2722 = scalar_lea.vmem %s18, 32
  %v2723 = vld [vmem:[%s2722] sm:$0xf]
  %v2724 = vld [vmem:[%s2722 + $0x4] sm:$0xf]
  %v2725 = vld [vmem:[%s2722 + $0x8] sm:$0xf]
  %v2726 = vld [vmem:[%s2722 + $0xc] sm:$0xf]
  %v2727 = vld [vmem:[%s2722 + $0x10] sm:$0xf]
  %v2728 = vld [vmem:[%s2722 + $0x14] sm:$0xf]
  %v2729 = vld [vmem:[%s2722 + $0x18] sm:$0xf]
  %v2730 = vld [vmem:[%s2722 + $0x1c] sm:$0xf]
  %v2731 = vpack.c.bf16 %v2719, %v2718
  %v2732 = vpack.c.bf16 %v2721, %v2720
  %s2733 = scalar_lea.vmem %s19, 1
  %v2734 = vld [vmem:[%s2733] sm:$0x1]
  %v2736 = vperm.slane %v2734, 0
  %v2746 = vunpack.c.l.b16 %v2723
  %v2747 = vunpack.c.l.b16 %v2724
  %v2748 = vunpack.c.l.b16 %v2725
  %v2749 = vunpack.c.l.b16 %v2726
  %v2750 = vunpack.c.l.b16 %v2727
  %v2751 = vunpack.c.l.b16 %v2728
  %v2752 = vunpack.c.l.b16 %v2729
  %v2753 = vunpack.c.l.b16 %v2730
  %v2754 = vpack.c.b16 %v2747, %v2746
  %v2755 = vpack.c.b16 %v2749, %v2748
  %v2756 = vpack.c.b16 %v2751, %v2750
  %v2757 = vpack.c.b16 %v2753, %v2752
  %v2763 = vsel %vm1552, %v2731, 0
  %v2766 = vsel %vm1552, %v2732, 0
  %2768 = vmatpush.bf16.msra.mxu0 0
  %2769 = vmatpush.bf16.msra.mxu0 0
  %2770 = vmatpush.bf16.msra.mxu0 0
  %2771 = vmatpush.bf16.msra.mxu0 0
  %2772 = vmatpush.bf16.msra.mxu0 %v2757
  %2773 = vmatpush.bf16.msra.mxu0 %v2756
  %2774 = vmatpush.bf16.msra.mxu0 %v2755
  %2775 = vmatpush.bf16.msra.mxu0 %v2754
  %2776 = vmatmul.bf16.gmra.mxu0 %v2763
  %v2777 = vpop.f32.mrf.mxu0
  %v2778 = vadd.f32 %v2736, %v2777
  %v2779 = vpop.f32.mrf.mxu0
  %2780 = vmatmul.bf16.gmra.mxu0 %v2766
  %v2781 = vpop.f32.mrf.mxu0
  %v2782 = vadd.f32 %v2736, %v2781
  %v2783 = vpop.f32.mrf.mxu0
  %2784 = vdwg.mxu0
  %v2785 = vadd.f32 %v2403, %v2778
  %v2786 = vadd.f32 %v2405, %v2782
  %v2787 = vld [vmem:[%s20] sm:$0x1]
  %v2788 = vld [vmem:[%s21] sm:$0x1]
  %v2791 = vrot.slane %v2786, 7
  %vm2792 = vcmask 1041409
  %v2793 = vsel %vm2792, %v2791, %v2785
  %vm2795 = vcmask 254976
  %v2796 = vsel %vm2795, %v2793, 0.0
  %2797 = vadd.xlane.f32.xlu0 %v2796
  %v2798 = vpop.xlane.xlu0 %2797
  %v2799 = vmul.f32 %v2798, %v254
  %v2801 = vrot.slane %v2799, 1
  %v2804 = vsub.f32 %v2785, %v2799
  %v2805 = vsub.f32 %v2786, %v2801
  %v2806 = vmul.f32 %v2804, %v2804
  %v2807 = vmul.f32 %v2805, %v2805
  %v2810 = vrot.slane %v2807, 7
  %v2811 = vsel %vm2792, %v2810, %v2806
  %v2813 = vsel %vm2795, %v2811, 0.0
  %2814 = vadd.xlane.f32.xlu0 %v2813
  %v2815 = vpop.xlane.xlu0 %2814
  %v2816 = vmul.f32 %v2815, %v254
  %v2817 = vadd.f32 %v2816, 1e-05
  %v2818 = vrsqrt.pop %v2817
  %v2819 = vmul.f32 %v2818, %v2817
  %v2820 = vmul.f32 %v2819, %v2818
  %v2821 = vmul.f32 0.5, %v2820
  %v2822 = vsub.f32 1.5, %v2821
  %v2823 = vmul.f32 %v2818, %v2822
  %vm2824 = vweird.f32 %v2817
  %vm2825 = vweird.f32 %v2818
  %vm2826 = vmor %vm2824, %vm2825
  %v2827 = vsel %vm2826, %v2818, %v2823
  %v2829 = vrot.slane %v2827, 1
  %v2832 = vmul.f32 %v2804, %v2827
  %v2833 = vmul.f32 %v2805, %v2829
  %v2835 = vperm.slane %v2787, 0
  %v2837 = vmul.f32 %v2832, %v2835
  %v2838 = vmul.f32 %v2833, %v2835
  %v2840 = vperm.slane %v2788, 0
  %v2842 = vadd.f32 %v2837, %v2840
  %v2843 = vadd.f32 %v2838, %v2840
  %v2844 = vld [vmem:[%s22] sm:$0xf]
  %v2845 = vld [vmem:[%s22 + $0x4] sm:$0xf]
  %v2846 = vld [vmem:[%s22 + $0x8] sm:$0xf]
  %v2847 = vld [vmem:[%s22 + $0xc] sm:$0xf]
  %v2848 = vpack.c.bf16 %v2842, %v2842
  %v2849 = vpack.c.bf16 %v2843, %v2843
  %v2850 = vld [vmem:[%s23] sm:$0x1]
  %v2852 = vperm.slane %v2850, 0
  %v2856 = vunpack.c.l.b16 %v2848
  %v2857 = vunpack.c.l.b16 %v2849
  %v2858 = vrot.slane %v2857, 7
  %v2859 = vsel %vm2792, %v2858, %v2856
  %v2860 = vpack.c.b16 %v2859, %v2859
  %v2865 = vunpack.c.l.b16 %v2844
  %v2866 = vunpack.c.l.b16 %v2845
  %v2867 = vunpack.c.l.b16 %v2846
  %v2868 = vunpack.c.l.b16 %v2847
  %v2869 = vpack.c.b16 %v2866, %v2865
  %v2870 = vpack.c.b16 %v2868, %v2867
  %v2874 = vsel %vm235, %v2860, 0
  %2876 = vmatpush.bf16.msra.mxu0 0
  %2877 = vmatpush.bf16.msra.mxu0 0
  %2878 = vmatpush.bf16.msra.mxu0 0
  %2879 = vmatpush.bf16.msra.mxu0 0
  %2880 = vmatpush.bf16.msra.mxu0 0
  %2881 = vmatpush.bf16.msra.mxu0 0
  %2882 = vmatpush.bf16.msra.mxu0 %v2870
  %2883 = vmatpush.bf16.msra.mxu0 %v2869
  %2884 = vmatmul.bf16.gmra.mxu0 %v2874
  %v2885 = vpop.f32.mrf.mxu0
  %v2886 = vadd.f32 %v2852, %v2885
  %v2887 = vpop.f32.mrf.mxu0
  %2888 = vdwg.mxu0
  %v2889 = vsub.f32 0.0, %v2886
  %v2890 = vmul.f32 %v2889, 1.442695
  %v2891 = vpow.pop %v2890
  %v2892 = vadd.f32 %v2891, 1.0
  %v2893 = vrcp.pop %v2892
  %v2894 = vmul.f32 %v2892, %v2893
  %v2895 = vsub.f32 1.0, %v2894
  %v2896 = vmul.f32 %v2893, %v2895
  %v2897 = vadd.f32 %v2893, %v2896
  %vm2898 = vweird.f32 %v2892
  %vm2899 = vweird.f32 %v2893
  %vm2900 = vmor %vm2898, %vm2899
  %v2901 = vsel %vm2900, %v2893, %v2897
  %v2902 = vand.u32 2147483647, %v2892
  %vm2903 = vcmp.eq.f32.partialorder %v2902, 8.507059e+37
  %v2904 = vand.u32 %v2892, 2147483648
  %v2905 = vor.u32 1.1754944e-38, %v2904
  %v2906 = vsel %vm2903, %v2905, %v2901
  %v2907 = vmul.f32 1.0, %v2906
  %v2908 = vld [vmem:[%s24] sm:$0xff]
  %v2909 = vld [vmem:[%s24 + $0x8] sm:$0xff]
  %v2911 = vsel %vm742, %v2907, 0
  %2913 = vmatpush.msra.mxu0 0.0
  %2914 = vmatpush.msra.mxu0 0.0
  %2915 = vmatpush.msra.mxu0 0.0
  %2916 = vmatpush.msra.mxu0 0.0
  %2917 = vmatpush.msra.mxu0 0.0
  %2918 = vmatpush.msra.mxu0 0.0
  %2919 = vmatpush.msra.mxu0 0.0
  %2920 = vmatpush.msra.mxu0 0.0
  %2921 = vmatpush.msra.mxu0 0.0
  %2922 = vmatpush.msra.mxu0 0.0
  %2923 = vmatpush.msra.mxu0 0.0
  %2924 = vmatpush.msra.mxu0 0.0
  %2925 = vmatpush.msra.mxu0 0.0
  %2926 = vmatpush.msra.mxu0 0.0
  %2927 = vmatpush.msra.mxu0 %v2909
  %2928 = vmatpush.msra.mxu0 %v2908
  %2929 = vmatmul.f32.gmra.mxu0 %v2911
  %v2930 = vpop.f32.mrf.mxu0
  %v2931 = vadd.f32 0.0, %v2930
  %2932 = vdwg.mxu0
  %2933 = vrot.lane.b32.xlu0 %v2907, 64
  %v2934 = vpop.permute.xlu0 %2933
  %v2936 = vsel %vm1552, %v2931, %v2934
  %vm2937 = vcmask 654336
  %v2938 = vsel %vm2937, %v2936, 0.0
  %vm2939 = vcmask 1041408
  %v2940 = vsel %vm2939, %v2938, 0.0
  %2941 = vst [vmem:[%s25] sm:$0xff] %v2940
  // Predicated region
  $region102: #{vit_forward.1} parent=0 // pred_check
    _
  $region103: #{vit_forward.1} parent=0 // pred_check_branch
    %2943 = sbr.rel (0) target = $region105
  $region104: #{vit_forward.1} parent=0 // pred_region
    _
  $region105: #{vit_forward.1} parent=0 // pred_fallthru
    _
  // Predicated region
  $region106: #{vit_forward.1} parent=0 // pred_check
    _
  $region107: #{vit_forward.1} parent=0 // pred_check_branch
    %2945 = sbr.rel (0) target = $region109
  $region108: #{vit_forward.1} parent=0 // pred_region
    _
  $region109: #{vit_forward.1} parent=0 // pred_fallthru
    _

</llo_original>
